<compile_context>
chip_gen: v7x
topology: tpu7x:2x2x1
jax: 0.10.0
libtpu: 0.0.40
codegen_flags: <defaults>
</compile_context>

<pallas_src>
import functools

import numpy as np
import jax
import jax.numpy as jnp
from jax.experimental import pallas as pl
from jax.experimental.pallas import tpu as pltpu


# ------------------------------ fused kernel -------------------------------

def _decoder_kernel(rgb_ref, dvs_ref, wr_ref, wd_ref, bfc_ref, wk0_ref,
                    r_ref, b1_ref, wk3_ref, q_ref, bout_ref,
                    o_ref, x0_ref, t0s_ref, t1s_ref,
                    *, h0, l0, k0, l1, m1, k1, l2, c_out, w_out, kpad0):
    """One sample per grid step: fc+relu -> deconv0+relu -> deconv1 -> NCHW."""
    f32 = jnp.float32
    b = pl.program_id(0)

    # ---- fc + ReLU (weight columns pre-permuted: the output is already the
    #      deconv0 input in NHWC row layout, one aligned l0-lane stripe/row).
    rgb = rgb_ref[pl.ds(b, 1), :]                                   # (1, fd)
    dvs = dvs_ref[pl.ds(b, 1), :]                                   # (1, fd)
    h = jnp.dot(rgb, wr_ref[...], preferred_element_type=f32)
    h = h + jnp.dot(dvs, wd_ref[...], preferred_element_type=f32)
    h = jnp.maximum(h + bfc_ref[...], 0.0)                          # (1, h0*l0)
    for i in range(h0):                       # aligned static lane slices
        x0_ref[pl.ds(i, 1), :] = h[:, i * l0:(i + 1) * l0]

    # ---- deconv0 (5x5, stride 2): one wide matmul; the stride-2 height
    #      scatter + bias + ReLU are fused via the 0/1 matrix R on the MXU.
    t0 = jnp.dot(x0_ref[...], wk0_ref[...],
                 preferred_element_type=f32)                        # (h0, k0*l1)
    if kpad0:                                 # keep pad rows exactly zero
        t0s_ref[pl.ds(k0 * h0, kpad0), :] = jnp.zeros((kpad0, l1), f32)
    for k in range(k0):                       # stack per-kh blocks (write-once)
        t0s_ref[pl.ds(k * h0, h0), :] = t0[:, k * l1:(k + 1) * l1]
    x1 = jnp.maximum(
        jnp.dot(r_ref[...], t0s_ref[...], preferred_element_type=f32)
        + b1_ref[...], 0.0)                                         # (m1, l1)

    # ---- deconv1 (3x3, stride 2, output_padding=1): same structure; output
    #      lanes are channel-major so the NCHW planes are plain lane slices.
    t1 = jnp.dot(x1, wk3_ref[...], preferred_element_type=f32)      # (m1, k1*l2)
    for k in range(k1):
        t1s_ref[pl.ds(k * m1, m1), :] = t1[:, k * l2:(k + 1) * l2]
    out = (jnp.dot(q_ref[...], t1s_ref[...], preferred_element_type=f32)
           + bout_ref[...])                                         # (2*m1, l2)

    for c in range(c_out):                    # direct NCHW store, no glue
        o_ref[c, :, :] = out[:, c * w_out:(c + 1) * w_out]


# ------------------------------- module port -------------------------------

def _pad128(n):
    return ((n + 127) // 128) * 128


class HybridActionMaskV5DecoderPallas:
    """Pallas/TPU port of HybridActionMaskV5Decoder.forward (num_layers=2)."""

    INIT_H = INIT_W = 6                       # fc output spatial size
    K0, K1 = 5, 3                             # deconvs[0], deconvs[-1] kernels
    C_OUT = 3
    H1 = W1 = 2 * (INIT_H - 1) + K0           # 15: deconv0 output
    H2 = W2 = 2 * (H1 - 1) + K1 + 1           # 32: deconv1 output (out_pad=1)

    def __init__(self, feature_dim, num_filters=32, seed=42):
        self.feature_dim = feature_dim
        self.num_filters = num_filters
        nf = num_filters
        fc_out = nf * self.INIT_H * self.INIT_W
        ks = jax.random.split(jax.random.PRNGKey(seed), 6)

        def init(k, shape, scale=0.05):
            return scale * jax.random.normal(k, shape, dtype=jnp.float32)

        # Raw parameters in PyTorch layouts (also used by the pure-JAX ref).
        self.W_fc = init(ks[0], (fc_out, 2 * feature_dim))   # Linear (out, in)
        self.b_fc = init(ks[1], (fc_out,))
        self.W_d0 = init(ks[2], (nf, nf, self.K0, self.K0))  # ConvT (Cin,Cout,K,K)
        self.b_d0 = init(ks[3], (nf,))
        self.W_d3 = init(ks[4], (nf, self.C_OUT, self.K1, self.K1))
        self.b_d3 = init(ks[5], (self.C_OUT,))
        # TODO(synk): curr_convs / curr_fc and deconvs[1:3] exist in the PyTorch
        # __init__ but are never used by forward() with num_layers=2; omitted.

        self._pack_params()

    # ---- weight-only preprocessing (numpy, once at init) ----
    def _pack_params(self):
        nf, fd = self.num_filters, self.feature_dim
        H0, W0, H1, W1, H2, W2 = (self.INIT_H, self.INIT_W, self.H1, self.W1,
                                  self.H2, self.W2)
        K0, K1, CO = self.K0, self.K1, self.C_OUT
        L0 = _pad128(W0 * nf)        # 256: fc / deconv0-input lane stripe/row
        L1 = _pad128(W1 * nf)        # 512: deconv0 per-kh block / x1 lane width
        L2 = _pad128(W2 * CO)        # 128: deconv1 per-kh block lane width
        M1 = H1 + 1                  # 16:  x1 rows (row 15 stays identically 0)

        W_fc = np.asarray(self.W_fc, np.float32)
        b_fc = np.asarray(self.b_fc, np.float32)
        W_d0 = np.asarray(self.W_d0, np.float32)
        b_d0 = np.asarray(self.b_d0, np.float32)
        W_d3 = np.asarray(self.W_d3, np.float32)
        b_d3 = np.asarray(self.b_d3, np.float32)

        # fc: permute columns so torch's view(-1,nf,6,6) + NCHW->NHWC are free:
        # output column  ih*L0 + iw*nf + c   <-  torch unit  c*36 + ih*6 + iw.
        fcw = np.zeros((2 * fd, H0 * L0), np.float32)
        fcb = np.zeros((1, H0 * L0), np.float32)
        for c in range(nf):
            for ih in range(H0):
                for iw in range(W0):
                    q = c * (H0 * W0) + ih * W0 + iw
                    n = ih * L0 + iw * nf + c
                    fcw[:, n] = W_fc[q, :]
                    fcb[0, n] = b_fc[q]
        self.Wr = jnp.asarray(fcw[:fd])           # rgb half of fc weight
        self.Wd = jnp.asarray(fcw[fd:])           # dvs half of fc weight
        self.bfc = jnp.asarray(fcb)

        # deconv0: fold the stride-2 *width* scatter into the weight columns;
        # per-kh blocks of L1 lanes (W1*nf valid, rest zero).
        wk0 = np.zeros((L0, K0 * L1), np.float32)
        for kh in range(K0):
            for iw in range(W0):
                for kw in range(K0):
                    ow = 2 * iw + kw
                    if ow < W1:
                        wk0[iw * nf:(iw + 1) * nf,
                            kh * L1 + ow * nf: kh * L1 + (ow + 1) * nf] = \
                            W_d0[:, :, kh, kw]
        self.wk0 = jnp.asarray(wk0)

        # Height scatter of deconv0 as a 0/1 matrix: x1 row r (< H1) sums the
        # per-(ih, kh) partials with 2*ih + kh == r; rows >= H1 stay zero.
        t0rows = K0 * H0
        kpad0 = (-t0rows) % 8
        R = np.zeros((M1, t0rows + kpad0), np.float32)
        for r in range(H1):
            for kh in range(K0):
                d = r - kh
                if d >= 0 and d % 2 == 0 and d // 2 < H0:
                    R[r, kh * H0 + d // 2] = 1.0
        self.R = jnp.asarray(R)

        B1 = np.zeros((M1, L1), np.float32)       # deconv0 bias (rows < H1 only)
        B1[:H1, :W1 * nf] = np.tile(b_d0, W1)[None, :]
        self.B1 = jnp.asarray(B1)

        # deconv1: width scatter folded in; output lanes are channel-major
        # (co*W2 + ow) so the NCHW channel planes are contiguous lane slices.
        wk3 = np.zeros((L1, K1 * L2), np.float32)
        for kh in range(K1):
            for iw in range(W1):
                for kw in range(K1):
                    ow = 2 * iw + kw
                    if ow < W2:
                        for co in range(CO):
                            wk3[iw * nf:(iw + 1) * nf,
                                kh * L2 + co * W2 + ow] = W_d3[:, co, kh, kw]
        self.wk3 = jnp.asarray(wk3)

        # Output height scatter; the row/col added by output_padding=1 receive
        # no kernel taps and end up bias-only automatically.
        Q = np.zeros((H2, K1 * M1), np.float32)
        for oh in range(H2):
            for kh in range(K1):
                d = oh - kh
                if d >= 0 and d % 2 == 0 and d // 2 < M1:
                    Q[oh, kh * M1 + d // 2] = 1.0
        self.Q = jnp.asarray(Q)

        bout = np.zeros((1, L2), np.float32)
        for co in range(CO):
            bout[0, co * W2:(co + 1) * W2] = b_d3[co]
        self.bout = jnp.asarray(bout)

        self._sizes = dict(h0=H0, l0=L0, k0=K0, l1=L1, m1=M1, k1=K1, l2=L2,
                           c_out=CO, w_out=W2, kpad0=kpad0)
        self._scratch = [
            pltpu.VMEM((H0, L0), jnp.float32),              # x0 rows
            pltpu.VMEM((t0rows + kpad0, L1), jnp.float32),  # stacked deconv0 partials
            pltpu.VMEM((K1 * M1, L2), jnp.float32),         # stacked deconv1 partials
        ]

    def __call__(self, rgb_h, dvs_h):
        B, fd = rgb_h.shape
        kernel = functools.partial(_decoder_kernel, **self._sizes)
        whole = lambda b: (0, 0)
        return pl.pallas_call(
            kernel,
            out_shape=jax.ShapeDtypeStruct((B, self.C_OUT, self.H2, self.W2),
                                           jnp.float32),
            grid=(B,),
            in_specs=[
                pl.BlockSpec((B, fd), whole),               # rgb_h (VMEM resident)
                pl.BlockSpec((B, fd), whole),               # dvs_h
                pl.BlockSpec(self.Wr.shape, whole),
                pl.BlockSpec(self.Wd.shape, whole),
                pl.BlockSpec(self.bfc.shape, whole),
                pl.BlockSpec(self.wk0.shape, whole),
                pl.BlockSpec(self.R.shape, whole),
                pl.BlockSpec(self.B1.shape, whole),
                pl.BlockSpec(self.wk3.shape, whole),
                pl.BlockSpec(self.Q.shape, whole),
                pl.BlockSpec(self.bout.shape, whole),
            ],
            out_specs=pl.BlockSpec((None, self.C_OUT, self.H2, self.W2),
                                   lambda b: (b, 0, 0, 0)),
            scratch_shapes=self._scratch,
            compiler_params=pltpu.CompilerParams(
                dimension_semantics=("parallel",)),
        )(rgb_h, dvs_h, self.Wr, self.Wd, self.bfc, self.wk0, self.R,
          self.B1, self.wk3, self.Q, self.bout)


# ------------------------- pure-JAX reference check ------------------------

def _ref_deconv_nchw(x, W, b, stride, out_pad):
    B, C_in, H, Wd = x.shape
    _, C_out, K, _ = W.shape
    Ho = (H - 1) * stride + K + out_pad
    Wo = (Wd - 1) * stride + K + out_pad
    y = jnp.zeros((B, C_out, Ho, Wo), jnp.float32)
    for kh in range(K):
        for kw in range(K):
            p = jnp.einsum('bchw,cd->bdhw', x, W[:, :, kh, kw],
                           precision='highest')
            y = y.at[:, :, kh:kh + stride * H:stride,
                     kw:kw + stride * Wd:stride].add(p)
    return y + b.reshape(1, C_out, 1, 1)


def ref_forward(dec, rgb_h, dvs_h):
    fuse = jnp.concatenate([rgb_h, dvs_h], axis=1)
    h = jnp.maximum(jnp.dot(fuse, dec.W_fc.T, precision='highest') + dec.b_fc, 0.0)
    x = h.reshape(-1, dec.num_filters, 6, 6)
    x = jnp.maximum(_ref_deconv_nchw(x, dec.W_d0, dec.b_d0, 2, 0), 0.0)
    return _ref_deconv_nchw(x, dec.W_d3, dec.b_d3, 2, 1)


if __name__ == "__main__":
    B, feature_dim = 2, 32
    dec = HybridActionMaskV5DecoderPallas(feature_dim=feature_dim, num_filters=32)

    k1, k2 = jax.random.split(jax.random.PRNGKey(0))
    rgb_h = jax.random.normal(k1, (B, feature_dim), dtype=jnp.float32)
    dvs_h = jax.random.normal(k2, (B, feature_dim), dtype=jnp.float32)

    out = jax.block_until_ready(dec(rgb_h, dvs_h))
    assert out.shape == (B, 3, 32, 32), out.shape

    ref = jax.block_until_ready(ref_forward(dec, rgb_h, dvs_h))
    if not np.allclose(np.asarray(out), np.asarray(ref), atol=3e-3, rtol=3e-3):
        err = float(jnp.max(jnp.abs(out - ref)))
        raise AssertionError(f"mismatch vs reference, max abs err={err}")
    print("KERNEL_OK")
</pallas_src>

<mosaic_0001>
module attributes {stable_mosaic.version = 11 : i64} {
  func.func @_decoder_kernel(%arg0: i32, %arg1: memref<2x32xf32, #tpu.memory_space<vmem>>, %arg2: memref<2x32xf32, #tpu.memory_space<vmem>>, %arg3: memref<32x1536xf32, #tpu.memory_space<vmem>>, %arg4: memref<32x1536xf32, #tpu.memory_space<vmem>>, %arg5: memref<1x1536xf32, #tpu.memory_space<vmem>>, %arg6: memref<256x2560xf32, #tpu.memory_space<vmem>>, %arg7: memref<16x32xf32, #tpu.memory_space<vmem>>, %arg8: memref<16x512xf32, #tpu.memory_space<vmem>>, %arg9: memref<512x384xf32, #tpu.memory_space<vmem>>, %arg10: memref<32x48xf32, #tpu.memory_space<vmem>>, %arg11: memref<1x128xf32, #tpu.memory_space<vmem>>, %arg12: memref<1x3x32x32xf32, #tpu.memory_space<vmem>>, %arg13: memref<6x256xf32, #tpu.memory_space<vmem>>, %arg14: memref<32x512xf32, #tpu.memory_space<vmem>>, %arg15: memref<48x128xf32, #tpu.memory_space<vmem>>) attributes {dimension_semantics = [#tpu.dimension_semantics<parallel>], iteration_bounds = array<i64: 2>, scalar_prefetch = 0 : i64, scratch_operands = 3 : i64, tpu.core_type = #tpu.core_type<tc>, window_params = [{pipeline_mode = #tpu.pipeline_mode<synchronous>, transform_indices = @transform_0, window_bounds = array<i64: 2, 32>}, {pipeline_mode = #tpu.pipeline_mode<synchronous>, transform_indices = @transform_1, window_bounds = array<i64: 2, 32>}, {pipeline_mode = #tpu.pipeline_mode<synchronous>, transform_indices = @transform_2, window_bounds = array<i64: 32, 1536>}, {pipeline_mode = #tpu.pipeline_mode<synchronous>, transform_indices = @transform_3, window_bounds = array<i64: 32, 1536>}, {pipeline_mode = #tpu.pipeline_mode<synchronous>, transform_indices = @transform_4, window_bounds = array<i64: 1, 1536>}, {pipeline_mode = #tpu.pipeline_mode<synchronous>, transform_indices = @transform_5, window_bounds = array<i64: 256, 2560>}, {pipeline_mode = #tpu.pipeline_mode<synchronous>, transform_indices = @transform_6, window_bounds = array<i64: 16, 32>}, {pipeline_mode = #tpu.pipeline_mode<synchronous>, transform_indices = @transform_7, window_bounds = array<i64: 16, 512>}, {pipeline_mode = #tpu.pipeline_mode<synchronous>, transform_indices = @transform_8, window_bounds = array<i64: 512, 384>}, {pipeline_mode = #tpu.pipeline_mode<synchronous>, transform_indices = @transform_9, window_bounds = array<i64: 32, 48>}, {pipeline_mode = #tpu.pipeline_mode<synchronous>, transform_indices = @transform_10, window_bounds = array<i64: 1, 128>}, {transform_indices = @transform_11, window_bounds = array<i64: 1, 3, 32, 32>}]} {
    %0 = arith.index_cast %arg0 : i32 to index
    %c0 = arith.constant 0 : index
    %1 = vector.load %arg1[%0, %c0] : memref<2x32xf32, #tpu.memory_space<vmem>>, vector<1x32xf32>
    %2 = arith.index_cast %arg0 : i32 to index
    %c0_0 = arith.constant 0 : index
    %3 = vector.load %arg2[%2, %c0_0] : memref<2x32xf32, #tpu.memory_space<vmem>>, vector<1x32xf32>
    %c0_1 = arith.constant 0 : index
    %c0_2 = arith.constant 0 : index
    %4 = vector.load %arg3[%c0_1, %c0_2] : memref<32x1536xf32, #tpu.memory_space<vmem>>, vector<32x1536xf32>
    %cst = arith.constant dense<0.000000e+00> : vector<1x1536xf32>
    %5 = tpu.matmul %1, %4, %cst {dimension_numbers = #tpu.dot_dimension_numbers<[1], [0], [0], [1], [0, 0, 1, 1], [], []>} : vector<1x32xf32>, vector<32x1536xf32>, vector<1x1536xf32> -> vector<1x1536xf32>
    %c0_3 = arith.constant 0 : index
    %c0_4 = arith.constant 0 : index
    %6 = vector.load %arg4[%c0_3, %c0_4] : memref<32x1536xf32, #tpu.memory_space<vmem>>, vector<32x1536xf32>
    %cst_5 = arith.constant dense<0.000000e+00> : vector<1x1536xf32>
    %7 = tpu.matmul %3, %6, %cst_5 {dimension_numbers = #tpu.dot_dimension_numbers<[1], [0], [0], [1], [0, 0, 1, 1], [], []>} : vector<1x32xf32>, vector<32x1536xf32>, vector<1x1536xf32> -> vector<1x1536xf32>
    %8 = arith.addf %5, %7 : vector<1x1536xf32>
    %c0_6 = arith.constant 0 : index
    %c0_7 = arith.constant 0 : index
    %9 = vector.load %arg5[%c0_6, %c0_7] : memref<1x1536xf32, #tpu.memory_space<vmem>>, vector<1x1536xf32>
    %10 = arith.addf %8, %9 : vector<1x1536xf32>
    %cst_8 = arith.constant 0.000000e+00 : f32
    %11 = vector.broadcast %cst_8 : f32 to vector<1x1536xf32>
    %12 = arith.maximumf %10, %11 : vector<1x1536xf32>
    %13 = vector.extract_strided_slice %12 {offsets = [0, 0], sizes = [1, 256], strides = [1, 1]} : vector<1x1536xf32> to vector<1x256xf32>
    %c0_9 = arith.constant 0 : index
    %c0_10 = arith.constant 0 : index
    %14 = vector.load %arg13[%c0_9, %c0_10] : memref<6x256xf32, #tpu.memory_space<vmem>>, vector<1x256xf32>
    tpu.vector_store %arg13[%c0_9, %c0_10], %13 {strides = array<i32>} : memref<6x256xf32, #tpu.memory_space<vmem>>, vector<1x256xf32>,
    %15 = vector.extract_strided_slice %12 {offsets = [0, 256], sizes = [1, 256], strides = [1, 1]} : vector<1x1536xf32> to vector<1x256xf32>
    %c1 = arith.constant 1 : index
    %c0_11 = arith.constant 0 : index
    %16 = vector.load %arg13[%c1, %c0_11] : memref<6x256xf32, #tpu.memory_space<vmem>>, vector<1x256xf32>
    tpu.vector_store %arg13[%c1, %c0_11], %15 {strides = array<i32>} : memref<6x256xf32, #tpu.memory_space<vmem>>, vector<1x256xf32>,
    %17 = vector.extract_strided_slice %12 {offsets = [0, 512], sizes = [1, 256], strides = [1, 1]} : vector<1x1536xf32> to vector<1x256xf32>
    %c2 = arith.constant 2 : index
    %c0_12 = arith.constant 0 : index
    %18 = vector.load %arg13[%c2, %c0_12] : memref<6x256xf32, #tpu.memory_space<vmem>>, vector<1x256xf32>
    tpu.vector_store %arg13[%c2, %c0_12], %17 {strides = array<i32>} : memref<6x256xf32, #tpu.memory_space<vmem>>, vector<1x256xf32>,
    %19 = vector.extract_strided_slice %12 {offsets = [0, 768], sizes = [1, 256], strides = [1, 1]} : vector<1x1536xf32> to vector<1x256xf32>
    %c3 = arith.constant 3 : index
    %c0_13 = arith.constant 0 : index
    %20 = vector.load %arg13[%c3, %c0_13] : memref<6x256xf32, #tpu.memory_space<vmem>>, vector<1x256xf32>
    tpu.vector_store %arg13[%c3, %c0_13], %19 {strides = array<i32>} : memref<6x256xf32, #tpu.memory_space<vmem>>, vector<1x256xf32>,
    %21 = vector.extract_strided_slice %12 {offsets = [0, 1024], sizes = [1, 256], strides = [1, 1]} : vector<1x1536xf32> to vector<1x256xf32>
    %c4 = arith.constant 4 : index
    %c0_14 = arith.constant 0 : index
    %22 = vector.load %arg13[%c4, %c0_14] : memref<6x256xf32, #tpu.memory_space<vmem>>, vector<1x256xf32>
    tpu.vector_store %arg13[%c4, %c0_14], %21 {strides = array<i32>} : memref<6x256xf32, #tpu.memory_space<vmem>>, vector<1x256xf32>,
    %23 = vector.extract_strided_slice %12 {offsets = [0, 1280], sizes = [1, 256], strides = [1, 1]} : vector<1x1536xf32> to vector<1x256xf32>
    %c5 = arith.constant 5 : index
    %c0_15 = arith.constant 0 : index
    %24 = vector.load %arg13[%c5, %c0_15] : memref<6x256xf32, #tpu.memory_space<vmem>>, vector<1x256xf32>
    tpu.vector_store %arg13[%c5, %c0_15], %23 {strides = array<i32>} : memref<6x256xf32, #tpu.memory_space<vmem>>, vector<1x256xf32>,
    %c0_16 = arith.constant 0 : index
    %c0_17 = arith.constant 0 : index
    %25 = vector.load %arg13[%c0_16, %c0_17] : memref<6x256xf32, #tpu.memory_space<vmem>>, vector<6x256xf32>
    %c0_18 = arith.constant 0 : index
    %c0_19 = arith.constant 0 : index
    %26 = vector.load %arg6[%c0_18, %c0_19] : memref<256x2560xf32, #tpu.memory_space<vmem>>, vector<256x2560xf32>
    %cst_20 = arith.constant dense<0.000000e+00> : vector<6x2560xf32>
    %27 = tpu.matmul %25, %26, %cst_20 {dimension_numbers = #tpu.dot_dimension_numbers<[1], [0], [0], [1], [0, 0, 1, 1], [], []>} : vector<6x256xf32>, vector<256x2560xf32>, vector<6x2560xf32> -> vector<6x2560xf32>
    %cst_21 = arith.constant 0.000000e+00 : f32
    %28 = vector.broadcast %cst_21 : f32 to vector<2x512xf32>
    %c30 = arith.constant 30 : index
    %c0_22 = arith.constant 0 : index
    %29 = vector.load %arg14[%c30, %c0_22] : memref<32x512xf32, #tpu.memory_space<vmem>>, vector<2x512xf32>
    tpu.vector_store %arg14[%c30, %c0_22], %28 {strides = array<i32>} : memref<32x512xf32, #tpu.memory_space<vmem>>, vector<2x512xf32>,
    %30 = vector.extract_strided_slice %27 {offsets = [0, 0], sizes = [6, 512], strides = [1, 1]} : vector<6x2560xf32> to vector<6x512xf32>
    %c0_23 = arith.constant 0 : index
    %c0_24 = arith.constant 0 : index
    %31 = vector.load %arg14[%c0_23, %c0_24] : memref<32x512xf32, #tpu.memory_space<vmem>>, vector<6x512xf32>
    tpu.vector_store %arg14[%c0_23, %c0_24], %30 {strides = array<i32>} : memref<32x512xf32, #tpu.memory_space<vmem>>, vector<6x512xf32>,
    %32 = vector.extract_strided_slice %27 {offsets = [0, 512], sizes = [6, 512], strides = [1, 1]} : vector<6x2560xf32> to vector<6x512xf32>
    %c6 = arith.constant 6 : index
    %c0_25 = arith.constant 0 : index
    %33 = vector.load %arg14[%c6, %c0_25] : memref<32x512xf32, #tpu.memory_space<vmem>>, vector<6x512xf32>
    tpu.vector_store %arg14[%c6, %c0_25], %32 {strides = array<i32>} : memref<32x512xf32, #tpu.memory_space<vmem>>, vector<6x512xf32>,
    %34 = vector.extract_strided_slice %27 {offsets = [0, 1024], sizes = [6, 512], strides = [1, 1]} : vector<6x2560xf32> to vector<6x512xf32>
    %c12 = arith.constant 12 : index
    %c0_26 = arith.constant 0 : index
    %35 = vector.load %arg14[%c12, %c0_26] : memref<32x512xf32, #tpu.memory_space<vmem>>, vector<6x512xf32>
    tpu.vector_store %arg14[%c12, %c0_26], %34 {strides = array<i32>} : memref<32x512xf32, #tpu.memory_space<vmem>>, vector<6x512xf32>,
    %36 = vector.extract_strided_slice %27 {offsets = [0, 1536], sizes = [6, 512], strides = [1, 1]} : vector<6x2560xf32> to vector<6x512xf32>
    %c18 = arith.constant 18 : index
    %c0_27 = arith.constant 0 : index
    %37 = vector.load %arg14[%c18, %c0_27] : memref<32x512xf32, #tpu.memory_space<vmem>>, vector<6x512xf32>
    tpu.vector_store %arg14[%c18, %c0_27], %36 {strides = array<i32>} : memref<32x512xf32, #tpu.memory_space<vmem>>, vector<6x512xf32>,
    %38 = vector.extract_strided_slice %27 {offsets = [0, 2048], sizes = [6, 512], strides = [1, 1]} : vector<6x2560xf32> to vector<6x512xf32>
    %c24 = arith.constant 24 : index
    %c0_28 = arith.constant 0 : index
    %39 = vector.load %arg14[%c24, %c0_28] : memref<32x512xf32, #tpu.memory_space<vmem>>, vector<6x512xf32>
    tpu.vector_store %arg14[%c24, %c0_28], %38 {strides = array<i32>} : memref<32x512xf32, #tpu.memory_space<vmem>>, vector<6x512xf32>,
    %c0_29 = arith.constant 0 : index
    %c0_30 = arith.constant 0 : index
    %40 = vector.load %arg7[%c0_29, %c0_30] : memref<16x32xf32, #tpu.memory_space<vmem>>, vector<16x32xf32>
    %c0_31 = arith.constant 0 : index
    %c0_32 = arith.constant 0 : index
    %41 = vector.load %arg14[%c0_31, %c0_32] : memref<32x512xf32, #tpu.memory_space<vmem>>, vector<32x512xf32>
    %cst_33 = arith.constant dense<0.000000e+00> : vector<16x512xf32>
    %42 = tpu.matmul %40, %41, %cst_33 {dimension_numbers = #tpu.dot_dimension_numbers<[1], [0], [0], [1], [0, 0, 1, 1], [], []>} : vector<16x32xf32>, vector<32x512xf32>, vector<16x512xf32> -> vector<16x512xf32>
    %c0_34 = arith.constant 0 : index
    %c0_35 = arith.constant 0 : index
    %43 = vector.load %arg8[%c0_34, %c0_35] : memref<16x512xf32, #tpu.memory_space<vmem>>, vector<16x512xf32>
    %44 = arith.addf %42, %43 : vector<16x512xf32>
    %cst_36 = arith.constant 0.000000e+00 : f32
    %45 = vector.broadcast %cst_36 : f32 to vector<16x512xf32>
    %46 = arith.maximumf %44, %45 : vector<16x512xf32>
    %c0_37 = arith.constant 0 : index
    %c0_38 = arith.constant 0 : index
    %47 = vector.load %arg9[%c0_37, %c0_38] : memref<512x384xf32, #tpu.memory_space<vmem>>, vector<512x384xf32>
    %cst_39 = arith.constant dense<0.000000e+00> : vector<16x384xf32>
    %48 = tpu.matmul %46, %47, %cst_39 {dimension_numbers = #tpu.dot_dimension_numbers<[1], [0], [0], [1], [0, 0, 1, 1], [], []>} : vector<16x512xf32>, vector<512x384xf32>, vector<16x384xf32> -> vector<16x384xf32>
    %49 = vector.extract_strided_slice %48 {offsets = [0, 0], sizes = [16, 128], strides = [1, 1]} : vector<16x384xf32> to vector<16x128xf32>
    %c0_40 = arith.constant 0 : index
    %c0_41 = arith.constant 0 : index
    %50 = vector.load %arg15[%c0_40, %c0_41] : memref<48x128xf32, #tpu.memory_space<vmem>>, vector<16x128xf32>
    tpu.vector_store %arg15[%c0_40, %c0_41], %49 {strides = array<i32>} : memref<48x128xf32, #tpu.memory_space<vmem>>, vector<16x128xf32>,
    %51 = vector.extract_strided_slice %48 {offsets = [0, 128], sizes = [16, 128], strides = [1, 1]} : vector<16x384xf32> to vector<16x128xf32>
    %c16 = arith.constant 16 : index
    %c0_42 = arith.constant 0 : index
    %52 = vector.load %arg15[%c16, %c0_42] : memref<48x128xf32, #tpu.memory_space<vmem>>, vector<16x128xf32>
    tpu.vector_store %arg15[%c16, %c0_42], %51 {strides = array<i32>} : memref<48x128xf32, #tpu.memory_space<vmem>>, vector<16x128xf32>,
    %53 = vector.extract_strided_slice %48 {offsets = [0, 256], sizes = [16, 128], strides = [1, 1]} : vector<16x384xf32> to vector<16x128xf32>
    %c32 = arith.constant 32 : index
    %c0_43 = arith.constant 0 : index
    %54 = vector.load %arg15[%c32, %c0_43] : memref<48x128xf32, #tpu.memory_space<vmem>>, vector<16x128xf32>
    tpu.vector_store %arg15[%c32, %c0_43], %53 {strides = array<i32>} : memref<48x128xf32, #tpu.memory_space<vmem>>, vector<16x128xf32>,
    %c0_44 = arith.constant 0 : index
    %c0_45 = arith.constant 0 : index
    %55 = vector.load %arg10[%c0_44, %c0_45] : memref<32x48xf32, #tpu.memory_space<vmem>>, vector<32x48xf32>
    %c0_46 = arith.constant 0 : index
    %c0_47 = arith.constant 0 : index
    %56 = vector.load %arg15[%c0_46, %c0_47] : memref<48x128xf32, #tpu.memory_space<vmem>>, vector<48x128xf32>
    %cst_48 = arith.constant dense<0.000000e+00> : vector<32x128xf32>
    %57 = tpu.matmul %55, %56, %cst_48 {dimension_numbers = #tpu.dot_dimension_numbers<[1], [0], [0], [1], [0, 0, 1, 1], [], []>} : vector<32x48xf32>, vector<48x128xf32>, vector<32x128xf32> -> vector<32x128xf32>
    %c0_49 = arith.constant 0 : index
    %c0_50 = arith.constant 0 : index
    %58 = vector.load %arg11[%c0_49, %c0_50] : memref<1x128xf32, #tpu.memory_space<vmem>>, vector<1x128xf32>
    %59 = vector.broadcast %58 : vector<1x128xf32> to vector<32x128xf32>
    %60 = arith.addf %57, %59 : vector<32x128xf32>
    %61 = vector.extract_strided_slice %60 {offsets = [0, 0], sizes = [32, 32], strides = [1, 1]} : vector<32x128xf32> to vector<32x32xf32>
    %c0_51 = arith.constant 0 : index
    %c0_52 = arith.constant 0 : index
    %c0_53 = arith.constant 0 : index
    %c0_54 = arith.constant 0 : index
    %62 = vector.load %arg12[%c0_51, %c0_52, %c0_53, %c0_54] : memref<1x3x32x32xf32, #tpu.memory_space<vmem>>, vector<1x1x32x32xf32>
    %63 = vector.shape_cast %62 : vector<1x1x32x32xf32> to vector<32x32xf32>
    %64 = vector.shape_cast %61 : vector<32x32xf32> to vector<1x1x32x32xf32>
    tpu.vector_store %arg12[%c0_51, %c0_52, %c0_53, %c0_54], %64 {strides = array<i32>} : memref<1x3x32x32xf32, #tpu.memory_space<vmem>>, vector<1x1x32x32xf32>,
    %65 = vector.extract_strided_slice %60 {offsets = [0, 32], sizes = [32, 32], strides = [1, 1]} : vector<32x128xf32> to vector<32x32xf32>
    %c0_55 = arith.constant 0 : index
    %c1_56 = arith.constant 1 : index
    %c0_57 = arith.constant 0 : index
    %c0_58 = arith.constant 0 : index
    %66 = vector.load %arg12[%c0_55, %c1_56, %c0_57, %c0_58] : memref<1x3x32x32xf32, #tpu.memory_space<vmem>>, vector<1x1x32x32xf32>
    %67 = vector.shape_cast %66 : vector<1x1x32x32xf32> to vector<32x32xf32>
    %68 = vector.shape_cast %65 : vector<32x32xf32> to vector<1x1x32x32xf32>
    tpu.vector_store %arg12[%c0_55, %c1_56, %c0_57, %c0_58], %68 {strides = array<i32>} : memref<1x3x32x32xf32, #tpu.memory_space<vmem>>, vector<1x1x32x32xf32>,
    %69 = vector.extract_strided_slice %60 {offsets = [0, 64], sizes = [32, 32], strides = [1, 1]} : vector<32x128xf32> to vector<32x32xf32>
    %c0_59 = arith.constant 0 : index
    %c2_60 = arith.constant 2 : index
    %c0_61 = arith.constant 0 : index
    %c0_62 = arith.constant 0 : index
    %70 = vector.load %arg12[%c0_59, %c2_60, %c0_61, %c0_62] : memref<1x3x32x32xf32, #tpu.memory_space<vmem>>, vector<1x1x32x32xf32>
    %71 = vector.shape_cast %70 : vector<1x1x32x32xf32> to vector<32x32xf32>
    %72 = vector.shape_cast %69 : vector<32x32xf32> to vector<1x1x32x32xf32>
    tpu.vector_store %arg12[%c0_59, %c2_60, %c0_61, %c0_62], %72 {strides = array<i32>} : memref<1x3x32x32xf32, #tpu.memory_space<vmem>>, vector<1x1x32x32xf32>,
    return
  }
  func.func @transform_0(%arg0: i32) -> (i32, i32) {
    %c0_i32 = arith.constant 0 : i32
    %c0_i32_0 = arith.constant 0 : i32
    %c0_i32_1 = arith.constant 0 : i32
    return %c0_i32, %c0_i32_0 : i32, i32
  }
  func.func @transform_1(%arg0: i32) -> (i32, i32) {
    %c0_i32 = arith.constant 0 : i32
    %c0_i32_0 = arith.constant 0 : i32
    %c0_i32_1 = arith.constant 0 : i32
    return %c0_i32, %c0_i32_0 : i32, i32
  }
  func.func @transform_2(%arg0: i32) -> (i32, i32) {
    %c0_i32 = arith.constant 0 : i32
    %c0_i32_0 = arith.constant 0 : i32
    %c0_i32_1 = arith.constant 0 : i32
    return %c0_i32, %c0_i32_0 : i32, i32
  }
  func.func @transform_3(%arg0: i32) -> (i32, i32) {
    %c0_i32 = arith.constant 0 : i32
    %c0_i32_0 = arith.constant 0 : i32
    %c0_i32_1 = arith.constant 0 : i32
    return %c0_i32, %c0_i32_0 : i32, i32
  }
  func.func @transform_4(%arg0: i32) -> (i32, i32) {
    %c0_i32 = arith.constant 0 : i32
    %c0_i32_0 = arith.constant 0 : i32
    %c0_i32_1 = arith.constant 0 : i32
    return %c0_i32, %c0_i32_0 : i32, i32
  }
  func.func @transform_5(%arg0: i32) -> (i32, i32) {
    %c0_i32 = arith.constant 0 : i32
    %c0_i32_0 = arith.constant 0 : i32
    %c0_i32_1 = arith.constant 0 : i32
    return %c0_i32, %c0_i32_0 : i32, i32
  }
  func.func @transform_6(%arg0: i32) -> (i32, i32) {
    %c0_i32 = arith.constant 0 : i32
    %c0_i32_0 = arith.constant 0 : i32
    %c0_i32_1 = arith.constant 0 : i32
    return %c0_i32, %c0_i32_0 : i32, i32
  }
  func.func @transform_7(%arg0: i32) -> (i32, i32) {
    %c0_i32 = arith.constant 0 : i32
    %c0_i32_0 = arith.constant 0 : i32
    %c0_i32_1 = arith.constant 0 : i32
    return %c0_i32, %c0_i32_0 : i32, i32
  }
  func.func @transform_8(%arg0: i32) -> (i32, i32) {
    %c0_i32 = arith.constant 0 : i32
    %c0_i32_0 = arith.constant 0 : i32
    %c0_i32_1 = arith.constant 0 : i32
    return %c0_i32, %c0_i32_0 : i32, i32
  }
  func.func @transform_9(%arg0: i32) -> (i32, i32) {
    %c0_i32 = arith.constant 0 : i32
    %c0_i32_0 = arith.constant 0 : i32
    %c0_i32_1 = arith.constant 0 : i32
    return %c0_i32, %c0_i32_0 : i32, i32
  }
  func.func @transform_10(%arg0: i32) -> (i32, i32) {
    %c0_i32 = arith.constant 0 : i32
    %c0_i32_0 = arith.constant 0 : i32
    %c0_i32_1 = arith.constant 0 : i32
    return %c0_i32, %c0_i32_0 : i32, i32
  }
  func.func @transform_11(%arg0: i32) -> (i32, i32, i32, i32) {
    %c0_i32 = arith.constant 0 : i32
    %c0_i32_0 = arith.constant 0 : i32
    %c0_i32_1 = arith.constant 0 : i32
    %c0_i32_2 = arith.constant 0 : i32
    return %arg0, %c0_i32, %c0_i32_0, %c0_i32_1 : i32, i32, i32, i32
  }
}

</mosaic_0001>

<llo_original>
// kernel: tpu_custom_call.1
$region0: #{tpu_custom_call.1}
  #allocation0 [shape = 'u32[]', space=smem, size = 0x4, offset = 0x4, fixed_abs, tag = 'smem constant byte address 0x4 - core index']
  #allocation1 [shape = 'u32[144,128]{1,0:T(1,128)}', space=vmem, size = 0x12000, scoped, tag = 'internal scratch']
  #allocation2 [shape = 'f32[6,256]{1,0:T(8,128)}', space=vmem, size = 0x2000, scoped, tag = 'scratch operand']
  #allocation3 [shape = 'f32[32,512]{1,0:T(8,128)}', space=vmem, size = 0x10000, scoped, tag = 'scratch operand']
  #allocation4 [shape = 'f32[48,128]{1,0:T(8,128)}', space=vmem, size = 0x6000, scoped, tag = 'scratch operand']
  %s0 = inlined_call_operand.hbm [shape: f32[2,32], index: 0, kind: input, shape index: {}]
  %s1 = inlined_call_operand.hbm [shape: f32[2,32], index: 1, kind: input, shape index: {}]
  %s2 = inlined_call_operand.hbm [shape: f32[32,1536], index: 2, kind: input, shape index: {}]
  %s3 = inlined_call_operand.hbm [shape: f32[32,1536], index: 3, kind: input, shape index: {}]
  %s4 = inlined_call_operand.hbm [shape: f32[1,1536], index: 4, kind: input, shape index: {}]
  %s5 = inlined_call_operand.hbm [shape: f32[256,2560], index: 5, kind: input, shape index: {}]
  %s6 = inlined_call_operand.hbm [shape: f32[16,32], index: 6, kind: input, shape index: {}]
  %s7 = inlined_call_operand.hbm [shape: f32[16,512], index: 7, kind: input, shape index: {}]
  %s8 = inlined_call_operand.hbm [shape: f32[512,384], index: 8, kind: input, shape index: {}]
  %s9 = inlined_call_operand.hbm [shape: f32[32,48], index: 9, kind: input, shape index: {}]
  %s10 = inlined_call_operand.hbm [shape: f32[1,128], index: 10, kind: input, shape index: {}]
  %s11 = inlined_call_operand.hbm [shape: f32[2,3,32,32], index: 11, kind: output, shape index: {}]
  %s12 = sld [smem:[#allocation0]]
  $region121: #{tpu_custom_call.1} parent=0
    _
  %s14 = ssub.s32 1, %s12
  %s15 = scalar_select 0, %s14, %s12
  $region1: #{tpu_custom_call.1} parent=0
    #allocation5 [shape = 'u8[1024]{0}', space=vmem, size = 0x400, scoped, tag = 'input window, operand 0, single buffered']
    #allocation6 [shape = 's32[2]{0}', space=sflag, size = 0x8, scoped, tag = 'scoped memory for tpu_custom_call.1']
    #allocation7 [shape = 's32[2]{0}', space=sflag, size = 0x8, scoped, tag = 'scoped memory for tpu_custom_call.1']
    #allocation8 [shape = 'u8[1024]{0}', space=vmem, size = 0x400, scoped, tag = 'input window, operand 1, single buffered']
    #allocation9 [shape = 's32[1]{0}', space=sflag, size = 0x4, scoped, tag = 'scoped memory for tpu_custom_call.1']
    #allocation10 [shape = 'u8[196608]{0}', space=vmem, size = 0x30000, scoped, tag = 'input window, operand 2, single buffered']
    #allocation11 [shape = 'u8[196608]{0}', space=vmem, size = 0x30000, scoped, tag = 'input window, operand 3, single buffered']
    #allocation12 [shape = 's32[1]{0}', space=sflag, size = 0x4, scoped, tag = 'scoped memory for tpu_custom_call.1']
    #allocation13 [shape = 'u8[6144]{0}', space=vmem, size = 0x1800, scoped, tag = 'input window, operand 4, single buffered']
    #allocation14 [shape = 'u8[2621440]{0}', space=vmem, size = 0x280000, scoped, tag = 'input window, operand 5, single buffered']
    #allocation15 [shape = 's32[1]{0}', space=sflag, size = 0x4, scoped, tag = 'scoped memory for tpu_custom_call.1']
    #allocation16 [shape = 'u8[8192]{0}', space=vmem, size = 0x2000, scoped, tag = 'input window, operand 6, single buffered']
    #allocation17 [shape = 'u8[32768]{0}', space=vmem, size = 0x8000, scoped, tag = 'input window, operand 7, single buffered']
    #allocation18 [shape = 's32[1]{0}', space=sflag, size = 0x4, scoped, tag = 'scoped memory for tpu_custom_call.1']
    #allocation19 [shape = 'u8[786432]{0}', space=vmem, size = 0xc0000, scoped, tag = 'input window, operand 8, single buffered']
    #allocation20 [shape = 'u8[16384]{0}', space=vmem, size = 0x4000, scoped, tag = 'input window, operand 9, single buffered']
    #allocation21 [shape = 's32[1]{0}', space=sflag, size = 0x4, scoped, tag = 'scoped memory for tpu_custom_call.1']
    #allocation22 [shape = 'u8[512]{0}', space=vmem, size = 0x400, scoped, tag = 'input window, operand 10, single buffered']
    #allocation23 [shape = 'u8[98304]{0}', space=vmem, size = 0x18000, scoped, tag = 'output window, operand 0']
    %16 = vsyncpa [#allocation6], 0
    %17 = vsyncpa [#allocation9], 0
    %18 = vsyncpa [#allocation12], 0
    %19 = vsyncpa [#allocation15], 0
    %20 = vsyncpa [#allocation18], 0
    %21 = vsyncpa [#allocation21], 0
    %22 = vsyncpa [#allocation7], 0
    %s23 = scalar_lea.sflag [#allocation7], 1
    %24 = vsyncpa %s23, 0
    loop: start=0, step=1, limit=4
    $region2: #{tpu_custom_call.1} parent=1 // loop_pre_header
      _
    $region3: #{tpu_custom_call.1} parent=1 // loop_header
      %s26 = sphi 0, %s30
      %p27 = scmp.ge.s32.totalorder %s26, 4
      %s34 = sphi 0, %s34
      %s36 = sphi 0, %s34
      %s37 = sphi 0, %s36
      %s51 = sphi 0, %s37
      %s55 = sphi 0, %s55
      %s57 = sphi 0, %s55
      %s58 = sphi 0, %s57
      %s72 = sphi 0, %s58
      %s76 = sphi 0, %s76
      %s78 = sphi 0, %s76
      %s79 = sphi 0, %s78
      %s93 = sphi 0, %s79
      %s97 = sphi 0, %s97
      %s99 = sphi 0, %s97
      %s100 = sphi 0, %s99
      %s114 = sphi 0, %s100
      %s118 = sphi 0, %s118
      %s120 = sphi 0, %s118
      %s121 = sphi 0, %s120
      %s135 = sphi 0, %s121
      %s139 = sphi 0, %s139
      %s141 = sphi 0, %s139
      %s142 = sphi 0, %s141
      %s156 = sphi 0, %s142
      %s160 = sphi 0, %s160
      %s162 = sphi 0, %s160
      %s163 = sphi 0, %s162
      %s177 = sphi 0, %s163
      %s181 = sphi 0, %s181
      %s183 = sphi 0, %s181
      %s184 = sphi 0, %s183
      %s198 = sphi 0, %s184
      %s202 = sphi 0, %s202
      %s204 = sphi 0, %s202
      %s205 = sphi 0, %s204
      %s219 = sphi 0, %s205
      %s223 = sphi 0, %s223
      %s225 = sphi 0, %s223
      %s226 = sphi 0, %s225
      %s240 = sphi 0, %s226
      %s244 = sphi 0, %s244
      %s246 = sphi 0, %s244
      %s247 = sphi 0, %s246
      %s261 = sphi 0, %s247
      %s267 = sphi 0, %s269
      %s270 = sphi 0, %s267
      %s271 = sphi 0, %s270
      %s287 = sphi 0, %s271
    $region4: #{tpu_custom_call.1} parent=1 // loop_header_branch
      %29 = sbr.rel (%p27) target = $region8
    $region5: #{tpu_custom_call.1} parent=1 // loop_body
      %s31 = ssub.s32 %s26, 1
      %s32 = ssub.s32 %s26, 2
      %s33 = sadd.s32 %s26, 1
      %s35 = sadd.s32 %s34, 1
      %p38 = scmp.eq.s32.totalorder %s26, 1
      %p39 = scmp.ne.s32.totalorder %s34, %s36
      %p40 = scmp.eq.s32.totalorder %s26, 0
      %p41 = por %p39, %p40
      %p42 = scmp.ne.s32.totalorder %s34, %s36
      %p43 = scmp.eq.s32.totalorder %s31, 1
      %p44 = por %p42, %p43
      %p45 = scmp.ne.s32.totalorder %s36, %s37
      %p46 = scmp.eq.s32.totalorder %s31, 0
      %p47 = por %p45, %p46
      %p48 = scmp.ne.s32.totalorder %s36, %s37
      %p49 = scmp.eq.s32.totalorder %s32, 1
      %p50 = por %p48, %p49
      %p52 = scmp.ne.s32.totalorder %s37, %s51
      %p53 = scmp.eq.s32.totalorder %s32, 0
      %p54 = por %p52, %p53
      %s56 = sadd.s32 %s55, 1
      %p59 = scmp.eq.s32.totalorder %s26, 1
      %p60 = scmp.ne.s32.totalorder %s55, %s57
      %p61 = scmp.eq.s32.totalorder %s26, 0
      %p62 = por %p60, %p61
      %p63 = scmp.ne.s32.totalorder %s55, %s57
      %p64 = scmp.eq.s32.totalorder %s31, 1
      %p65 = por %p63, %p64
      %p66 = scmp.ne.s32.totalorder %s57, %s58
      %p67 = scmp.eq.s32.totalorder %s31, 0
      %p68 = por %p66, %p67
      %p69 = scmp.ne.s32.totalorder %s57, %s58
      %p70 = scmp.eq.s32.totalorder %s32, 1
      %p71 = por %p69, %p70
      %p73 = scmp.ne.s32.totalorder %s58, %s72
      %p74 = scmp.eq.s32.totalorder %s32, 0
      %p75 = por %p73, %p74
      %s77 = sadd.s32 %s76, 1
      %p80 = scmp.eq.s32.totalorder %s26, 1
      %p81 = scmp.ne.s32.totalorder %s76, %s78
      %p82 = scmp.eq.s32.totalorder %s26, 0
      %p83 = por %p81, %p82
      %p84 = scmp.ne.s32.totalorder %s76, %s78
      %p85 = scmp.eq.s32.totalorder %s31, 1
      %p86 = por %p84, %p85
      %p87 = scmp.ne.s32.totalorder %s78, %s79
      %p88 = scmp.eq.s32.totalorder %s31, 0
      %p89 = por %p87, %p88
      %p90 = scmp.ne.s32.totalorder %s78, %s79
      %p91 = scmp.eq.s32.totalorder %s32, 1
      %p92 = por %p90, %p91
      %p94 = scmp.ne.s32.totalorder %s79, %s93
      %p95 = scmp.eq.s32.totalorder %s32, 0
      %p96 = por %p94, %p95
      %s98 = sadd.s32 %s97, 1
      %p101 = scmp.eq.s32.totalorder %s26, 1
      %p102 = scmp.ne.s32.totalorder %s97, %s99
      %p103 = scmp.eq.s32.totalorder %s26, 0
      %p104 = por %p102, %p103
      %p105 = scmp.ne.s32.totalorder %s97, %s99
      %p106 = scmp.eq.s32.totalorder %s31, 1
      %p107 = por %p105, %p106
      %p108 = scmp.ne.s32.totalorder %s99, %s100
      %p109 = scmp.eq.s32.totalorder %s31, 0
      %p110 = por %p108, %p109
      %p111 = scmp.ne.s32.totalorder %s99, %s100
      %p112 = scmp.eq.s32.totalorder %s32, 1
      %p113 = por %p111, %p112
      %p115 = scmp.ne.s32.totalorder %s100, %s114
      %p116 = scmp.eq.s32.totalorder %s32, 0
      %p117 = por %p115, %p116
      %s119 = sadd.s32 %s118, 1
      %p122 = scmp.eq.s32.totalorder %s26, 1
      %p123 = scmp.ne.s32.totalorder %s118, %s120
      %p124 = scmp.eq.s32.totalorder %s26, 0
      %p125 = por %p123, %p124
      %p126 = scmp.ne.s32.totalorder %s118, %s120
      %p127 = scmp.eq.s32.totalorder %s31, 1
      %p128 = por %p126, %p127
      %p129 = scmp.ne.s32.totalorder %s120, %s121
      %p130 = scmp.eq.s32.totalorder %s31, 0
      %p131 = por %p129, %p130
      %p132 = scmp.ne.s32.totalorder %s120, %s121
      %p133 = scmp.eq.s32.totalorder %s32, 1
      %p134 = por %p132, %p133
      %p136 = scmp.ne.s32.totalorder %s121, %s135
      %p137 = scmp.eq.s32.totalorder %s32, 0
      %p138 = por %p136, %p137
      %s140 = sadd.s32 %s139, 1
      %p143 = scmp.eq.s32.totalorder %s26, 1
      %p144 = scmp.ne.s32.totalorder %s139, %s141
      %p145 = scmp.eq.s32.totalorder %s26, 0
      %p146 = por %p144, %p145
      %p147 = scmp.ne.s32.totalorder %s139, %s141
      %p148 = scmp.eq.s32.totalorder %s31, 1
      %p149 = por %p147, %p148
      %p150 = scmp.ne.s32.totalorder %s141, %s142
      %p151 = scmp.eq.s32.totalorder %s31, 0
      %p152 = por %p150, %p151
      %p153 = scmp.ne.s32.totalorder %s141, %s142
      %p154 = scmp.eq.s32.totalorder %s32, 1
      %p155 = por %p153, %p154
      %p157 = scmp.ne.s32.totalorder %s142, %s156
      %p158 = scmp.eq.s32.totalorder %s32, 0
      %p159 = por %p157, %p158
      %s161 = sadd.s32 %s160, 1
      %p164 = scmp.eq.s32.totalorder %s26, 1
      %p165 = scmp.ne.s32.totalorder %s160, %s162
      %p166 = scmp.eq.s32.totalorder %s26, 0
      %p167 = por %p165, %p166
      %p168 = scmp.ne.s32.totalorder %s160, %s162
      %p169 = scmp.eq.s32.totalorder %s31, 1
      %p170 = por %p168, %p169
      %p171 = scmp.ne.s32.totalorder %s162, %s163
      %p172 = scmp.eq.s32.totalorder %s31, 0
      %p173 = por %p171, %p172
      %p174 = scmp.ne.s32.totalorder %s162, %s163
      %p175 = scmp.eq.s32.totalorder %s32, 1
      %p176 = por %p174, %p175
      %p178 = scmp.ne.s32.totalorder %s163, %s177
      %p179 = scmp.eq.s32.totalorder %s32, 0
      %p180 = por %p178, %p179
      %s182 = sadd.s32 %s181, 1
      %p185 = scmp.eq.s32.totalorder %s26, 1
      %p186 = scmp.ne.s32.totalorder %s181, %s183
      %p187 = scmp.eq.s32.totalorder %s26, 0
      %p188 = por %p186, %p187
      %p189 = scmp.ne.s32.totalorder %s181, %s183
      %p190 = scmp.eq.s32.totalorder %s31, 1
      %p191 = por %p189, %p190
      %p192 = scmp.ne.s32.totalorder %s183, %s184
      %p193 = scmp.eq.s32.totalorder %s31, 0
      %p194 = por %p192, %p193
      %p195 = scmp.ne.s32.totalorder %s183, %s184
      %p196 = scmp.eq.s32.totalorder %s32, 1
      %p197 = por %p195, %p196
      %p199 = scmp.ne.s32.totalorder %s184, %s198
      %p200 = scmp.eq.s32.totalorder %s32, 0
      %p201 = por %p199, %p200
      %s203 = sadd.s32 %s202, 1
      %p206 = scmp.eq.s32.totalorder %s26, 1
      %p207 = scmp.ne.s32.totalorder %s202, %s204
      %p208 = scmp.eq.s32.totalorder %s26, 0
      %p209 = por %p207, %p208
      %p210 = scmp.ne.s32.totalorder %s202, %s204
      %p211 = scmp.eq.s32.totalorder %s31, 1
      %p212 = por %p210, %p211
      %p213 = scmp.ne.s32.totalorder %s204, %s205
      %p214 = scmp.eq.s32.totalorder %s31, 0
      %p215 = por %p213, %p214
      %p216 = scmp.ne.s32.totalorder %s204, %s205
      %p217 = scmp.eq.s32.totalorder %s32, 1
      %p218 = por %p216, %p217
      %p220 = scmp.ne.s32.totalorder %s205, %s219
      %p221 = scmp.eq.s32.totalorder %s32, 0
      %p222 = por %p220, %p221
      %s224 = sadd.s32 %s223, 1
      %p227 = scmp.eq.s32.totalorder %s26, 1
      %p228 = scmp.ne.s32.totalorder %s223, %s225
      %p229 = scmp.eq.s32.totalorder %s26, 0
      %p230 = por %p228, %p229
      %p231 = scmp.ne.s32.totalorder %s223, %s225
      %p232 = scmp.eq.s32.totalorder %s31, 1
      %p233 = por %p231, %p232
      %p234 = scmp.ne.s32.totalorder %s225, %s226
      %p235 = scmp.eq.s32.totalorder %s31, 0
      %p236 = por %p234, %p235
      %p237 = scmp.ne.s32.totalorder %s225, %s226
      %p238 = scmp.eq.s32.totalorder %s32, 1
      %p239 = por %p237, %p238
      %p241 = scmp.ne.s32.totalorder %s226, %s240
      %p242 = scmp.eq.s32.totalorder %s32, 0
      %p243 = por %p241, %p242
      %s245 = sadd.s32 %s244, 1
      %p248 = scmp.eq.s32.totalorder %s26, 1
      %p249 = scmp.ne.s32.totalorder %s244, %s246
      %p250 = scmp.eq.s32.totalorder %s26, 0
      %p251 = por %p249, %p250
      %p252 = scmp.ne.s32.totalorder %s244, %s246
      %p253 = scmp.eq.s32.totalorder %s31, 1
      %p254 = por %p252, %p253
      %p255 = scmp.ne.s32.totalorder %s246, %s247
      %p256 = scmp.eq.s32.totalorder %s31, 0
      %p257 = por %p255, %p256
      %p258 = scmp.ne.s32.totalorder %s246, %s247
      %p259 = scmp.eq.s32.totalorder %s32, 1
      %p260 = por %p258, %p259
      %p262 = scmp.ne.s32.totalorder %s247, %s261
      %p263 = scmp.eq.s32.totalorder %s32, 0
      %p264 = por %p262, %p263
      %s265 = ssub.s32 %s26, %s33
      %p266 = scmp.eq.s32.totalorder %s265, 0
      %s268 = sadd.s32 %s267, 1
      %s269 = scalar_select %p266, %s267, %s268
      %p272 = pneg %p266
      %p273 = scmp.eq.s32.totalorder %s26, 1
      %p274 = por %p272, %p273
      %p275 = scmp.ne.s32.totalorder %s267, %s270
      %p276 = scmp.eq.s32.totalorder %s26, 0
      %p277 = por %p275, %p276
      %p278 = scmp.ne.s32.totalorder %s267, %s270
      %p279 = scmp.eq.s32.totalorder %s31, 1
      %p280 = por %p278, %p279
      %p281 = scmp.ne.s32.totalorder %s270, %s271
      %p282 = scmp.eq.s32.totalorder %s31, 0
      %p283 = por %p281, %p282
      %p284 = scmp.ne.s32.totalorder %s270, %s271
      %p285 = scmp.eq.s32.totalorder %s32, 1
      %p286 = por %p284, %p285
      %p288 = scmp.ne.s32.totalorder %s271, %s287
      %p289 = scmp.eq.s32.totalorder %s32, 0
      %p290 = por %p288, %p289
      %p291 = scmp.le.s32.totalorder 1, %s26
      %p292 = scmp.lt.s32.totalorder %s26, 3
      %p293 = pnand %p291, %p292
      %p294 = pneg %p293
      // Predicated region
      $region9: #{tpu_custom_call.1} parent=5 // pred_check
        _
      $region10: #{tpu_custom_call.1} parent=5 // pred_check_branch
        %296 = sbr.rel (%p293) target = $region12
      $region11: #{tpu_custom_call.1} parent=5 // pred_region
        %s297 = ssub.s32 %s26, 1
        // Predicated region
        $region13: #{tpu_custom_call.1} parent=11 // pred_check
          %p298 = pneg %p47
        $region14: #{tpu_custom_call.1} parent=11 // pred_check_branch
          %300 = sbr.rel (%p298) target = $region16
        $region15: #{tpu_custom_call.1} parent=11 // pred_region
          %s302 = ssub.s32 32, 32
          %303 = vsyncadd [#allocation6], %s302
          %s305 = sshll.u32 [#allocation5], 4
          %s306 = int_to_ptr.vmem [resolvable:$true] %s305
          %308 = dma.hbm_to_vmem [thread:$0]  %s0, 32, %s306, [#allocation6]
        $region16: #{tpu_custom_call.1} parent=11 // pred_fallthru
          _
        // Predicated region
        $region17: #{tpu_custom_call.1} parent=11 // pred_check
          %p309 = pneg %p68
        $region18: #{tpu_custom_call.1} parent=11 // pred_check_branch
          %311 = sbr.rel (%p309) target = $region20
        $region19: #{tpu_custom_call.1} parent=11 // pred_region
          %s313 = ssub.s32 32, 32
          %314 = vsyncadd [#allocation9], %s313
          %s316 = sshll.u32 [#allocation8], 4
          %s317 = int_to_ptr.vmem [resolvable:$true] %s316
          %319 = dma.hbm_to_vmem [thread:$0]  %s1, 32, %s317, [#allocation9]
        $region20: #{tpu_custom_call.1} parent=11 // pred_fallthru
          _
        // Predicated region
        $region21: #{tpu_custom_call.1} parent=11 // pred_check
          %p320 = pneg %p89
        $region22: #{tpu_custom_call.1} parent=11 // pred_check_branch
          %322 = sbr.rel (%p320) target = $region24
        $region23: #{tpu_custom_call.1} parent=11 // pred_region
          %s324 = ssub.s32 6144, 6144
          %325 = vsyncadd [#allocation9], %s324
          %s326 = sshll.u32 [#allocation10], 4
          %s327 = int_to_ptr.vmem [resolvable:$true] %s326
          %332 = dma.hbm_to_vmem [thread:$0]  %s2, 6144, %s327, [#allocation9], 1536, 1536, 96
        $region24: #{tpu_custom_call.1} parent=11 // pred_fallthru
          _
        // Predicated region
        $region25: #{tpu_custom_call.1} parent=11 // pred_check
          %p333 = pneg %p110
        $region26: #{tpu_custom_call.1} parent=11 // pred_check_branch
          %335 = sbr.rel (%p333) target = $region28
        $region27: #{tpu_custom_call.1} parent=11 // pred_region
          %s337 = ssub.s32 6144, 6144
          %338 = vsyncadd [#allocation12], %s337
          %s339 = sshll.u32 [#allocation11], 4
          %s340 = int_to_ptr.vmem [resolvable:$true] %s339
          %345 = dma.hbm_to_vmem [thread:$0]  %s3, 6144, %s340, [#allocation12], 1536, 1536, 96
        $region28: #{tpu_custom_call.1} parent=11 // pred_fallthru
          _
        // Predicated region
        $region29: #{tpu_custom_call.1} parent=11 // pred_check
          %p346 = pneg %p131
        $region30: #{tpu_custom_call.1} parent=11 // pred_check_branch
          %348 = sbr.rel (%p346) target = $region32
        $region31: #{tpu_custom_call.1} parent=11 // pred_region
          %s350 = ssub.s32 192, 192
          %351 = vsyncadd [#allocation12], %s350
          %s353 = sshll.u32 [#allocation13], 4
          %s354 = int_to_ptr.vmem [resolvable:$true] %s353
          %356 = dma.hbm_to_vmem [thread:$0]  %s4, 192, %s354, [#allocation12]
        $region32: #{tpu_custom_call.1} parent=11 // pred_fallthru
          _
        // Predicated region
        $region33: #{tpu_custom_call.1} parent=11 // pred_check
          %p357 = pneg %p152
        $region34: #{tpu_custom_call.1} parent=11 // pred_check_branch
          %359 = sbr.rel (%p357) target = $region36
        $region35: #{tpu_custom_call.1} parent=11 // pred_region
          %s361 = ssub.s32 81920, 81920
          %362 = vsyncadd [#allocation15], %s361
          %s363 = sshll.u32 [#allocation14], 4
          %s364 = int_to_ptr.vmem [resolvable:$true] %s363
          %369 = dma.hbm_to_vmem [thread:$0]  %s5, 81920, %s364, [#allocation15], 2560, 2560, 160
        $region36: #{tpu_custom_call.1} parent=11 // pred_fallthru
          _
        // Predicated region
        $region37: #{tpu_custom_call.1} parent=11 // pred_check
          %p370 = pneg %p173
        $region38: #{tpu_custom_call.1} parent=11 // pred_check_branch
          %372 = sbr.rel (%p370) target = $region40
        $region39: #{tpu_custom_call.1} parent=11 // pred_region
          %s374 = ssub.s32 256, 256
          %375 = vsyncadd [#allocation15], %s374
          %s376 = sshll.u32 [#allocation16], 4
          %s377 = int_to_ptr.vmem [resolvable:$true] %s376
          %382 = dma.hbm_to_vmem [thread:$0]  %s6, 256, %s377, [#allocation15], 128, 128, 8
        $region40: #{tpu_custom_call.1} parent=11 // pred_fallthru
          _
        // Predicated region
        $region41: #{tpu_custom_call.1} parent=11 // pred_check
          %p383 = pneg %p194
        $region42: #{tpu_custom_call.1} parent=11 // pred_check_branch
          %385 = sbr.rel (%p383) target = $region44
        $region43: #{tpu_custom_call.1} parent=11 // pred_region
          %s387 = ssub.s32 1024, 1024
          %388 = vsyncadd [#allocation18], %s387
          %s389 = sshll.u32 [#allocation17], 4
          %s390 = int_to_ptr.vmem [resolvable:$true] %s389
          %395 = dma.hbm_to_vmem [thread:$0]  %s7, 1024, %s390, [#allocation18], 512, 512, 32
        $region44: #{tpu_custom_call.1} parent=11 // pred_fallthru
          _
        // Predicated region
        $region45: #{tpu_custom_call.1} parent=11 // pred_check
          %p396 = pneg %p215
        $region46: #{tpu_custom_call.1} parent=11 // pred_check_branch
          %398 = sbr.rel (%p396) target = $region48
        $region47: #{tpu_custom_call.1} parent=11 // pred_region
          %s400 = ssub.s32 24576, 24576
          %401 = vsyncadd [#allocation18], %s400
          %s402 = sshll.u32 [#allocation19], 4
          %s403 = int_to_ptr.vmem [resolvable:$true] %s402
          %408 = dma.hbm_to_vmem [thread:$0]  %s8, 24576, %s403, [#allocation18], 384, 384, 24
        $region48: #{tpu_custom_call.1} parent=11 // pred_fallthru
          _
        // Predicated region
        $region49: #{tpu_custom_call.1} parent=11 // pred_check
          %p409 = pneg %p236
        $region50: #{tpu_custom_call.1} parent=11 // pred_check_branch
          %411 = sbr.rel (%p409) target = $region52
        $region51: #{tpu_custom_call.1} parent=11 // pred_region
          %s413 = ssub.s32 512, 512
          %414 = vsyncadd [#allocation21], %s413
          %s415 = sshll.u32 [#allocation20], 4
          %s416 = int_to_ptr.vmem [resolvable:$true] %s415
          %421 = dma.hbm_to_vmem [thread:$0]  %s9, 512, %s416, [#allocation21], 128, 128, 8
        $region52: #{tpu_custom_call.1} parent=11 // pred_fallthru
          _
        // Predicated region
        $region53: #{tpu_custom_call.1} parent=11 // pred_check
          %p422 = pneg %p257
        $region54: #{tpu_custom_call.1} parent=11 // pred_check_branch
          %424 = sbr.rel (%p422) target = $region56
        $region55: #{tpu_custom_call.1} parent=11 // pred_region
          %s426 = ssub.s32 16, 16
          %427 = vsyncadd [#allocation21], %s426
          %s429 = sshll.u32 [#allocation22], 4
          %s430 = int_to_ptr.vmem [resolvable:$true] %s429
          %432 = dma.hbm_to_vmem [thread:$0]  %s10, 16, %s430, [#allocation21]
        $region56: #{tpu_custom_call.1} parent=11 // pred_fallthru
          _
      $region12: #{tpu_custom_call.1} parent=5 // pred_fallthru
        _
      %p433 = scmp.lt.s32.totalorder %s26, 2
      // Predicated region
      $region57: #{tpu_custom_call.1} parent=5 // pred_check
        %p434 = pneg %p433
      $region58: #{tpu_custom_call.1} parent=5 // pred_check_branch
        %436 = sbr.rel (%p434) target = $region60
      $region59: #{tpu_custom_call.1} parent=5 // pred_region
        _
      $region60: #{tpu_custom_call.1} parent=5 // pred_fallthru
        _
      %p437 = scmp.le.s32.totalorder 1, %s26
      %p438 = scmp.lt.s32.totalorder %s26, 3
      %p439 = pnand %p437, %p438
      %p440 = pneg %p439
      // Predicated region
      $region61: #{tpu_custom_call.1} parent=5 // pred_check
        _
      $region62: #{tpu_custom_call.1} parent=5 // pred_check_branch
        %442 = sbr.rel (%p439) target = $region64
      $region63: #{tpu_custom_call.1} parent=5 // pred_region
        %s443 = ssub.s32 %s26, 1
        // Predicated region
        $region65: #{tpu_custom_call.1} parent=63 // pred_check
          %p444 = pneg %p47
        $region66: #{tpu_custom_call.1} parent=63 // pred_check_branch
          %446 = sbr.rel (%p444) target = $region68
        $region67: #{tpu_custom_call.1} parent=63 // pred_region
          %447 = dma.done [#allocation6], 32
        $region68: #{tpu_custom_call.1} parent=63 // pred_fallthru
          _
        // Predicated region
        $region69: #{tpu_custom_call.1} parent=63 // pred_check
          %p448 = pneg %p68
        $region70: #{tpu_custom_call.1} parent=63 // pred_check_branch
          %450 = sbr.rel (%p448) target = $region72
        $region71: #{tpu_custom_call.1} parent=63 // pred_region
          %451 = dma.done [#allocation9], 32
        $region72: #{tpu_custom_call.1} parent=63 // pred_fallthru
          _
        // Predicated region
        $region73: #{tpu_custom_call.1} parent=63 // pred_check
          %p452 = pneg %p89
        $region74: #{tpu_custom_call.1} parent=63 // pred_check_branch
          %454 = sbr.rel (%p452) target = $region76
        $region75: #{tpu_custom_call.1} parent=63 // pred_region
          %455 = dma.done [#allocation9], 6144
        $region76: #{tpu_custom_call.1} parent=63 // pred_fallthru
          _
        // Predicated region
        $region77: #{tpu_custom_call.1} parent=63 // pred_check
          %p456 = pneg %p110
        $region78: #{tpu_custom_call.1} parent=63 // pred_check_branch
          %458 = sbr.rel (%p456) target = $region80
        $region79: #{tpu_custom_call.1} parent=63 // pred_region
          %459 = dma.done [#allocation12], 6144
        $region80: #{tpu_custom_call.1} parent=63 // pred_fallthru
          _
        // Predicated region
        $region81: #{tpu_custom_call.1} parent=63 // pred_check
          %p460 = pneg %p131
        $region82: #{tpu_custom_call.1} parent=63 // pred_check_branch
          %462 = sbr.rel (%p460) target = $region84
        $region83: #{tpu_custom_call.1} parent=63 // pred_region
          %463 = dma.done [#allocation12], 192
        $region84: #{tpu_custom_call.1} parent=63 // pred_fallthru
          _
        // Predicated region
        $region85: #{tpu_custom_call.1} parent=63 // pred_check
          %p464 = pneg %p152
        $region86: #{tpu_custom_call.1} parent=63 // pred_check_branch
          %466 = sbr.rel (%p464) target = $region88
        $region87: #{tpu_custom_call.1} parent=63 // pred_region
          %467 = dma.done [#allocation15], 81920
        $region88: #{tpu_custom_call.1} parent=63 // pred_fallthru
          _
        // Predicated region
        $region89: #{tpu_custom_call.1} parent=63 // pred_check
          %p468 = pneg %p173
        $region90: #{tpu_custom_call.1} parent=63 // pred_check_branch
          %470 = sbr.rel (%p468) target = $region92
        $region91: #{tpu_custom_call.1} parent=63 // pred_region
          %471 = dma.done [#allocation15], 256
        $region92: #{tpu_custom_call.1} parent=63 // pred_fallthru
          _
        // Predicated region
        $region93: #{tpu_custom_call.1} parent=63 // pred_check
          %p472 = pneg %p194
        $region94: #{tpu_custom_call.1} parent=63 // pred_check_branch
          %474 = sbr.rel (%p472) target = $region96
        $region95: #{tpu_custom_call.1} parent=63 // pred_region
          %475 = dma.done [#allocation18], 1024
        $region96: #{tpu_custom_call.1} parent=63 // pred_fallthru
          _
        // Predicated region
        $region97: #{tpu_custom_call.1} parent=63 // pred_check
          %p476 = pneg %p215
        $region98: #{tpu_custom_call.1} parent=63 // pred_check_branch
          %478 = sbr.rel (%p476) target = $region100
        $region99: #{tpu_custom_call.1} parent=63 // pred_region
          %479 = dma.done [#allocation18], 24576
        $region100: #{tpu_custom_call.1} parent=63 // pred_fallthru
          _
        // Predicated region
        $region101: #{tpu_custom_call.1} parent=63 // pred_check
          %p480 = pneg %p236
        $region102: #{tpu_custom_call.1} parent=63 // pred_check_branch
          %482 = sbr.rel (%p480) target = $region104
        $region103: #{tpu_custom_call.1} parent=63 // pred_region
          %483 = dma.done [#allocation21], 512
        $region104: #{tpu_custom_call.1} parent=63 // pred_fallthru
          _
        // Predicated region
        $region105: #{tpu_custom_call.1} parent=63 // pred_check
          %p484 = pneg %p257
        $region106: #{tpu_custom_call.1} parent=63 // pred_check_branch
          %486 = sbr.rel (%p484) target = $region108
        $region107: #{tpu_custom_call.1} parent=63 // pred_region
          %487 = dma.done [#allocation21], 16
        $region108: #{tpu_custom_call.1} parent=63 // pred_fallthru
          _
        %p488 = pneg %p47
        %p489 = pneg %p44
        %p490 = pneg %p68
        %p491 = pneg %p65
        %p492 = pneg %p89
        %p493 = pneg %p86
        %p494 = pneg %p110
        %p495 = pneg %p107
        %p496 = pneg %p131
        %p497 = pneg %p128
        %p498 = pneg %p152
        %p499 = pneg %p149
        %p500 = pneg %p173
        %p501 = pneg %p170
        %p502 = pneg %p194
        %p503 = pneg %p191
        %p504 = pneg %p215
        %p505 = pneg %p212
        %p506 = pneg %p236
        %p507 = pneg %p233
        %p508 = pneg %p257
        %p509 = pneg %p254
        %p510 = pneg %p283
        %p511 = pneg %p280
        %s512 = sand.u32 %s270, 1
        %s513 = scalar_lea.sflag [#allocation7], %s512
        %s514 = sand.u32 %s270, 1
        %s515 = smul.addr %s514, 96
        %s516 = scalar_lea.vmem [#allocation23], %s515
        %s517 = scalar_lea.vmem [#allocation5], %s31
        %v518 = vld [vmem:[%s517] sm:$0x1]
        %s519 = scalar_lea.vmem [#allocation8], %s31
        %v520 = vld [vmem:[%s519] sm:$0x1]
        %v521 = vld [vmem:[#allocation10] sm:$0xff]
        %v522 = vld [vmem:[#allocation10 + $0x8] sm:$0xff]
        %v523 = vld [vmem:[#allocation10 + $0x10] sm:$0xff]
        %v524 = vld [vmem:[#allocation10 + $0x18] sm:$0xff]
        %v525 = vld [vmem:[#allocation10 + $0x20] sm:$0xff]
        %v526 = vld [vmem:[#allocation10 + $0x28] sm:$0xff]
        %v527 = vld [vmem:[#allocation10 + $0x30] sm:$0xff]
        %v528 = vld [vmem:[#allocation10 + $0x38] sm:$0xff]
        %v529 = vld [vmem:[#allocation10 + $0x40] sm:$0xff]
        %v530 = vld [vmem:[#allocation10 + $0x48] sm:$0xff]
        %v531 = vld [vmem:[#allocation10 + $0x50] sm:$0xff]
        %v532 = vld [vmem:[#allocation10 + $0x58] sm:$0xff]
        %v533 = vld [vmem:[#allocation10 + $0x60] sm:$0xff]
        %v534 = vld [vmem:[#allocation10 + $0x68] sm:$0xff]
        %v535 = vld [vmem:[#allocation10 + $0x70] sm:$0xff]
        %v536 = vld [vmem:[#allocation10 + $0x78] sm:$0xff]
        %v537 = vld [vmem:[#allocation10 + $0x80] sm:$0xff]
        %v538 = vld [vmem:[#allocation10 + $0x88] sm:$0xff]
        %v539 = vld [vmem:[#allocation10 + $0x90] sm:$0xff]
        %v540 = vld [vmem:[#allocation10 + $0x98] sm:$0xff]
        %v541 = vld [vmem:[#allocation10 + $0xa0] sm:$0xff]
        %v542 = vld [vmem:[#allocation10 + $0xa8] sm:$0xff]
        %v543 = vld [vmem:[#allocation10 + $0xb0] sm:$0xff]
        %v544 = vld [vmem:[#allocation10 + $0xb8] sm:$0xff]
        %v545 = vld [vmem:[#allocation10 + $0xc0] sm:$0xff]
        %v546 = vld [vmem:[#allocation10 + $0xc8] sm:$0xff]
        %v547 = vld [vmem:[#allocation10 + $0xd0] sm:$0xff]
        %v548 = vld [vmem:[#allocation10 + $0xd8] sm:$0xff]
        %v549 = vld [vmem:[#allocation10 + $0xe0] sm:$0xff]
        %v550 = vld [vmem:[#allocation10 + $0xe8] sm:$0xff]
        %v551 = vld [vmem:[#allocation10 + $0xf0] sm:$0xff]
        %v552 = vld [vmem:[#allocation10 + $0xf8] sm:$0xff]
        %v553 = vld [vmem:[#allocation10 + $0x100] sm:$0xff]
        %v554 = vld [vmem:[#allocation10 + $0x108] sm:$0xff]
        %v555 = vld [vmem:[#allocation10 + $0x110] sm:$0xff]
        %v556 = vld [vmem:[#allocation10 + $0x118] sm:$0xff]
        %v557 = vld [vmem:[#allocation10 + $0x120] sm:$0xff]
        %v558 = vld [vmem:[#allocation10 + $0x128] sm:$0xff]
        %v559 = vld [vmem:[#allocation10 + $0x130] sm:$0xff]
        %v560 = vld [vmem:[#allocation10 + $0x138] sm:$0xff]
        %v561 = vld [vmem:[#allocation10 + $0x140] sm:$0xff]
        %v562 = vld [vmem:[#allocation10 + $0x148] sm:$0xff]
        %v563 = vld [vmem:[#allocation10 + $0x150] sm:$0xff]
        %v564 = vld [vmem:[#allocation10 + $0x158] sm:$0xff]
        %v565 = vld [vmem:[#allocation10 + $0x160] sm:$0xff]
        %v566 = vld [vmem:[#allocation10 + $0x168] sm:$0xff]
        %v567 = vld [vmem:[#allocation10 + $0x170] sm:$0xff]
        %v568 = vld [vmem:[#allocation10 + $0x178] sm:$0xff]
        %v569 = vld [vmem:[#allocation11] sm:$0xff]
        %v570 = vld [vmem:[#allocation11 + $0x8] sm:$0xff]
        %v571 = vld [vmem:[#allocation11 + $0x10] sm:$0xff]
        %v572 = vld [vmem:[#allocation11 + $0x18] sm:$0xff]
        %v573 = vld [vmem:[#allocation11 + $0x20] sm:$0xff]
        %v574 = vld [vmem:[#allocation11 + $0x28] sm:$0xff]
        %v575 = vld [vmem:[#allocation11 + $0x30] sm:$0xff]
        %v576 = vld [vmem:[#allocation11 + $0x38] sm:$0xff]
        %v577 = vld [vmem:[#allocation11 + $0x40] sm:$0xff]
        %v578 = vld [vmem:[#allocation11 + $0x48] sm:$0xff]
        %v579 = vld [vmem:[#allocation11 + $0x50] sm:$0xff]
        %v580 = vld [vmem:[#allocation11 + $0x58] sm:$0xff]
        %v581 = vld [vmem:[#allocation11 + $0x60] sm:$0xff]
        %v582 = vld [vmem:[#allocation11 + $0x68] sm:$0xff]
        %v583 = vld [vmem:[#allocation11 + $0x70] sm:$0xff]
        %v584 = vld [vmem:[#allocation11 + $0x78] sm:$0xff]
        %v585 = vld [vmem:[#allocation11 + $0x80] sm:$0xff]
        %v586 = vld [vmem:[#allocation11 + $0x88] sm:$0xff]
        %v587 = vld [vmem:[#allocation11 + $0x90] sm:$0xff]
        %v588 = vld [vmem:[#allocation11 + $0x98] sm:$0xff]
        %v589 = vld [vmem:[#allocation11 + $0xa0] sm:$0xff]
        %v590 = vld [vmem:[#allocation11 + $0xa8] sm:$0xff]
        %v591 = vld [vmem:[#allocation11 + $0xb0] sm:$0xff]
        %v592 = vld [vmem:[#allocation11 + $0xb8] sm:$0xff]
        %v593 = vld [vmem:[#allocation11 + $0xc0] sm:$0xff]
        %v594 = vld [vmem:[#allocation11 + $0xc8] sm:$0xff]
        %v595 = vld [vmem:[#allocation11 + $0xd0] sm:$0xff]
        %v596 = vld [vmem:[#allocation11 + $0xd8] sm:$0xff]
        %v597 = vld [vmem:[#allocation11 + $0xe0] sm:$0xff]
        %v598 = vld [vmem:[#allocation11 + $0xe8] sm:$0xff]
        %v599 = vld [vmem:[#allocation11 + $0xf0] sm:$0xff]
        %v600 = vld [vmem:[#allocation11 + $0xf8] sm:$0xff]
        %v601 = vld [vmem:[#allocation11 + $0x100] sm:$0xff]
        %v602 = vld [vmem:[#allocation11 + $0x108] sm:$0xff]
        %v603 = vld [vmem:[#allocation11 + $0x110] sm:$0xff]
        %v604 = vld [vmem:[#allocation11 + $0x118] sm:$0xff]
        %v605 = vld [vmem:[#allocation11 + $0x120] sm:$0xff]
        %v606 = vld [vmem:[#allocation11 + $0x128] sm:$0xff]
        %v607 = vld [vmem:[#allocation11 + $0x130] sm:$0xff]
        %v608 = vld [vmem:[#allocation11 + $0x138] sm:$0xff]
        %v609 = vld [vmem:[#allocation11 + $0x140] sm:$0xff]
        %v610 = vld [vmem:[#allocation11 + $0x148] sm:$0xff]
        %v611 = vld [vmem:[#allocation11 + $0x150] sm:$0xff]
        %v612 = vld [vmem:[#allocation11 + $0x158] sm:$0xff]
        %v613 = vld [vmem:[#allocation11 + $0x160] sm:$0xff]
        %v614 = vld [vmem:[#allocation11 + $0x168] sm:$0xff]
        %v615 = vld [vmem:[#allocation11 + $0x170] sm:$0xff]
        %v616 = vld [vmem:[#allocation11 + $0x178] sm:$0xff]
        %vm617 = vcmask 261120
        %v619 = vsel %vm617, %v520, 0
        %621 = vmatprep.subr.mxu0 %v570
        %622 = vmatpush1.msra.mxu0 %v569
        %623 = vmatprep.subr.mxu0 %v582
        %624 = vmatpush1.msra.mxu0 %v581
        %625 = vmatprep.subr.mxu0 %v594
        %626 = vmatpush1.msra.mxu0 %v593
        %627 = vmatprep.subr.mxu0 %v606
        %628 = vmatpush1.msra.mxu0 %v605
        %629 = vmatprep.subr.mxu0 0.0
        %630 = vmatpush1.msra.mxu0 0.0
        %631 = vmatprep.subr.mxu0 0.0
        %632 = vmatpush1.msra.mxu0 0.0
        %633 = vmatprep.subr.mxu0 0.0
        %634 = vmatpush1.msra.mxu0 0.0
        %635 = vmatprep.subr.mxu0 0.0
        %636 = vmatpush1.msra.mxu0 0.0
        %637 = vmatprep.subr.mxu0 0.0
        %638 = vmatpush1.msra.mxu0 0.0
        %639 = vmatprep.subr.mxu0 0.0
        %640 = vmatpush1.msra.mxu0 0.0
        %641 = vmatprep.subr.mxu0 0.0
        %642 = vmatpush1.msra.mxu0 0.0
        %643 = vmatprep.subr.mxu0 0.0
        %644 = vmatpush1.msra.mxu0 0.0
        %645 = vmatprep.subr.mxu0 0.0
        %646 = vmatpush1.msra.mxu0 0.0
        %647 = vmatprep.subr.mxu0 0.0
        %648 = vmatpush1.msra.mxu0 0.0
        %649 = vmatprep.subr.mxu0 0.0
        %650 = vmatpush1.msra.mxu0 0.0
        %651 = vmatprep.subr.mxu0 0.0
        %652 = vmatpush1.msra.mxu0 0.0
        %653 = vmatprep.subr.mxu0 0.0
        %654 = vmatpush1.msra.mxu0 0.0
        %655 = vmatprep.subr.mxu0 0.0
        %656 = vmatpush1.msra.mxu0 0.0
        %657 = vmatprep.subr.mxu0 0.0
        %658 = vmatpush1.msra.mxu0 0.0
        %659 = vmatprep.subr.mxu0 0.0
        %660 = vmatpush1.msra.mxu0 0.0
        %661 = vmatprep.subr.mxu0 0.0
        %662 = vmatpush1.msra.mxu0 0.0
        %663 = vmatprep.subr.mxu0 0.0
        %664 = vmatpush1.msra.mxu0 0.0
        %665 = vmatprep.subr.mxu0 0.0
        %666 = vmatpush1.msra.mxu0 0.0
        %667 = vmatprep.subr.mxu0 0.0
        %668 = vmatpush1.msra.mxu0 0.0
        %669 = vmatprep.subr.mxu0 0.0
        %670 = vmatpush1.msra.mxu0 0.0
        %671 = vmatprep.subr.mxu0 0.0
        %672 = vmatpush1.msra.mxu0 0.0
        %673 = vmatprep.subr.mxu0 0.0
        %674 = vmatpush1.msra.mxu0 0.0
        %675 = vmatprep.subr.mxu0 0.0
        %676 = vmatpush1.msra.mxu0 0.0
        %677 = vmatprep.subr.mxu0 0.0
        %678 = vmatpush1.msra.mxu0 0.0
        %679 = vmatprep.subr.mxu0 0.0
        %680 = vmatpush1.msra.mxu0 0.0
        %681 = vmatprep.subr.mxu0 0.0
        %682 = vmatpush1.msra.mxu0 0.0
        %683 = vmatprep.subr.mxu0 0.0
        %684 = vmatpush1.msra.mxu0 0.0
        %685 = vmatprep.mubr.f32.mxu0 0.0
        %686 = vmatmul.mubr.f32.gmra.mrb[0].mxu0 %v619
        %v687 = vpop.f32.mrb[0].mxu0
        %v688 = vadd.f32 0.0, %v687
        %v689 = vpop.f32.mrb[0].mxu0
        %v690 = vadd.f32 0.0, %v689
        %691 = vdwg.mxu0
        %692 = vmatprep.subr.mxu0 %v572
        %693 = vmatpush1.msra.mxu0 %v571
        %694 = vmatprep.subr.mxu0 %v584
        %695 = vmatpush1.msra.mxu0 %v583
        %696 = vmatprep.subr.mxu0 %v596
        %697 = vmatpush1.msra.mxu0 %v595
        %698 = vmatprep.subr.mxu0 %v608
        %699 = vmatpush1.msra.mxu0 %v607
        %700 = vmatprep.subr.mxu0 0.0
        %701 = vmatpush1.msra.mxu0 0.0
        %702 = vmatprep.subr.mxu0 0.0
        %703 = vmatpush1.msra.mxu0 0.0
        %704 = vmatprep.subr.mxu0 0.0
        %705 = vmatpush1.msra.mxu0 0.0
        %706 = vmatprep.subr.mxu0 0.0
        %707 = vmatpush1.msra.mxu0 0.0
        %708 = vmatprep.subr.mxu0 0.0
        %709 = vmatpush1.msra.mxu0 0.0
        %710 = vmatprep.subr.mxu0 0.0
        %711 = vmatpush1.msra.mxu0 0.0
        %712 = vmatprep.subr.mxu0 0.0
        %713 = vmatpush1.msra.mxu0 0.0
        %714 = vmatprep.subr.mxu0 0.0
        %715 = vmatpush1.msra.mxu0 0.0
        %716 = vmatprep.subr.mxu0 0.0
        %717 = vmatpush1.msra.mxu0 0.0
        %718 = vmatprep.subr.mxu0 0.0
        %719 = vmatpush1.msra.mxu0 0.0
        %720 = vmatprep.subr.mxu0 0.0
        %721 = vmatpush1.msra.mxu0 0.0
        %722 = vmatprep.subr.mxu0 0.0
        %723 = vmatpush1.msra.mxu0 0.0
        %724 = vmatprep.subr.mxu0 0.0
        %725 = vmatpush1.msra.mxu0 0.0
        %726 = vmatprep.subr.mxu0 0.0
        %727 = vmatpush1.msra.mxu0 0.0
        %728 = vmatprep.subr.mxu0 0.0
        %729 = vmatpush1.msra.mxu0 0.0
        %730 = vmatprep.subr.mxu0 0.0
        %731 = vmatpush1.msra.mxu0 0.0
        %732 = vmatprep.subr.mxu0 0.0
        %733 = vmatpush1.msra.mxu0 0.0
        %734 = vmatprep.subr.mxu0 0.0
        %735 = vmatpush1.msra.mxu0 0.0
        %736 = vmatprep.subr.mxu0 0.0
        %737 = vmatpush1.msra.mxu0 0.0
        %738 = vmatprep.subr.mxu0 0.0
        %739 = vmatpush1.msra.mxu0 0.0
        %740 = vmatprep.subr.mxu0 0.0
        %741 = vmatpush1.msra.mxu0 0.0
        %742 = vmatprep.subr.mxu0 0.0
        %743 = vmatpush1.msra.mxu0 0.0
        %744 = vmatprep.subr.mxu0 0.0
        %745 = vmatpush1.msra.mxu0 0.0
        %746 = vmatprep.subr.mxu0 0.0
        %747 = vmatpush1.msra.mxu0 0.0
        %748 = vmatprep.subr.mxu0 0.0
        %749 = vmatpush1.msra.mxu0 0.0
        %750 = vmatprep.subr.mxu0 0.0
        %751 = vmatpush1.msra.mxu0 0.0
        %752 = vmatprep.subr.mxu0 0.0
        %753 = vmatpush1.msra.mxu0 0.0
        %754 = vmatprep.subr.mxu0 0.0
        %755 = vmatpush1.msra.mxu0 0.0
        %756 = vmatprep.mubr.f32.mxu0 0.0
        %757 = vmatmul.mubr.f32.gmra.mrb[0].mxu0 %v619
        %v758 = vpop.f32.mrb[0].mxu0
        %v759 = vadd.f32 0.0, %v758
        %v760 = vpop.f32.mrb[0].mxu0
        %v761 = vadd.f32 0.0, %v760
        %762 = vdwg.mxu0
        %763 = vmatprep.subr.mxu0 %v574
        %764 = vmatpush1.msra.mxu0 %v573
        %765 = vmatprep.subr.mxu0 %v586
        %766 = vmatpush1.msra.mxu0 %v585
        %767 = vmatprep.subr.mxu0 %v598
        %768 = vmatpush1.msra.mxu0 %v597
        %769 = vmatprep.subr.mxu0 %v610
        %770 = vmatpush1.msra.mxu0 %v609
        %771 = vmatprep.subr.mxu0 0.0
        %772 = vmatpush1.msra.mxu0 0.0
        %773 = vmatprep.subr.mxu0 0.0
        %774 = vmatpush1.msra.mxu0 0.0
        %775 = vmatprep.subr.mxu0 0.0
        %776 = vmatpush1.msra.mxu0 0.0
        %777 = vmatprep.subr.mxu0 0.0
        %778 = vmatpush1.msra.mxu0 0.0
        %779 = vmatprep.subr.mxu0 0.0
        %780 = vmatpush1.msra.mxu0 0.0
        %781 = vmatprep.subr.mxu0 0.0
        %782 = vmatpush1.msra.mxu0 0.0
        %783 = vmatprep.subr.mxu0 0.0
        %784 = vmatpush1.msra.mxu0 0.0
        %785 = vmatprep.subr.mxu0 0.0
        %786 = vmatpush1.msra.mxu0 0.0
        %787 = vmatprep.subr.mxu0 0.0
        %788 = vmatpush1.msra.mxu0 0.0
        %789 = vmatprep.subr.mxu0 0.0
        %790 = vmatpush1.msra.mxu0 0.0
        %791 = vmatprep.subr.mxu0 0.0
        %792 = vmatpush1.msra.mxu0 0.0
        %793 = vmatprep.subr.mxu0 0.0
        %794 = vmatpush1.msra.mxu0 0.0
        %795 = vmatprep.subr.mxu0 0.0
        %796 = vmatpush1.msra.mxu0 0.0
        %797 = vmatprep.subr.mxu0 0.0
        %798 = vmatpush1.msra.mxu0 0.0
        %799 = vmatprep.subr.mxu0 0.0
        %800 = vmatpush1.msra.mxu0 0.0
        %801 = vmatprep.subr.mxu0 0.0
        %802 = vmatpush1.msra.mxu0 0.0
        %803 = vmatprep.subr.mxu0 0.0
        %804 = vmatpush1.msra.mxu0 0.0
        %805 = vmatprep.subr.mxu0 0.0
        %806 = vmatpush1.msra.mxu0 0.0
        %807 = vmatprep.subr.mxu0 0.0
        %808 = vmatpush1.msra.mxu0 0.0
        %809 = vmatprep.subr.mxu0 0.0
        %810 = vmatpush1.msra.mxu0 0.0
        %811 = vmatprep.subr.mxu0 0.0
        %812 = vmatpush1.msra.mxu0 0.0
        %813 = vmatprep.subr.mxu0 0.0
        %814 = vmatpush1.msra.mxu0 0.0
        %815 = vmatprep.subr.mxu0 0.0
        %816 = vmatpush1.msra.mxu0 0.0
        %817 = vmatprep.subr.mxu0 0.0
        %818 = vmatpush1.msra.mxu0 0.0
        %819 = vmatprep.subr.mxu0 0.0
        %820 = vmatpush1.msra.mxu0 0.0
        %821 = vmatprep.subr.mxu0 0.0
        %822 = vmatpush1.msra.mxu0 0.0
        %823 = vmatprep.subr.mxu0 0.0
        %824 = vmatpush1.msra.mxu0 0.0
        %825 = vmatprep.subr.mxu0 0.0
        %826 = vmatpush1.msra.mxu0 0.0
        %827 = vmatprep.mubr.f32.mxu0 0.0
        %828 = vmatmul.mubr.f32.gmra.mrb[0].mxu0 %v619
        %v829 = vpop.f32.mrb[0].mxu0
        %v830 = vadd.f32 0.0, %v829
        %v831 = vpop.f32.mrb[0].mxu0
        %v832 = vadd.f32 0.0, %v831
        %833 = vdwg.mxu0
        %834 = vmatprep.subr.mxu0 %v576
        %835 = vmatpush1.msra.mxu0 %v575
        %836 = vmatprep.subr.mxu0 %v588
        %837 = vmatpush1.msra.mxu0 %v587
        %838 = vmatprep.subr.mxu0 %v600
        %839 = vmatpush1.msra.mxu0 %v599
        %840 = vmatprep.subr.mxu0 %v612
        %841 = vmatpush1.msra.mxu0 %v611
        %842 = vmatprep.subr.mxu0 0.0
        %843 = vmatpush1.msra.mxu0 0.0
        %844 = vmatprep.subr.mxu0 0.0
        %845 = vmatpush1.msra.mxu0 0.0
        %846 = vmatprep.subr.mxu0 0.0
        %847 = vmatpush1.msra.mxu0 0.0
        %848 = vmatprep.subr.mxu0 0.0
        %849 = vmatpush1.msra.mxu0 0.0
        %850 = vmatprep.subr.mxu0 0.0
        %851 = vmatpush1.msra.mxu0 0.0
        %852 = vmatprep.subr.mxu0 0.0
        %853 = vmatpush1.msra.mxu0 0.0
        %854 = vmatprep.subr.mxu0 0.0
        %855 = vmatpush1.msra.mxu0 0.0
        %856 = vmatprep.subr.mxu0 0.0
        %857 = vmatpush1.msra.mxu0 0.0
        %858 = vmatprep.subr.mxu0 0.0
        %859 = vmatpush1.msra.mxu0 0.0
        %860 = vmatprep.subr.mxu0 0.0
        %861 = vmatpush1.msra.mxu0 0.0
        %862 = vmatprep.subr.mxu0 0.0
        %863 = vmatpush1.msra.mxu0 0.0
        %864 = vmatprep.subr.mxu0 0.0
        %865 = vmatpush1.msra.mxu0 0.0
        %866 = vmatprep.subr.mxu0 0.0
        %867 = vmatpush1.msra.mxu0 0.0
        %868 = vmatprep.subr.mxu0 0.0
        %869 = vmatpush1.msra.mxu0 0.0
        %870 = vmatprep.subr.mxu0 0.0
        %871 = vmatpush1.msra.mxu0 0.0
        %872 = vmatprep.subr.mxu0 0.0
        %873 = vmatpush1.msra.mxu0 0.0
        %874 = vmatprep.subr.mxu0 0.0
        %875 = vmatpush1.msra.mxu0 0.0
        %876 = vmatprep.subr.mxu0 0.0
        %877 = vmatpush1.msra.mxu0 0.0
        %878 = vmatprep.subr.mxu0 0.0
        %879 = vmatpush1.msra.mxu0 0.0
        %880 = vmatprep.subr.mxu0 0.0
        %881 = vmatpush1.msra.mxu0 0.0
        %882 = vmatprep.subr.mxu0 0.0
        %883 = vmatpush1.msra.mxu0 0.0
        %884 = vmatprep.subr.mxu0 0.0
        %885 = vmatpush1.msra.mxu0 0.0
        %886 = vmatprep.subr.mxu0 0.0
        %887 = vmatpush1.msra.mxu0 0.0
        %888 = vmatprep.subr.mxu0 0.0
        %889 = vmatpush1.msra.mxu0 0.0
        %890 = vmatprep.subr.mxu0 0.0
        %891 = vmatpush1.msra.mxu0 0.0
        %892 = vmatprep.subr.mxu0 0.0
        %893 = vmatpush1.msra.mxu0 0.0
        %894 = vmatprep.subr.mxu0 0.0
        %895 = vmatpush1.msra.mxu0 0.0
        %896 = vmatprep.subr.mxu0 0.0
        %897 = vmatpush1.msra.mxu0 0.0
        %898 = vmatprep.mubr.f32.mxu0 0.0
        %899 = vmatmul.mubr.f32.gmra.mrb[0].mxu0 %v619
        %v900 = vpop.f32.mrb[0].mxu0
        %v901 = vadd.f32 0.0, %v900
        %v902 = vpop.f32.mrb[0].mxu0
        %v903 = vadd.f32 0.0, %v902
        %904 = vdwg.mxu0
        %905 = vmatprep.subr.mxu0 %v578
        %906 = vmatpush1.msra.mxu0 %v577
        %907 = vmatprep.subr.mxu0 %v590
        %908 = vmatpush1.msra.mxu0 %v589
        %909 = vmatprep.subr.mxu0 %v602
        %910 = vmatpush1.msra.mxu0 %v601
        %911 = vmatprep.subr.mxu0 %v614
        %912 = vmatpush1.msra.mxu0 %v613
        %913 = vmatprep.subr.mxu0 0.0
        %914 = vmatpush1.msra.mxu0 0.0
        %915 = vmatprep.subr.mxu0 0.0
        %916 = vmatpush1.msra.mxu0 0.0
        %917 = vmatprep.subr.mxu0 0.0
        %918 = vmatpush1.msra.mxu0 0.0
        %919 = vmatprep.subr.mxu0 0.0
        %920 = vmatpush1.msra.mxu0 0.0
        %921 = vmatprep.subr.mxu0 0.0
        %922 = vmatpush1.msra.mxu0 0.0
        %923 = vmatprep.subr.mxu0 0.0
        %924 = vmatpush1.msra.mxu0 0.0
        %925 = vmatprep.subr.mxu0 0.0
        %926 = vmatpush1.msra.mxu0 0.0
        %927 = vmatprep.subr.mxu0 0.0
        %928 = vmatpush1.msra.mxu0 0.0
        %929 = vmatprep.subr.mxu0 0.0
        %930 = vmatpush1.msra.mxu0 0.0
        %931 = vmatprep.subr.mxu0 0.0
        %932 = vmatpush1.msra.mxu0 0.0
        %933 = vmatprep.subr.mxu0 0.0
        %934 = vmatpush1.msra.mxu0 0.0
        %935 = vmatprep.subr.mxu0 0.0
        %936 = vmatpush1.msra.mxu0 0.0
        %937 = vmatprep.subr.mxu0 0.0
        %938 = vmatpush1.msra.mxu0 0.0
        %939 = vmatprep.subr.mxu0 0.0
        %940 = vmatpush1.msra.mxu0 0.0
        %941 = vmatprep.subr.mxu0 0.0
        %942 = vmatpush1.msra.mxu0 0.0
        %943 = vmatprep.subr.mxu0 0.0
        %944 = vmatpush1.msra.mxu0 0.0
        %945 = vmatprep.subr.mxu0 0.0
        %946 = vmatpush1.msra.mxu0 0.0
        %947 = vmatprep.subr.mxu0 0.0
        %948 = vmatpush1.msra.mxu0 0.0
        %949 = vmatprep.subr.mxu0 0.0
        %950 = vmatpush1.msra.mxu0 0.0
        %951 = vmatprep.subr.mxu0 0.0
        %952 = vmatpush1.msra.mxu0 0.0
        %953 = vmatprep.subr.mxu0 0.0
        %954 = vmatpush1.msra.mxu0 0.0
        %955 = vmatprep.subr.mxu0 0.0
        %956 = vmatpush1.msra.mxu0 0.0
        %957 = vmatprep.subr.mxu0 0.0
        %958 = vmatpush1.msra.mxu0 0.0
        %959 = vmatprep.subr.mxu0 0.0
        %960 = vmatpush1.msra.mxu0 0.0
        %961 = vmatprep.subr.mxu0 0.0
        %962 = vmatpush1.msra.mxu0 0.0
        %963 = vmatprep.subr.mxu0 0.0
        %964 = vmatpush1.msra.mxu0 0.0
        %965 = vmatprep.subr.mxu0 0.0
        %966 = vmatpush1.msra.mxu0 0.0
        %967 = vmatprep.subr.mxu0 0.0
        %968 = vmatpush1.msra.mxu0 0.0
        %969 = vmatprep.mubr.f32.mxu0 0.0
        %970 = vmatmul.mubr.f32.gmra.mrb[0].mxu0 %v619
        %v971 = vpop.f32.mrb[0].mxu0
        %v972 = vadd.f32 0.0, %v971
        %v973 = vpop.f32.mrb[0].mxu0
        %v974 = vadd.f32 0.0, %v973
        %975 = vdwg.mxu0
        %976 = vmatprep.subr.mxu0 %v580
        %977 = vmatpush1.msra.mxu0 %v579
        %978 = vmatprep.subr.mxu0 %v592
        %979 = vmatpush1.msra.mxu0 %v591
        %980 = vmatprep.subr.mxu0 %v604
        %981 = vmatpush1.msra.mxu0 %v603
        %982 = vmatprep.subr.mxu0 %v616
        %983 = vmatpush1.msra.mxu0 %v615
        %984 = vmatprep.subr.mxu0 0.0
        %985 = vmatpush1.msra.mxu0 0.0
        %986 = vmatprep.subr.mxu0 0.0
        %987 = vmatpush1.msra.mxu0 0.0
        %988 = vmatprep.subr.mxu0 0.0
        %989 = vmatpush1.msra.mxu0 0.0
        %990 = vmatprep.subr.mxu0 0.0
        %991 = vmatpush1.msra.mxu0 0.0
        %992 = vmatprep.subr.mxu0 0.0
        %993 = vmatpush1.msra.mxu0 0.0
        %994 = vmatprep.subr.mxu0 0.0
        %995 = vmatpush1.msra.mxu0 0.0
        %996 = vmatprep.subr.mxu0 0.0
        %997 = vmatpush1.msra.mxu0 0.0
        %998 = vmatprep.subr.mxu0 0.0
        %999 = vmatpush1.msra.mxu0 0.0
        %1000 = vmatprep.subr.mxu0 0.0
        %1001 = vmatpush1.msra.mxu0 0.0
        %1002 = vmatprep.subr.mxu0 0.0
        %1003 = vmatpush1.msra.mxu0 0.0
        %1004 = vmatprep.subr.mxu0 0.0
        %1005 = vmatpush1.msra.mxu0 0.0
        %1006 = vmatprep.subr.mxu0 0.0
        %1007 = vmatpush1.msra.mxu0 0.0
        %1008 = vmatprep.subr.mxu0 0.0
        %1009 = vmatpush1.msra.mxu0 0.0
        %1010 = vmatprep.subr.mxu0 0.0
        %1011 = vmatpush1.msra.mxu0 0.0
        %1012 = vmatprep.subr.mxu0 0.0
        %1013 = vmatpush1.msra.mxu0 0.0
        %1014 = vmatprep.subr.mxu0 0.0
        %1015 = vmatpush1.msra.mxu0 0.0
        %1016 = vmatprep.subr.mxu0 0.0
        %1017 = vmatpush1.msra.mxu0 0.0
        %1018 = vmatprep.subr.mxu0 0.0
        %1019 = vmatpush1.msra.mxu0 0.0
        %1020 = vmatprep.subr.mxu0 0.0
        %1021 = vmatpush1.msra.mxu0 0.0
        %1022 = vmatprep.subr.mxu0 0.0
        %1023 = vmatpush1.msra.mxu0 0.0
        %1024 = vmatprep.subr.mxu0 0.0
        %1025 = vmatpush1.msra.mxu0 0.0
        %1026 = vmatprep.subr.mxu0 0.0
        %1027 = vmatpush1.msra.mxu0 0.0
        %1028 = vmatprep.subr.mxu0 0.0
        %1029 = vmatpush1.msra.mxu0 0.0
        %1030 = vmatprep.subr.mxu0 0.0
        %1031 = vmatpush1.msra.mxu0 0.0
        %1032 = vmatprep.subr.mxu0 0.0
        %1033 = vmatpush1.msra.mxu0 0.0
        %1034 = vmatprep.subr.mxu0 0.0
        %1035 = vmatpush1.msra.mxu0 0.0
        %1036 = vmatprep.subr.mxu0 0.0
        %1037 = vmatpush1.msra.mxu0 0.0
        %1038 = vmatprep.subr.mxu0 0.0
        %1039 = vmatpush1.msra.mxu0 0.0
        %1040 = vmatprep.mubr.f32.mxu0 0.0
        %1041 = vmatmul.mubr.f32.gmra.mrb[0].mxu0 %v619
        %v1042 = vpop.f32.mrb[0].mxu0
        %v1043 = vadd.f32 0.0, %v1042
        %v1044 = vpop.f32.mrb[0].mxu0
        %v1045 = vadd.f32 0.0, %v1044
        %1046 = vdwg.mxu0
        %v1048 = vsel %vm617, %v518, 0
        %1050 = vmatprep.subr.mxu0 %v522
        %1051 = vmatpush1.msra.mxu0 %v521
        %1052 = vmatprep.subr.mxu0 %v534
        %1053 = vmatpush1.msra.mxu0 %v533
        %1054 = vmatprep.subr.mxu0 %v546
        %1055 = vmatpush1.msra.mxu0 %v545
        %1056 = vmatprep.subr.mxu0 %v558
        %1057 = vmatpush1.msra.mxu0 %v557
        %1058 = vmatprep.subr.mxu0 0.0
        %1059 = vmatpush1.msra.mxu0 0.0
        %1060 = vmatprep.subr.mxu0 0.0
        %1061 = vmatpush1.msra.mxu0 0.0
        %1062 = vmatprep.subr.mxu0 0.0
        %1063 = vmatpush1.msra.mxu0 0.0
        %1064 = vmatprep.subr.mxu0 0.0
        %1065 = vmatpush1.msra.mxu0 0.0
        %1066 = vmatprep.subr.mxu0 0.0
        %1067 = vmatpush1.msra.mxu0 0.0
        %1068 = vmatprep.subr.mxu0 0.0
        %1069 = vmatpush1.msra.mxu0 0.0
        %1070 = vmatprep.subr.mxu0 0.0
        %1071 = vmatpush1.msra.mxu0 0.0
        %1072 = vmatprep.subr.mxu0 0.0
        %1073 = vmatpush1.msra.mxu0 0.0
        %1074 = vmatprep.subr.mxu0 0.0
        %1075 = vmatpush1.msra.mxu0 0.0
        %1076 = vmatprep.subr.mxu0 0.0
        %1077 = vmatpush1.msra.mxu0 0.0
        %1078 = vmatprep.subr.mxu0 0.0
        %1079 = vmatpush1.msra.mxu0 0.0
        %1080 = vmatprep.subr.mxu0 0.0
        %1081 = vmatpush1.msra.mxu0 0.0
        %1082 = vmatprep.subr.mxu0 0.0
        %1083 = vmatpush1.msra.mxu0 0.0
        %1084 = vmatprep.subr.mxu0 0.0
        %1085 = vmatpush1.msra.mxu0 0.0
        %1086 = vmatprep.subr.mxu0 0.0
        %1087 = vmatpush1.msra.mxu0 0.0
        %1088 = vmatprep.subr.mxu0 0.0
        %1089 = vmatpush1.msra.mxu0 0.0
        %1090 = vmatprep.subr.mxu0 0.0
        %1091 = vmatpush1.msra.mxu0 0.0
        %1092 = vmatprep.subr.mxu0 0.0
        %1093 = vmatpush1.msra.mxu0 0.0
        %1094 = vmatprep.subr.mxu0 0.0
        %1095 = vmatpush1.msra.mxu0 0.0
        %1096 = vmatprep.subr.mxu0 0.0
        %1097 = vmatpush1.msra.mxu0 0.0
        %1098 = vmatprep.subr.mxu0 0.0
        %1099 = vmatpush1.msra.mxu0 0.0
        %1100 = vmatprep.subr.mxu0 0.0
        %1101 = vmatpush1.msra.mxu0 0.0
        %1102 = vmatprep.subr.mxu0 0.0
        %1103 = vmatpush1.msra.mxu0 0.0
        %1104 = vmatprep.subr.mxu0 0.0
        %1105 = vmatpush1.msra.mxu0 0.0
        %1106 = vmatprep.subr.mxu0 0.0
        %1107 = vmatpush1.msra.mxu0 0.0
        %1108 = vmatprep.subr.mxu0 0.0
        %1109 = vmatpush1.msra.mxu0 0.0
        %1110 = vmatprep.subr.mxu0 0.0
        %1111 = vmatpush1.msra.mxu0 0.0
        %1112 = vmatprep.subr.mxu0 0.0
        %1113 = vmatpush1.msra.mxu0 0.0
        %1114 = vmatprep.mubr.f32.mxu0 0.0
        %1115 = vmatmul.mubr.f32.gmra.mrb[0].mxu0 %v1048
        %v1116 = vpop.f32.mrb[0].mxu0
        %v1117 = vadd.f32 %v688, %v1116
        %v1118 = vpop.f32.mrb[0].mxu0
        %v1119 = vadd.f32 %v690, %v1118
        %1120 = vdwg.mxu0
        %1121 = vmatprep.subr.mxu0 %v524
        %1122 = vmatpush1.msra.mxu0 %v523
        %1123 = vmatprep.subr.mxu0 %v536
        %1124 = vmatpush1.msra.mxu0 %v535
        %1125 = vmatprep.subr.mxu0 %v548
        %1126 = vmatpush1.msra.mxu0 %v547
        %1127 = vmatprep.subr.mxu0 %v560
        %1128 = vmatpush1.msra.mxu0 %v559
        %1129 = vmatprep.subr.mxu0 0.0
        %1130 = vmatpush1.msra.mxu0 0.0
        %1131 = vmatprep.subr.mxu0 0.0
        %1132 = vmatpush1.msra.mxu0 0.0
        %1133 = vmatprep.subr.mxu0 0.0
        %1134 = vmatpush1.msra.mxu0 0.0
        %1135 = vmatprep.subr.mxu0 0.0
        %1136 = vmatpush1.msra.mxu0 0.0
        %1137 = vmatprep.subr.mxu0 0.0
        %1138 = vmatpush1.msra.mxu0 0.0
        %1139 = vmatprep.subr.mxu0 0.0
        %1140 = vmatpush1.msra.mxu0 0.0
        %1141 = vmatprep.subr.mxu0 0.0
        %1142 = vmatpush1.msra.mxu0 0.0
        %1143 = vmatprep.subr.mxu0 0.0
        %1144 = vmatpush1.msra.mxu0 0.0
        %1145 = vmatprep.subr.mxu0 0.0
        %1146 = vmatpush1.msra.mxu0 0.0
        %1147 = vmatprep.subr.mxu0 0.0
        %1148 = vmatpush1.msra.mxu0 0.0
        %1149 = vmatprep.subr.mxu0 0.0
        %1150 = vmatpush1.msra.mxu0 0.0
        %1151 = vmatprep.subr.mxu0 0.0
        %1152 = vmatpush1.msra.mxu0 0.0
        %1153 = vmatprep.subr.mxu0 0.0
        %1154 = vmatpush1.msra.mxu0 0.0
        %1155 = vmatprep.subr.mxu0 0.0
        %1156 = vmatpush1.msra.mxu0 0.0
        %1157 = vmatprep.subr.mxu0 0.0
        %1158 = vmatpush1.msra.mxu0 0.0
        %1159 = vmatprep.subr.mxu0 0.0
        %1160 = vmatpush1.msra.mxu0 0.0
        %1161 = vmatprep.subr.mxu0 0.0
        %1162 = vmatpush1.msra.mxu0 0.0
        %1163 = vmatprep.subr.mxu0 0.0
        %1164 = vmatpush1.msra.mxu0 0.0
        %1165 = vmatprep.subr.mxu0 0.0
        %1166 = vmatpush1.msra.mxu0 0.0
        %1167 = vmatprep.subr.mxu0 0.0
        %1168 = vmatpush1.msra.mxu0 0.0
        %1169 = vmatprep.subr.mxu0 0.0
        %1170 = vmatpush1.msra.mxu0 0.0
        %1171 = vmatprep.subr.mxu0 0.0
        %1172 = vmatpush1.msra.mxu0 0.0
        %1173 = vmatprep.subr.mxu0 0.0
        %1174 = vmatpush1.msra.mxu0 0.0
        %1175 = vmatprep.subr.mxu0 0.0
        %1176 = vmatpush1.msra.mxu0 0.0
        %1177 = vmatprep.subr.mxu0 0.0
        %1178 = vmatpush1.msra.mxu0 0.0
        %1179 = vmatprep.subr.mxu0 0.0
        %1180 = vmatpush1.msra.mxu0 0.0
        %1181 = vmatprep.subr.mxu0 0.0
        %1182 = vmatpush1.msra.mxu0 0.0
        %1183 = vmatprep.subr.mxu0 0.0
        %1184 = vmatpush1.msra.mxu0 0.0
        %1185 = vmatprep.mubr.f32.mxu0 0.0
        %1186 = vmatmul.mubr.f32.gmra.mrb[0].mxu0 %v1048
        %v1187 = vpop.f32.mrb[0].mxu0
        %v1188 = vadd.f32 %v759, %v1187
        %v1189 = vpop.f32.mrb[0].mxu0
        %v1190 = vadd.f32 %v761, %v1189
        %1191 = vdwg.mxu0
        %1192 = vmatprep.subr.mxu0 %v526
        %1193 = vmatpush1.msra.mxu0 %v525
        %1194 = vmatprep.subr.mxu0 %v538
        %1195 = vmatpush1.msra.mxu0 %v537
        %1196 = vmatprep.subr.mxu0 %v550
        %1197 = vmatpush1.msra.mxu0 %v549
        %1198 = vmatprep.subr.mxu0 %v562
        %1199 = vmatpush1.msra.mxu0 %v561
        %1200 = vmatprep.subr.mxu0 0.0
        %1201 = vmatpush1.msra.mxu0 0.0
        %1202 = vmatprep.subr.mxu0 0.0
        %1203 = vmatpush1.msra.mxu0 0.0
        %1204 = vmatprep.subr.mxu0 0.0
        %1205 = vmatpush1.msra.mxu0 0.0
        %1206 = vmatprep.subr.mxu0 0.0
        %1207 = vmatpush1.msra.mxu0 0.0
        %1208 = vmatprep.subr.mxu0 0.0
        %1209 = vmatpush1.msra.mxu0 0.0
        %1210 = vmatprep.subr.mxu0 0.0
        %1211 = vmatpush1.msra.mxu0 0.0
        %1212 = vmatprep.subr.mxu0 0.0
        %1213 = vmatpush1.msra.mxu0 0.0
        %1214 = vmatprep.subr.mxu0 0.0
        %1215 = vmatpush1.msra.mxu0 0.0
        %1216 = vmatprep.subr.mxu0 0.0
        %1217 = vmatpush1.msra.mxu0 0.0
        %1218 = vmatprep.subr.mxu0 0.0
        %1219 = vmatpush1.msra.mxu0 0.0
        %1220 = vmatprep.subr.mxu0 0.0
        %1221 = vmatpush1.msra.mxu0 0.0
        %1222 = vmatprep.subr.mxu0 0.0
        %1223 = vmatpush1.msra.mxu0 0.0
        %1224 = vmatprep.subr.mxu0 0.0
        %1225 = vmatpush1.msra.mxu0 0.0
        %1226 = vmatprep.subr.mxu0 0.0
        %1227 = vmatpush1.msra.mxu0 0.0
        %1228 = vmatprep.subr.mxu0 0.0
        %1229 = vmatpush1.msra.mxu0 0.0
        %1230 = vmatprep.subr.mxu0 0.0
        %1231 = vmatpush1.msra.mxu0 0.0
        %1232 = vmatprep.subr.mxu0 0.0
        %1233 = vmatpush1.msra.mxu0 0.0
        %1234 = vmatprep.subr.mxu0 0.0
        %1235 = vmatpush1.msra.mxu0 0.0
        %1236 = vmatprep.subr.mxu0 0.0
        %1237 = vmatpush1.msra.mxu0 0.0
        %1238 = vmatprep.subr.mxu0 0.0
        %1239 = vmatpush1.msra.mxu0 0.0
        %1240 = vmatprep.subr.mxu0 0.0
        %1241 = vmatpush1.msra.mxu0 0.0
        %1242 = vmatprep.subr.mxu0 0.0
        %1243 = vmatpush1.msra.mxu0 0.0
        %1244 = vmatprep.subr.mxu0 0.0
        %1245 = vmatpush1.msra.mxu0 0.0
        %1246 = vmatprep.subr.mxu0 0.0
        %1247 = vmatpush1.msra.mxu0 0.0
        %1248 = vmatprep.subr.mxu0 0.0
        %1249 = vmatpush1.msra.mxu0 0.0
        %1250 = vmatprep.subr.mxu0 0.0
        %1251 = vmatpush1.msra.mxu0 0.0
        %1252 = vmatprep.subr.mxu0 0.0
        %1253 = vmatpush1.msra.mxu0 0.0
        %1254 = vmatprep.subr.mxu0 0.0
        %1255 = vmatpush1.msra.mxu0 0.0
        %1256 = vmatprep.mubr.f32.mxu0 0.0
        %1257 = vmatmul.mubr.f32.gmra.mrb[0].mxu0 %v1048
        %v1258 = vpop.f32.mrb[0].mxu0
        %v1259 = vadd.f32 %v830, %v1258
        %v1260 = vpop.f32.mrb[0].mxu0
        %v1261 = vadd.f32 %v832, %v1260
        %1262 = vdwg.mxu0
        %1263 = vmatprep.subr.mxu0 %v528
        %1264 = vmatpush1.msra.mxu0 %v527
        %1265 = vmatprep.subr.mxu0 %v540
        %1266 = vmatpush1.msra.mxu0 %v539
        %1267 = vmatprep.subr.mxu0 %v552
        %1268 = vmatpush1.msra.mxu0 %v551
        %1269 = vmatprep.subr.mxu0 %v564
        %1270 = vmatpush1.msra.mxu0 %v563
        %1271 = vmatprep.subr.mxu0 0.0
        %1272 = vmatpush1.msra.mxu0 0.0
        %1273 = vmatprep.subr.mxu0 0.0
        %1274 = vmatpush1.msra.mxu0 0.0
        %1275 = vmatprep.subr.mxu0 0.0
        %1276 = vmatpush1.msra.mxu0 0.0
        %1277 = vmatprep.subr.mxu0 0.0
        %1278 = vmatpush1.msra.mxu0 0.0
        %1279 = vmatprep.subr.mxu0 0.0
        %1280 = vmatpush1.msra.mxu0 0.0
        %1281 = vmatprep.subr.mxu0 0.0
        %1282 = vmatpush1.msra.mxu0 0.0
        %1283 = vmatprep.subr.mxu0 0.0
        %1284 = vmatpush1.msra.mxu0 0.0
        %1285 = vmatprep.subr.mxu0 0.0
        %1286 = vmatpush1.msra.mxu0 0.0
        %1287 = vmatprep.subr.mxu0 0.0
        %1288 = vmatpush1.msra.mxu0 0.0
        %1289 = vmatprep.subr.mxu0 0.0
        %1290 = vmatpush1.msra.mxu0 0.0
        %1291 = vmatprep.subr.mxu0 0.0
        %1292 = vmatpush1.msra.mxu0 0.0
        %1293 = vmatprep.subr.mxu0 0.0
        %1294 = vmatpush1.msra.mxu0 0.0
        %1295 = vmatprep.subr.mxu0 0.0
        %1296 = vmatpush1.msra.mxu0 0.0
        %1297 = vmatprep.subr.mxu0 0.0
        %1298 = vmatpush1.msra.mxu0 0.0
        %1299 = vmatprep.subr.mxu0 0.0
        %1300 = vmatpush1.msra.mxu0 0.0
        %1301 = vmatprep.subr.mxu0 0.0
        %1302 = vmatpush1.msra.mxu0 0.0
        %1303 = vmatprep.subr.mxu0 0.0
        %1304 = vmatpush1.msra.mxu0 0.0
        %1305 = vmatprep.subr.mxu0 0.0
        %1306 = vmatpush1.msra.mxu0 0.0
        %1307 = vmatprep.subr.mxu0 0.0
        %1308 = vmatpush1.msra.mxu0 0.0
        %1309 = vmatprep.subr.mxu0 0.0
        %1310 = vmatpush1.msra.mxu0 0.0
        %1311 = vmatprep.subr.mxu0 0.0
        %1312 = vmatpush1.msra.mxu0 0.0
        %1313 = vmatprep.subr.mxu0 0.0
        %1314 = vmatpush1.msra.mxu0 0.0
        %1315 = vmatprep.subr.mxu0 0.0
        %1316 = vmatpush1.msra.mxu0 0.0
        %1317 = vmatprep.subr.mxu0 0.0
        %1318 = vmatpush1.msra.mxu0 0.0
        %1319 = vmatprep.subr.mxu0 0.0
        %1320 = vmatpush1.msra.mxu0 0.0
        %1321 = vmatprep.subr.mxu0 0.0
        %1322 = vmatpush1.msra.mxu0 0.0
        %1323 = vmatprep.subr.mxu0 0.0
        %1324 = vmatpush1.msra.mxu0 0.0
        %1325 = vmatprep.subr.mxu0 0.0
        %1326 = vmatpush1.msra.mxu0 0.0
        %1327 = vmatprep.mubr.f32.mxu0 0.0
        %1328 = vmatmul.mubr.f32.gmra.mrb[0].mxu0 %v1048
        %v1329 = vpop.f32.mrb[0].mxu0
        %v1330 = vadd.f32 %v901, %v1329
        %v1331 = vpop.f32.mrb[0].mxu0
        %v1332 = vadd.f32 %v903, %v1331
        %1333 = vdwg.mxu0
        %1334 = vmatprep.subr.mxu0 %v530
        %1335 = vmatpush1.msra.mxu0 %v529
        %1336 = vmatprep.subr.mxu0 %v542
        %1337 = vmatpush1.msra.mxu0 %v541
        %1338 = vmatprep.subr.mxu0 %v554
        %1339 = vmatpush1.msra.mxu0 %v553
        %1340 = vmatprep.subr.mxu0 %v566
        %1341 = vmatpush1.msra.mxu0 %v565
        %1342 = vmatprep.subr.mxu0 0.0
        %1343 = vmatpush1.msra.mxu0 0.0
        %1344 = vmatprep.subr.mxu0 0.0
        %1345 = vmatpush1.msra.mxu0 0.0
        %1346 = vmatprep.subr.mxu0 0.0
        %1347 = vmatpush1.msra.mxu0 0.0
        %1348 = vmatprep.subr.mxu0 0.0
        %1349 = vmatpush1.msra.mxu0 0.0
        %1350 = vmatprep.subr.mxu0 0.0
        %1351 = vmatpush1.msra.mxu0 0.0
        %1352 = vmatprep.subr.mxu0 0.0
        %1353 = vmatpush1.msra.mxu0 0.0
        %1354 = vmatprep.subr.mxu0 0.0
        %1355 = vmatpush1.msra.mxu0 0.0
        %1356 = vmatprep.subr.mxu0 0.0
        %1357 = vmatpush1.msra.mxu0 0.0
        %1358 = vmatprep.subr.mxu0 0.0
        %1359 = vmatpush1.msra.mxu0 0.0
        %1360 = vmatprep.subr.mxu0 0.0
        %1361 = vmatpush1.msra.mxu0 0.0
        %1362 = vmatprep.subr.mxu0 0.0
        %1363 = vmatpush1.msra.mxu0 0.0
        %1364 = vmatprep.subr.mxu0 0.0
        %1365 = vmatpush1.msra.mxu0 0.0
        %1366 = vmatprep.subr.mxu0 0.0
        %1367 = vmatpush1.msra.mxu0 0.0
        %1368 = vmatprep.subr.mxu0 0.0
        %1369 = vmatpush1.msra.mxu0 0.0
        %1370 = vmatprep.subr.mxu0 0.0
        %1371 = vmatpush1.msra.mxu0 0.0
        %1372 = vmatprep.subr.mxu0 0.0
        %1373 = vmatpush1.msra.mxu0 0.0
        %1374 = vmatprep.subr.mxu0 0.0
        %1375 = vmatpush1.msra.mxu0 0.0
        %1376 = vmatprep.subr.mxu0 0.0
        %1377 = vmatpush1.msra.mxu0 0.0
        %1378 = vmatprep.subr.mxu0 0.0
        %1379 = vmatpush1.msra.mxu0 0.0
        %1380 = vmatprep.subr.mxu0 0.0
        %1381 = vmatpush1.msra.mxu0 0.0
        %1382 = vmatprep.subr.mxu0 0.0
        %1383 = vmatpush1.msra.mxu0 0.0
        %1384 = vmatprep.subr.mxu0 0.0
        %1385 = vmatpush1.msra.mxu0 0.0
        %1386 = vmatprep.subr.mxu0 0.0
        %1387 = vmatpush1.msra.mxu0 0.0
        %1388 = vmatprep.subr.mxu0 0.0
        %1389 = vmatpush1.msra.mxu0 0.0
        %1390 = vmatprep.subr.mxu0 0.0
        %1391 = vmatpush1.msra.mxu0 0.0
        %1392 = vmatprep.subr.mxu0 0.0
        %1393 = vmatpush1.msra.mxu0 0.0
        %1394 = vmatprep.subr.mxu0 0.0
        %1395 = vmatpush1.msra.mxu0 0.0
        %1396 = vmatprep.subr.mxu0 0.0
        %1397 = vmatpush1.msra.mxu0 0.0
        %1398 = vmatprep.mubr.f32.mxu0 0.0
        %1399 = vmatmul.mubr.f32.gmra.mrb[0].mxu0 %v1048
        %v1400 = vpop.f32.mrb[0].mxu0
        %v1401 = vadd.f32 %v972, %v1400
        %v1402 = vpop.f32.mrb[0].mxu0
        %v1403 = vadd.f32 %v974, %v1402
        %1404 = vdwg.mxu0
        %1405 = vmatprep.subr.mxu0 %v532
        %1406 = vmatpush1.msra.mxu0 %v531
        %1407 = vmatprep.subr.mxu0 %v544
        %1408 = vmatpush1.msra.mxu0 %v543
        %1409 = vmatprep.subr.mxu0 %v556
        %1410 = vmatpush1.msra.mxu0 %v555
        %1411 = vmatprep.subr.mxu0 %v568
        %1412 = vmatpush1.msra.mxu0 %v567
        %1413 = vmatprep.subr.mxu0 0.0
        %1414 = vmatpush1.msra.mxu0 0.0
        %1415 = vmatprep.subr.mxu0 0.0
        %1416 = vmatpush1.msra.mxu0 0.0
        %1417 = vmatprep.subr.mxu0 0.0
        %1418 = vmatpush1.msra.mxu0 0.0
        %1419 = vmatprep.subr.mxu0 0.0
        %1420 = vmatpush1.msra.mxu0 0.0
        %1421 = vmatprep.subr.mxu0 0.0
        %1422 = vmatpush1.msra.mxu0 0.0
        %1423 = vmatprep.subr.mxu0 0.0
        %1424 = vmatpush1.msra.mxu0 0.0
        %1425 = vmatprep.subr.mxu0 0.0
        %1426 = vmatpush1.msra.mxu0 0.0
        %1427 = vmatprep.subr.mxu0 0.0
        %1428 = vmatpush1.msra.mxu0 0.0
        %1429 = vmatprep.subr.mxu0 0.0
        %1430 = vmatpush1.msra.mxu0 0.0
        %1431 = vmatprep.subr.mxu0 0.0
        %1432 = vmatpush1.msra.mxu0 0.0
        %1433 = vmatprep.subr.mxu0 0.0
        %1434 = vmatpush1.msra.mxu0 0.0
        %1435 = vmatprep.subr.mxu0 0.0
        %1436 = vmatpush1.msra.mxu0 0.0
        %1437 = vmatprep.subr.mxu0 0.0
        %1438 = vmatpush1.msra.mxu0 0.0
        %1439 = vmatprep.subr.mxu0 0.0
        %1440 = vmatpush1.msra.mxu0 0.0
        %1441 = vmatprep.subr.mxu0 0.0
        %1442 = vmatpush1.msra.mxu0 0.0
        %1443 = vmatprep.subr.mxu0 0.0
        %1444 = vmatpush1.msra.mxu0 0.0
        %1445 = vmatprep.subr.mxu0 0.0
        %1446 = vmatpush1.msra.mxu0 0.0
        %1447 = vmatprep.subr.mxu0 0.0
        %1448 = vmatpush1.msra.mxu0 0.0
        %1449 = vmatprep.subr.mxu0 0.0
        %1450 = vmatpush1.msra.mxu0 0.0
        %1451 = vmatprep.subr.mxu0 0.0
        %1452 = vmatpush1.msra.mxu0 0.0
        %1453 = vmatprep.subr.mxu0 0.0
        %1454 = vmatpush1.msra.mxu0 0.0
        %1455 = vmatprep.subr.mxu0 0.0
        %1456 = vmatpush1.msra.mxu0 0.0
        %1457 = vmatprep.subr.mxu0 0.0
        %1458 = vmatpush1.msra.mxu0 0.0
        %1459 = vmatprep.subr.mxu0 0.0
        %1460 = vmatpush1.msra.mxu0 0.0
        %1461 = vmatprep.subr.mxu0 0.0
        %1462 = vmatpush1.msra.mxu0 0.0
        %1463 = vmatprep.subr.mxu0 0.0
        %1464 = vmatpush1.msra.mxu0 0.0
        %1465 = vmatprep.subr.mxu0 0.0
        %1466 = vmatpush1.msra.mxu0 0.0
        %1467 = vmatprep.subr.mxu0 0.0
        %1468 = vmatpush1.msra.mxu0 0.0
        %1469 = vmatprep.mubr.f32.mxu0 0.0
        %1470 = vmatmul.mubr.f32.gmra.mrb[0].mxu0 %v1048
        %v1471 = vpop.f32.mrb[0].mxu0
        %v1472 = vadd.f32 %v1043, %v1471
        %v1473 = vpop.f32.mrb[0].mxu0
        %v1474 = vadd.f32 %v1045, %v1473
        %1475 = vdwg.mxu0
        %v1476 = vld [vmem:[#allocation13] sm:$0xff]
        %v1477 = vld [vmem:[#allocation13 + $0x8] sm:$0xf]
        %v1480 = vlaneseq
        %v1481 = vshrl.u32 %v1480, 7
        %v1482 = vsub.s32 0, %v1481
        %v1483 = vrot.slane %v1476, %v1482
        %v1484 = vlaneseq
        %v1485 = vshrl.u32 %v1484, 7
        %v1486 = vsub.s32 1, %v1485
        %v1487 = vrot.slane %v1476, %v1486
        %v1488 = vlaneseq
        %v1489 = vshrl.u32 %v1488, 7
        %v1490 = vsub.s32 2, %v1489
        %v1491 = vrot.slane %v1476, %v1490
        %v1492 = vlaneseq
        %v1493 = vshrl.u32 %v1492, 7
        %v1494 = vsub.s32 3, %v1493
        %v1495 = vrot.slane %v1476, %v1494
        %v1496 = vlaneseq
        %v1497 = vshrl.u32 %v1496, 7
        %v1498 = vsub.s32 4, %v1497
        %v1499 = vrot.slane %v1476, %v1498
        %v1500 = vlaneseq
        %v1501 = vshrl.u32 %v1500, 7
        %v1502 = vsub.s32 5, %v1501
        %v1503 = vrot.slane %v1476, %v1502
        %v1504 = vlaneseq
        %v1505 = vshrl.u32 %v1504, 7
        %v1506 = vsub.s32 6, %v1505
        %v1507 = vrot.slane %v1476, %v1506
        %v1508 = vlaneseq
        %v1509 = vshrl.u32 %v1508, 7
        %v1510 = vsub.s32 7, %v1509
        %v1511 = vrot.slane %v1476, %v1510
        %v1512 = vlaneseq
        %v1513 = vshrl.u32 %v1512, 7
        %v1514 = vsub.s32 0, %v1513
        %v1515 = vrot.slane %v1477, %v1514
        %v1516 = vlaneseq
        %v1517 = vshrl.u32 %v1516, 7
        %v1518 = vsub.s32 1, %v1517
        %v1519 = vrot.slane %v1477, %v1518
        %v1520 = vlaneseq
        %v1521 = vshrl.u32 %v1520, 7
        %v1522 = vsub.s32 2, %v1521
        %v1523 = vrot.slane %v1477, %v1522
        %v1524 = vlaneseq
        %v1525 = vshrl.u32 %v1524, 7
        %v1526 = vsub.s32 3, %v1525
        %v1527 = vrot.slane %v1477, %v1526
        %v1540 = vadd.f32 %v1117, %v1483
        %v1541 = vadd.f32 %v1119, %v1487
        %v1542 = vadd.f32 %v1188, %v1491
        %v1543 = vadd.f32 %v1190, %v1495
        %v1544 = vadd.f32 %v1259, %v1499
        %v1545 = vadd.f32 %v1261, %v1503
        %v1546 = vadd.f32 %v1330, %v1507
        %v1547 = vadd.f32 %v1332, %v1511
        %v1548 = vadd.f32 %v1401, %v1515
        %v1549 = vadd.f32 %v1403, %v1519
        %v1550 = vadd.f32 %v1472, %v1523
        %v1551 = vadd.f32 %v1474, %v1527
        %v1552 = vmax.f32 %v1540, 0.0
        %v1553 = vmax.f32 %v1541, 0.0
        %v1554 = vmax.f32 %v1542, 0.0
        %v1555 = vmax.f32 %v1543, 0.0
        %v1556 = vmax.f32 %v1544, 0.0
        %v1557 = vmax.f32 %v1545, 0.0
        %v1558 = vmax.f32 %v1546, 0.0
        %v1559 = vmax.f32 %v1547, 0.0
        %v1560 = vmax.f32 %v1548, 0.0
        %v1561 = vmax.f32 %v1549, 0.0
        %v1562 = vmax.f32 %v1550, 0.0
        %v1563 = vmax.f32 %v1551, 0.0
        %v1566 = vcombine.low %v1552, %v1553
        %v1568 = vunpack.c.l.s4 1966171168
        %v1569 = vunpack.c.0.s8 %v1568
        %v1570 = vlaneseq
        %v1571 = vshrl.u32 %v1570, 7
        %v1572 = vsub.s32 %v1569, %v1571
        %v1573 = vrot.slane %v1566, %v1572
        %v1575 = vunpack.c.l.s4 1966171168
        %v1576 = vunpack.c.0.s8 %v1575
        %v1577 = vlaneseq
        %v1578 = vshrl.u32 %v1577, 7
        %v1579 = vsub.s32 %v1576, %v1578
        %v1580 = vrot.slane %v1573, %v1579
        %v1582 = vlaneseq
        %vm1583 = vcmp.ge.s32.totalorder %v1582, 0
        %vm1584 = vcmp.lt.s32.totalorder %v1582, 256
        %vm1585 = vmand %vm1583, %vm1584
        %1586 = vst.msk [vmem:[#allocation2] ss:$8 sm:$0x3] %vm1585, %v1580
        %1587 = vst.msk [vmem:[#allocation2] ss:$8 sm:$0x0] %vm1585, %v1580
        %v1590 = vcombine.low %v1554, %v1555
        %v1592 = vunpack.c.l.s4 1966171168
        %v1593 = vunpack.c.0.s8 %v1592
        %v1594 = vlaneseq
        %v1595 = vshrl.u32 %v1594, 7
        %v1596 = vsub.s32 %v1593, %v1595
        %v1597 = vrot.slane %v1590, %v1596
        %v1599 = vunpack.c.l.s4 1966171168
        %v1600 = vunpack.c.0.s8 %v1599
        %v1601 = vlaneseq
        %v1602 = vshrl.u32 %v1601, 7
        %v1603 = vsub.s32 %v1600, %v1602
        %v1604 = vrot.slane %v1597, %v1603
        %s1606 = scalar_lea.vmem [#allocation2], 1
        %1607 = vst.msk [vmem:[%s1606] ss:$8 sm:$0x3] %vm1585, %v1604
        %1608 = vst.msk [vmem:[%s1606] ss:$8 sm:$0x0] %vm1585, %v1604
        %v1611 = vcombine.low %v1556, %v1557
        %v1613 = vunpack.c.l.s4 1966171168
        %v1614 = vunpack.c.0.s8 %v1613
        %v1615 = vlaneseq
        %v1616 = vshrl.u32 %v1615, 7
        %v1617 = vsub.s32 %v1614, %v1616
        %v1618 = vrot.slane %v1611, %v1617
        %v1620 = vunpack.c.l.s4 1966171168
        %v1621 = vunpack.c.0.s8 %v1620
        %v1622 = vlaneseq
        %v1623 = vshrl.u32 %v1622, 7
        %v1624 = vsub.s32 %v1621, %v1623
        %v1625 = vrot.slane %v1618, %v1624
        %s1627 = scalar_lea.vmem [#allocation2], 2
        %1628 = vst.msk [vmem:[%s1627] ss:$8 sm:$0x3] %vm1585, %v1625
        %1629 = vst.msk [vmem:[%s1627] ss:$8 sm:$0x0] %vm1585, %v1625
        %v1632 = vcombine.low %v1558, %v1559
        %v1634 = vunpack.c.l.s4 1966171168
        %v1635 = vunpack.c.0.s8 %v1634
        %v1636 = vlaneseq
        %v1637 = vshrl.u32 %v1636, 7
        %v1638 = vsub.s32 %v1635, %v1637
        %v1639 = vrot.slane %v1632, %v1638
        %v1641 = vunpack.c.l.s4 1966171168
        %v1642 = vunpack.c.0.s8 %v1641
        %v1643 = vlaneseq
        %v1644 = vshrl.u32 %v1643, 7
        %v1645 = vsub.s32 %v1642, %v1644
        %v1646 = vrot.slane %v1639, %v1645
        %s1648 = scalar_lea.vmem [#allocation2], 3
        %1649 = vst.msk [vmem:[%s1648] ss:$8 sm:$0x3] %vm1585, %v1646
        %1650 = vst.msk [vmem:[%s1648] ss:$8 sm:$0x0] %vm1585, %v1646
        %v1653 = vcombine.low %v1560, %v1561
        %v1655 = vunpack.c.l.s4 1966171168
        %v1656 = vunpack.c.0.s8 %v1655
        %v1657 = vlaneseq
        %v1658 = vshrl.u32 %v1657, 7
        %v1659 = vsub.s32 %v1656, %v1658
        %v1660 = vrot.slane %v1653, %v1659
        %v1662 = vunpack.c.l.s4 1966171168
        %v1663 = vunpack.c.0.s8 %v1662
        %v1664 = vlaneseq
        %v1665 = vshrl.u32 %v1664, 7
        %v1666 = vsub.s32 %v1663, %v1665
        %v1667 = vrot.slane %v1660, %v1666
        %s1669 = scalar_lea.vmem [#allocation2], 4
        %1670 = vst.msk [vmem:[%s1669] ss:$8 sm:$0x3] %vm1585, %v1667
        %1671 = vst.msk [vmem:[%s1669] ss:$8 sm:$0x0] %vm1585, %v1667
        %v1674 = vcombine.low %v1562, %v1563
        %v1676 = vunpack.c.l.s4 1966171168
        %v1677 = vunpack.c.0.s8 %v1676
        %v1678 = vlaneseq
        %v1679 = vshrl.u32 %v1678, 7
        %v1680 = vsub.s32 %v1677, %v1679
        %v1681 = vrot.slane %v1674, %v1680
        %v1683 = vunpack.c.l.s4 1966171168
        %v1684 = vunpack.c.0.s8 %v1683
        %v1685 = vlaneseq
        %v1686 = vshrl.u32 %v1685, 7
        %v1687 = vsub.s32 %v1684, %v1686
        %v1688 = vrot.slane %v1681, %v1687
        %s1690 = scalar_lea.vmem [#allocation2], 5
        %1691 = vst.msk [vmem:[%s1690] ss:$8 sm:$0x3] %vm1585, %v1688
        %1692 = vst.msk [vmem:[%s1690] ss:$8 sm:$0x0] %vm1585, %v1688
        %v1693 = vld [vmem:[#allocation2] sm:$0x3f]
        %v1694 = vld [vmem:[#allocation2 + $0x8] sm:$0x3f]
        %v1695 = vld [vmem:[#allocation14] sm:$0xff]
        %v1696 = vld [vmem:[#allocation14 + $0x8] sm:$0xff]
        %v1697 = vld [vmem:[#allocation14 + $0x10] sm:$0xff]
        %v1698 = vld [vmem:[#allocation14 + $0x18] sm:$0xff]
        %v1699 = vld [vmem:[#allocation14 + $0x20] sm:$0xff]
        %v1700 = vld [vmem:[#allocation14 + $0x28] sm:$0xff]
        %v1701 = vld [vmem:[#allocation14 + $0x30] sm:$0xff]
        %v1702 = vld [vmem:[#allocation14 + $0x38] sm:$0xff]
        %v1703 = vld [vmem:[#allocation14 + $0x40] sm:$0xff]
        %v1704 = vld [vmem:[#allocation14 + $0x48] sm:$0xff]
        %v1705 = vld [vmem:[#allocation14 + $0x50] sm:$0xff]
        %v1706 = vld [vmem:[#allocation14 + $0x58] sm:$0xff]
        %v1707 = vld [vmem:[#allocation14 + $0x60] sm:$0xff]
        %v1708 = vld [vmem:[#allocation14 + $0x68] sm:$0xff]
        %v1709 = vld [vmem:[#allocation14 + $0x70] sm:$0xff]
        %v1710 = vld [vmem:[#allocation14 + $0x78] sm:$0xff]
        %v1711 = vld [vmem:[#allocation14 + $0x80] sm:$0xff]
        %v1712 = vld [vmem:[#allocation14 + $0x88] sm:$0xff]
        %v1713 = vld [vmem:[#allocation14 + $0x90] sm:$0xff]
        %v1714 = vld [vmem:[#allocation14 + $0x98] sm:$0xff]
        %v1715 = vld [vmem:[#allocation14 + $0xa0] sm:$0xff]
        %v1716 = vld [vmem:[#allocation14 + $0xa8] sm:$0xff]
        %v1717 = vld [vmem:[#allocation14 + $0xb0] sm:$0xff]
        %v1718 = vld [vmem:[#allocation14 + $0xb8] sm:$0xff]
        %v1719 = vld [vmem:[#allocation14 + $0xc0] sm:$0xff]
        %v1720 = vld [vmem:[#allocation14 + $0xc8] sm:$0xff]
        %v1721 = vld [vmem:[#allocation14 + $0xd0] sm:$0xff]
        %v1722 = vld [vmem:[#allocation14 + $0xd8] sm:$0xff]
        %v1723 = vld [vmem:[#allocation14 + $0xe0] sm:$0xff]
        %v1724 = vld [vmem:[#allocation14 + $0xe8] sm:$0xff]
        %v1725 = vld [vmem:[#allocation14 + $0xf0] sm:$0xff]
        %v1726 = vld [vmem:[#allocation14 + $0xf8] sm:$0xff]
        %v1727 = vld [vmem:[#allocation14 + $0x100] sm:$0xff]
        %v1728 = vld [vmem:[#allocation14 + $0x108] sm:$0xff]
        %v1729 = vld [vmem:[#allocation14 + $0x110] sm:$0xff]
        %v1730 = vld [vmem:[#allocation14 + $0x118] sm:$0xff]
        %v1731 = vld [vmem:[#allocation14 + $0x120] sm:$0xff]
        %v1732 = vld [vmem:[#allocation14 + $0x128] sm:$0xff]
        %v1733 = vld [vmem:[#allocation14 + $0x130] sm:$0xff]
        %v1734 = vld [vmem:[#allocation14 + $0x138] sm:$0xff]
        %v1735 = vld [vmem:[#allocation14 + $0x140] sm:$0xff]
        %v1736 = vld [vmem:[#allocation14 + $0x148] sm:$0xff]
        %v1737 = vld [vmem:[#allocation14 + $0x150] sm:$0xff]
        %v1738 = vld [vmem:[#allocation14 + $0x158] sm:$0xff]
        %v1739 = vld [vmem:[#allocation14 + $0x160] sm:$0xff]
        %v1740 = vld [vmem:[#allocation14 + $0x168] sm:$0xff]
        %v1741 = vld [vmem:[#allocation14 + $0x170] sm:$0xff]
        %v1742 = vld [vmem:[#allocation14 + $0x178] sm:$0xff]
        %v1743 = vld [vmem:[#allocation14 + $0x180] sm:$0xff]
        %v1744 = vld [vmem:[#allocation14 + $0x188] sm:$0xff]
        %v1745 = vld [vmem:[#allocation14 + $0x190] sm:$0xff]
        %v1746 = vld [vmem:[#allocation14 + $0x198] sm:$0xff]
        %v1747 = vld [vmem:[#allocation14 + $0x1a0] sm:$0xff]
        %v1748 = vld [vmem:[#allocation14 + $0x1a8] sm:$0xff]
        %v1749 = vld [vmem:[#allocation14 + $0x1b0] sm:$0xff]
        %v1750 = vld [vmem:[#allocation14 + $0x1b8] sm:$0xff]
        %v1751 = vld [vmem:[#allocation14 + $0x1c0] sm:$0xff]
        %v1752 = vld [vmem:[#allocation14 + $0x1c8] sm:$0xff]
        %v1753 = vld [vmem:[#allocation14 + $0x1d0] sm:$0xff]
        %v1754 = vld [vmem:[#allocation14 + $0x1d8] sm:$0xff]
        %v1755 = vld [vmem:[#allocation14 + $0x1e0] sm:$0xff]
        %v1756 = vld [vmem:[#allocation14 + $0x1e8] sm:$0xff]
        %v1757 = vld [vmem:[#allocation14 + $0x1f0] sm:$0xff]
        %v1758 = vld [vmem:[#allocation14 + $0x1f8] sm:$0xff]
        %v1759 = vld [vmem:[#allocation14 + $0x200] sm:$0xff]
        %v1760 = vld [vmem:[#allocation14 + $0x208] sm:$0xff]
        %v1761 = vld [vmem:[#allocation14 + $0x210] sm:$0xff]
        %v1762 = vld [vmem:[#allocation14 + $0x218] sm:$0xff]
        %v1763 = vld [vmem:[#allocation14 + $0x220] sm:$0xff]
        %v1764 = vld [vmem:[#allocation14 + $0x228] sm:$0xff]
        %v1765 = vld [vmem:[#allocation14 + $0x230] sm:$0xff]
        %v1766 = vld [vmem:[#allocation14 + $0x238] sm:$0xff]
        %v1767 = vld [vmem:[#allocation14 + $0x240] sm:$0xff]
        %v1768 = vld [vmem:[#allocation14 + $0x248] sm:$0xff]
        %v1769 = vld [vmem:[#allocation14 + $0x250] sm:$0xff]
        %v1770 = vld [vmem:[#allocation14 + $0x258] sm:$0xff]
        %v1771 = vld [vmem:[#allocation14 + $0x260] sm:$0xff]
        %v1772 = vld [vmem:[#allocation14 + $0x268] sm:$0xff]
        %v1773 = vld [vmem:[#allocation14 + $0x270] sm:$0xff]
        %v1774 = vld [vmem:[#allocation14 + $0x278] sm:$0xff]
        %v1775 = vld [vmem:[#allocation14 + $0x280] sm:$0xff]
        %v1776 = vld [vmem:[#allocation14 + $0x288] sm:$0xff]
        %v1777 = vld [vmem:[#allocation14 + $0x290] sm:$0xff]
        %v1778 = vld [vmem:[#allocation14 + $0x298] sm:$0xff]
        %v1779 = vld [vmem:[#allocation14 + $0x2a0] sm:$0xff]
        %v1780 = vld [vmem:[#allocation14 + $0x2a8] sm:$0xff]
        %v1781 = vld [vmem:[#allocation14 + $0x2b0] sm:$0xff]
        %v1782 = vld [vmem:[#allocation14 + $0x2b8] sm:$0xff]
        %v1783 = vld [vmem:[#allocation14 + $0x2c0] sm:$0xff]
        %v1784 = vld [vmem:[#allocation14 + $0x2c8] sm:$0xff]
        %v1785 = vld [vmem:[#allocation14 + $0x2d0] sm:$0xff]
        %v1786 = vld [vmem:[#allocation14 + $0x2d8] sm:$0xff]
        %v1787 = vld [vmem:[#allocation14 + $0x2e0] sm:$0xff]
        %v1788 = vld [vmem:[#allocation14 + $0x2e8] sm:$0xff]
        %v1789 = vld [vmem:[#allocation14 + $0x2f0] sm:$0xff]
        %v1790 = vld [vmem:[#allocation14 + $0x2f8] sm:$0xff]
        %v1791 = vld [vmem:[#allocation14 + $0x300] sm:$0xff]
        %v1792 = vld [vmem:[#allocation14 + $0x308] sm:$0xff]
        %v1793 = vld [vmem:[#allocation14 + $0x310] sm:$0xff]
        %v1794 = vld [vmem:[#allocation14 + $0x318] sm:$0xff]
        %v1795 = vld [vmem:[#allocation14 + $0x320] sm:$0xff]
        %v1796 = vld [vmem:[#allocation14 + $0x328] sm:$0xff]
        %v1797 = vld [vmem:[#allocation14 + $0x330] sm:$0xff]
        %v1798 = vld [vmem:[#allocation14 + $0x338] sm:$0xff]
        %v1799 = vld [vmem:[#allocation14 + $0x340] sm:$0xff]
        %v1800 = vld [vmem:[#allocation14 + $0x348] sm:$0xff]
        %v1801 = vld [vmem:[#allocation14 + $0x350] sm:$0xff]
        %v1802 = vld [vmem:[#allocation14 + $0x358] sm:$0xff]
        %v1803 = vld [vmem:[#allocation14 + $0x360] sm:$0xff]
        %v1804 = vld [vmem:[#allocation14 + $0x368] sm:$0xff]
        %v1805 = vld [vmem:[#allocation14 + $0x370] sm:$0xff]
        %v1806 = vld [vmem:[#allocation14 + $0x378] sm:$0xff]
        %v1807 = vld [vmem:[#allocation14 + $0x380] sm:$0xff]
        %v1808 = vld [vmem:[#allocation14 + $0x388] sm:$0xff]
        %v1809 = vld [vmem:[#allocation14 + $0x390] sm:$0xff]
        %v1810 = vld [vmem:[#allocation14 + $0x398] sm:$0xff]
        %v1811 = vld [vmem:[#allocation14 + $0x3a0] sm:$0xff]
        %v1812 = vld [vmem:[#allocation14 + $0x3a8] sm:$0xff]
        %v1813 = vld [vmem:[#allocation14 + $0x3b0] sm:$0xff]
        %v1814 = vld [vmem:[#allocation14 + $0x3b8] sm:$0xff]
        %v1815 = vld [vmem:[#allocation14 + $0x3c0] sm:$0xff]
        %v1816 = vld [vmem:[#allocation14 + $0x3c8] sm:$0xff]
        %v1817 = vld [vmem:[#allocation14 + $0x3d0] sm:$0xff]
        %v1818 = vld [vmem:[#allocation14 + $0x3d8] sm:$0xff]
        %v1819 = vld [vmem:[#allocation14 + $0x3e0] sm:$0xff]
        %v1820 = vld [vmem:[#allocation14 + $0x3e8] sm:$0xff]
        %v1821 = vld [vmem:[#allocation14 + $0x3f0] sm:$0xff]
        %v1822 = vld [vmem:[#allocation14 + $0x3f8] sm:$0xff]
        %v1823 = vld [vmem:[#allocation14 + $0x400] sm:$0xff]
        %v1824 = vld [vmem:[#allocation14 + $0x408] sm:$0xff]
        %v1825 = vld [vmem:[#allocation14 + $0x410] sm:$0xff]
        %v1826 = vld [vmem:[#allocation14 + $0x418] sm:$0xff]
        %v1827 = vld [vmem:[#allocation14 + $0x420] sm:$0xff]
        %v1828 = vld [vmem:[#allocation14 + $0x428] sm:$0xff]
        %v1829 = vld [vmem:[#allocation14 + $0x430] sm:$0xff]
        %v1830 = vld [vmem:[#allocation14 + $0x438] sm:$0xff]
        %v1831 = vld [vmem:[#allocation14 + $0x440] sm:$0xff]
        %v1832 = vld [vmem:[#allocation14 + $0x448] sm:$0xff]
        %v1833 = vld [vmem:[#allocation14 + $0x450] sm:$0xff]
        %v1834 = vld [vmem:[#allocation14 + $0x458] sm:$0xff]
        %v1835 = vld [vmem:[#allocation14 + $0x460] sm:$0xff]
        %v1836 = vld [vmem:[#allocation14 + $0x468] sm:$0xff]
        %v1837 = vld [vmem:[#allocation14 + $0x470] sm:$0xff]
        %v1838 = vld [vmem:[#allocation14 + $0x478] sm:$0xff]
        %v1839 = vld [vmem:[#allocation14 + $0x480] sm:$0xff]
        %v1840 = vld [vmem:[#allocation14 + $0x488] sm:$0xff]
        %v1841 = vld [vmem:[#allocation14 + $0x490] sm:$0xff]
        %v1842 = vld [vmem:[#allocation14 + $0x498] sm:$0xff]
        %v1843 = vld [vmem:[#allocation14 + $0x4a0] sm:$0xff]
        %v1844 = vld [vmem:[#allocation14 + $0x4a8] sm:$0xff]
        %v1845 = vld [vmem:[#allocation14 + $0x4b0] sm:$0xff]
        %v1846 = vld [vmem:[#allocation14 + $0x4b8] sm:$0xff]
        %v1847 = vld [vmem:[#allocation14 + $0x4c0] sm:$0xff]
        %v1848 = vld [vmem:[#allocation14 + $0x4c8] sm:$0xff]
        %v1849 = vld [vmem:[#allocation14 + $0x4d0] sm:$0xff]
        %v1850 = vld [vmem:[#allocation14 + $0x4d8] sm:$0xff]
        %v1851 = vld [vmem:[#allocation14 + $0x4e0] sm:$0xff]
        %v1852 = vld [vmem:[#allocation14 + $0x4e8] sm:$0xff]
        %v1853 = vld [vmem:[#allocation14 + $0x4f0] sm:$0xff]
        %v1854 = vld [vmem:[#allocation14 + $0x4f8] sm:$0xff]
        %v1855 = vld [vmem:[#allocation14 + $0x500] sm:$0xff]
        %v1856 = vld [vmem:[#allocation14 + $0x508] sm:$0xff]
        %v1857 = vld [vmem:[#allocation14 + $0x510] sm:$0xff]
        %v1858 = vld [vmem:[#allocation14 + $0x518] sm:$0xff]
        %v1859 = vld [vmem:[#allocation14 + $0x520] sm:$0xff]
        %v1860 = vld [vmem:[#allocation14 + $0x528] sm:$0xff]
        %v1861 = vld [vmem:[#allocation14 + $0x530] sm:$0xff]
        %v1862 = vld [vmem:[#allocation14 + $0x538] sm:$0xff]
        %v1863 = vld [vmem:[#allocation14 + $0x540] sm:$0xff]
        %v1864 = vld [vmem:[#allocation14 + $0x548] sm:$0xff]
        %v1865 = vld [vmem:[#allocation14 + $0x550] sm:$0xff]
        %v1866 = vld [vmem:[#allocation14 + $0x558] sm:$0xff]
        %v1867 = vld [vmem:[#allocation14 + $0x560] sm:$0xff]
        %v1868 = vld [vmem:[#allocation14 + $0x568] sm:$0xff]
        %v1869 = vld [vmem:[#allocation14 + $0x570] sm:$0xff]
        %v1870 = vld [vmem:[#allocation14 + $0x578] sm:$0xff]
        %v1871 = vld [vmem:[#allocation14 + $0x580] sm:$0xff]
        %v1872 = vld [vmem:[#allocation14 + $0x588] sm:$0xff]
        %v1873 = vld [vmem:[#allocation14 + $0x590] sm:$0xff]
        %v1874 = vld [vmem:[#allocation14 + $0x598] sm:$0xff]
        %v1875 = vld [vmem:[#allocation14 + $0x5a0] sm:$0xff]
        %v1876 = vld [vmem:[#allocation14 + $0x5a8] sm:$0xff]
        %v1877 = vld [vmem:[#allocation14 + $0x5b0] sm:$0xff]
        %v1878 = vld [vmem:[#allocation14 + $0x5b8] sm:$0xff]
        %v1879 = vld [vmem:[#allocation14 + $0x5c0] sm:$0xff]
        %v1880 = vld [vmem:[#allocation14 + $0x5c8] sm:$0xff]
        %v1881 = vld [vmem:[#allocation14 + $0x5d0] sm:$0xff]
        %v1882 = vld [vmem:[#allocation14 + $0x5d8] sm:$0xff]
        %v1883 = vld [vmem:[#allocation14 + $0x5e0] sm:$0xff]
        %v1884 = vld [vmem:[#allocation14 + $0x5e8] sm:$0xff]
        %v1885 = vld [vmem:[#allocation14 + $0x5f0] sm:$0xff]
        %v1886 = vld [vmem:[#allocation14 + $0x5f8] sm:$0xff]
        %v1887 = vld [vmem:[#allocation14 + $0x600] sm:$0xff]
        %v1888 = vld [vmem:[#allocation14 + $0x608] sm:$0xff]
        %v1889 = vld [vmem:[#allocation14 + $0x610] sm:$0xff]
        %v1890 = vld [vmem:[#allocation14 + $0x618] sm:$0xff]
        %v1891 = vld [vmem:[#allocation14 + $0x620] sm:$0xff]
        %v1892 = vld [vmem:[#allocation14 + $0x628] sm:$0xff]
        %v1893 = vld [vmem:[#allocation14 + $0x630] sm:$0xff]
        %v1894 = vld [vmem:[#allocation14 + $0x638] sm:$0xff]
        %v1895 = vld [vmem:[#allocation14 + $0x640] sm:$0xff]
        %v1896 = vld [vmem:[#allocation14 + $0x648] sm:$0xff]
        %v1897 = vld [vmem:[#allocation14 + $0x650] sm:$0xff]
        %v1898 = vld [vmem:[#allocation14 + $0x658] sm:$0xff]
        %v1899 = vld [vmem:[#allocation14 + $0x660] sm:$0xff]
        %v1900 = vld [vmem:[#allocation14 + $0x668] sm:$0xff]
        %v1901 = vld [vmem:[#allocation14 + $0x670] sm:$0xff]
        %v1902 = vld [vmem:[#allocation14 + $0x678] sm:$0xff]
        %v1903 = vld [vmem:[#allocation14 + $0x680] sm:$0xff]
        %v1904 = vld [vmem:[#allocation14 + $0x688] sm:$0xff]
        %v1905 = vld [vmem:[#allocation14 + $0x690] sm:$0xff]
        %v1906 = vld [vmem:[#allocation14 + $0x698] sm:$0xff]
        %v1907 = vld [vmem:[#allocation14 + $0x6a0] sm:$0xff]
        %v1908 = vld [vmem:[#allocation14 + $0x6a8] sm:$0xff]
        %v1909 = vld [vmem:[#allocation14 + $0x6b0] sm:$0xff]
        %v1910 = vld [vmem:[#allocation14 + $0x6b8] sm:$0xff]
        %v1911 = vld [vmem:[#allocation14 + $0x6c0] sm:$0xff]
        %v1912 = vld [vmem:[#allocation14 + $0x6c8] sm:$0xff]
        %v1913 = vld [vmem:[#allocation14 + $0x6d0] sm:$0xff]
        %v1914 = vld [vmem:[#allocation14 + $0x6d8] sm:$0xff]
        %v1915 = vld [vmem:[#allocation14 + $0x6e0] sm:$0xff]
        %v1916 = vld [vmem:[#allocation14 + $0x6e8] sm:$0xff]
        %v1917 = vld [vmem:[#allocation14 + $0x6f0] sm:$0xff]
        %v1918 = vld [vmem:[#allocation14 + $0x6f8] sm:$0xff]
        %v1919 = vld [vmem:[#allocation14 + $0x700] sm:$0xff]
        %v1920 = vld [vmem:[#allocation14 + $0x708] sm:$0xff]
        %v1921 = vld [vmem:[#allocation14 + $0x710] sm:$0xff]
        %v1922 = vld [vmem:[#allocation14 + $0x718] sm:$0xff]
        %v1923 = vld [vmem:[#allocation14 + $0x720] sm:$0xff]
        %v1924 = vld [vmem:[#allocation14 + $0x728] sm:$0xff]
        %v1925 = vld [vmem:[#allocation14 + $0x730] sm:$0xff]
        %v1926 = vld [vmem:[#allocation14 + $0x738] sm:$0xff]
        %v1927 = vld [vmem:[#allocation14 + $0x740] sm:$0xff]
        %v1928 = vld [vmem:[#allocation14 + $0x748] sm:$0xff]
        %v1929 = vld [vmem:[#allocation14 + $0x750] sm:$0xff]
        %v1930 = vld [vmem:[#allocation14 + $0x758] sm:$0xff]
        %v1931 = vld [vmem:[#allocation14 + $0x760] sm:$0xff]
        %v1932 = vld [vmem:[#allocation14 + $0x768] sm:$0xff]
        %v1933 = vld [vmem:[#allocation14 + $0x770] sm:$0xff]
        %v1934 = vld [vmem:[#allocation14 + $0x778] sm:$0xff]
        %v1935 = vld [vmem:[#allocation14 + $0x780] sm:$0xff]
        %v1936 = vld [vmem:[#allocation14 + $0x788] sm:$0xff]
        %v1937 = vld [vmem:[#allocation14 + $0x790] sm:$0xff]
        %v1938 = vld [vmem:[#allocation14 + $0x798] sm:$0xff]
        %v1939 = vld [vmem:[#allocation14 + $0x7a0] sm:$0xff]
        %v1940 = vld [vmem:[#allocation14 + $0x7a8] sm:$0xff]
        %v1941 = vld [vmem:[#allocation14 + $0x7b0] sm:$0xff]
        %v1942 = vld [vmem:[#allocation14 + $0x7b8] sm:$0xff]
        %v1943 = vld [vmem:[#allocation14 + $0x7c0] sm:$0xff]
        %v1944 = vld [vmem:[#allocation14 + $0x7c8] sm:$0xff]
        %v1945 = vld [vmem:[#allocation14 + $0x7d0] sm:$0xff]
        %v1946 = vld [vmem:[#allocation14 + $0x7d8] sm:$0xff]
        %v1947 = vld [vmem:[#allocation14 + $0x7e0] sm:$0xff]
        %v1948 = vld [vmem:[#allocation14 + $0x7e8] sm:$0xff]
        %v1949 = vld [vmem:[#allocation14 + $0x7f0] sm:$0xff]
        %v1950 = vld [vmem:[#allocation14 + $0x7f8] sm:$0xff]
        %v1951 = vld [vmem:[#allocation14 + $0x800] sm:$0xff]
        %v1952 = vld [vmem:[#allocation14 + $0x808] sm:$0xff]
        %v1953 = vld [vmem:[#allocation14 + $0x810] sm:$0xff]
        %v1954 = vld [vmem:[#allocation14 + $0x818] sm:$0xff]
        %v1955 = vld [vmem:[#allocation14 + $0x820] sm:$0xff]
        %v1956 = vld [vmem:[#allocation14 + $0x828] sm:$0xff]
        %v1957 = vld [vmem:[#allocation14 + $0x830] sm:$0xff]
        %v1958 = vld [vmem:[#allocation14 + $0x838] sm:$0xff]
        %v1959 = vld [vmem:[#allocation14 + $0x840] sm:$0xff]
        %v1960 = vld [vmem:[#allocation14 + $0x848] sm:$0xff]
        %v1961 = vld [vmem:[#allocation14 + $0x850] sm:$0xff]
        %v1962 = vld [vmem:[#allocation14 + $0x858] sm:$0xff]
        %v1963 = vld [vmem:[#allocation14 + $0x860] sm:$0xff]
        %v1964 = vld [vmem:[#allocation14 + $0x868] sm:$0xff]
        %v1965 = vld [vmem:[#allocation14 + $0x870] sm:$0xff]
        %v1966 = vld [vmem:[#allocation14 + $0x878] sm:$0xff]
        %v1967 = vld [vmem:[#allocation14 + $0x880] sm:$0xff]
        %v1968 = vld [vmem:[#allocation14 + $0x888] sm:$0xff]
        %v1969 = vld [vmem:[#allocation14 + $0x890] sm:$0xff]
        %v1970 = vld [vmem:[#allocation14 + $0x898] sm:$0xff]
        %v1971 = vld [vmem:[#allocation14 + $0x8a0] sm:$0xff]
        %v1972 = vld [vmem:[#allocation14 + $0x8a8] sm:$0xff]
        %v1973 = vld [vmem:[#allocation14 + $0x8b0] sm:$0xff]
        %v1974 = vld [vmem:[#allocation14 + $0x8b8] sm:$0xff]
        %v1975 = vld [vmem:[#allocation14 + $0x8c0] sm:$0xff]
        %v1976 = vld [vmem:[#allocation14 + $0x8c8] sm:$0xff]
        %v1977 = vld [vmem:[#allocation14 + $0x8d0] sm:$0xff]
        %v1978 = vld [vmem:[#allocation14 + $0x8d8] sm:$0xff]
        %v1979 = vld [vmem:[#allocation14 + $0x8e0] sm:$0xff]
        %v1980 = vld [vmem:[#allocation14 + $0x8e8] sm:$0xff]
        %v1981 = vld [vmem:[#allocation14 + $0x8f0] sm:$0xff]
        %v1982 = vld [vmem:[#allocation14 + $0x8f8] sm:$0xff]
        %v1983 = vld [vmem:[#allocation14 + $0x900] sm:$0xff]
        %v1984 = vld [vmem:[#allocation14 + $0x908] sm:$0xff]
        %v1985 = vld [vmem:[#allocation14 + $0x910] sm:$0xff]
        %v1986 = vld [vmem:[#allocation14 + $0x918] sm:$0xff]
        %v1987 = vld [vmem:[#allocation14 + $0x920] sm:$0xff]
        %v1988 = vld [vmem:[#allocation14 + $0x928] sm:$0xff]
        %v1989 = vld [vmem:[#allocation14 + $0x930] sm:$0xff]
        %v1990 = vld [vmem:[#allocation14 + $0x938] sm:$0xff]
        %v1991 = vld [vmem:[#allocation14 + $0x940] sm:$0xff]
        %v1992 = vld [vmem:[#allocation14 + $0x948] sm:$0xff]
        %v1993 = vld [vmem:[#allocation14 + $0x950] sm:$0xff]
        %v1994 = vld [vmem:[#allocation14 + $0x958] sm:$0xff]
        %v1995 = vld [vmem:[#allocation14 + $0x960] sm:$0xff]
        %v1996 = vld [vmem:[#allocation14 + $0x968] sm:$0xff]
        %v1997 = vld [vmem:[#allocation14 + $0x970] sm:$0xff]
        %v1998 = vld [vmem:[#allocation14 + $0x978] sm:$0xff]
        %v1999 = vld [vmem:[#allocation14 + $0x980] sm:$0xff]
        %v2000 = vld [vmem:[#allocation14 + $0x988] sm:$0xff]
        %v2001 = vld [vmem:[#allocation14 + $0x990] sm:$0xff]
        %v2002 = vld [vmem:[#allocation14 + $0x998] sm:$0xff]
        %v2003 = vld [vmem:[#allocation14 + $0x9a0] sm:$0xff]
        %v2004 = vld [vmem:[#allocation14 + $0x9a8] sm:$0xff]
        %v2005 = vld [vmem:[#allocation14 + $0x9b0] sm:$0xff]
        %v2006 = vld [vmem:[#allocation14 + $0x9b8] sm:$0xff]
        %v2007 = vld [vmem:[#allocation14 + $0x9c0] sm:$0xff]
        %v2008 = vld [vmem:[#allocation14 + $0x9c8] sm:$0xff]
        %v2009 = vld [vmem:[#allocation14 + $0x9d0] sm:$0xff]
        %v2010 = vld [vmem:[#allocation14 + $0x9d8] sm:$0xff]
        %v2011 = vld [vmem:[#allocation14 + $0x9e0] sm:$0xff]
        %v2012 = vld [vmem:[#allocation14 + $0x9e8] sm:$0xff]
        %v2013 = vld [vmem:[#allocation14 + $0x9f0] sm:$0xff]
        %v2014 = vld [vmem:[#allocation14 + $0x9f8] sm:$0xff]
        %v2015 = vld [vmem:[#allocation14 + $0xa00] sm:$0xff]
        %v2016 = vld [vmem:[#allocation14 + $0xa08] sm:$0xff]
        %v2017 = vld [vmem:[#allocation14 + $0xa10] sm:$0xff]
        %v2018 = vld [vmem:[#allocation14 + $0xa18] sm:$0xff]
        %v2019 = vld [vmem:[#allocation14 + $0xa20] sm:$0xff]
        %v2020 = vld [vmem:[#allocation14 + $0xa28] sm:$0xff]
        %v2021 = vld [vmem:[#allocation14 + $0xa30] sm:$0xff]
        %v2022 = vld [vmem:[#allocation14 + $0xa38] sm:$0xff]
        %v2023 = vld [vmem:[#allocation14 + $0xa40] sm:$0xff]
        %v2024 = vld [vmem:[#allocation14 + $0xa48] sm:$0xff]
        %v2025 = vld [vmem:[#allocation14 + $0xa50] sm:$0xff]
        %v2026 = vld [vmem:[#allocation14 + $0xa58] sm:$0xff]
        %v2027 = vld [vmem:[#allocation14 + $0xa60] sm:$0xff]
        %v2028 = vld [vmem:[#allocation14 + $0xa68] sm:$0xff]
        %v2029 = vld [vmem:[#allocation14 + $0xa70] sm:$0xff]
        %v2030 = vld [vmem:[#allocation14 + $0xa78] sm:$0xff]
        %v2031 = vld [vmem:[#allocation14 + $0xa80] sm:$0xff]
        %v2032 = vld [vmem:[#allocation14 + $0xa88] sm:$0xff]
        %v2033 = vld [vmem:[#allocation14 + $0xa90] sm:$0xff]
        %v2034 = vld [vmem:[#allocation14 + $0xa98] sm:$0xff]
        %v2035 = vld [vmem:[#allocation14 + $0xaa0] sm:$0xff]
        %v2036 = vld [vmem:[#allocation14 + $0xaa8] sm:$0xff]
        %v2037 = vld [vmem:[#allocation14 + $0xab0] sm:$0xff]
        %v2038 = vld [vmem:[#allocation14 + $0xab8] sm:$0xff]
        %v2039 = vld [vmem:[#allocation14 + $0xac0] sm:$0xff]
        %v2040 = vld [vmem:[#allocation14 + $0xac8] sm:$0xff]
        %v2041 = vld [vmem:[#allocation14 + $0xad0] sm:$0xff]
        %v2042 = vld [vmem:[#allocation14 + $0xad8] sm:$0xff]
        %v2043 = vld [vmem:[#allocation14 + $0xae0] sm:$0xff]
        %v2044 = vld [vmem:[#allocation14 + $0xae8] sm:$0xff]
        %v2045 = vld [vmem:[#allocation14 + $0xaf0] sm:$0xff]
        %v2046 = vld [vmem:[#allocation14 + $0xaf8] sm:$0xff]
        %v2047 = vld [vmem:[#allocation14 + $0xb00] sm:$0xff]
        %v2048 = vld [vmem:[#allocation14 + $0xb08] sm:$0xff]
        %v2049 = vld [vmem:[#allocation14 + $0xb10] sm:$0xff]
        %v2050 = vld [vmem:[#allocation14 + $0xb18] sm:$0xff]
        %v2051 = vld [vmem:[#allocation14 + $0xb20] sm:$0xff]
        %v2052 = vld [vmem:[#allocation14 + $0xb28] sm:$0xff]
        %v2053 = vld [vmem:[#allocation14 + $0xb30] sm:$0xff]
        %v2054 = vld [vmem:[#allocation14 + $0xb38] sm:$0xff]
        %v2055 = vld [vmem:[#allocation14 + $0xb40] sm:$0xff]
        %v2056 = vld [vmem:[#allocation14 + $0xb48] sm:$0xff]
        %v2057 = vld [vmem:[#allocation14 + $0xb50] sm:$0xff]
        %v2058 = vld [vmem:[#allocation14 + $0xb58] sm:$0xff]
        %v2059 = vld [vmem:[#allocation14 + $0xb60] sm:$0xff]
        %v2060 = vld [vmem:[#allocation14 + $0xb68] sm:$0xff]
        %v2061 = vld [vmem:[#allocation14 + $0xb70] sm:$0xff]
        %v2062 = vld [vmem:[#allocation14 + $0xb78] sm:$0xff]
        %v2063 = vld [vmem:[#allocation14 + $0xb80] sm:$0xff]
        %v2064 = vld [vmem:[#allocation14 + $0xb88] sm:$0xff]
        %v2065 = vld [vmem:[#allocation14 + $0xb90] sm:$0xff]
        %v2066 = vld [vmem:[#allocation14 + $0xb98] sm:$0xff]
        %v2067 = vld [vmem:[#allocation14 + $0xba0] sm:$0xff]
        %v2068 = vld [vmem:[#allocation14 + $0xba8] sm:$0xff]
        %v2069 = vld [vmem:[#allocation14 + $0xbb0] sm:$0xff]
        %v2070 = vld [vmem:[#allocation14 + $0xbb8] sm:$0xff]
        %v2071 = vld [vmem:[#allocation14 + $0xbc0] sm:$0xff]
        %v2072 = vld [vmem:[#allocation14 + $0xbc8] sm:$0xff]
        %v2073 = vld [vmem:[#allocation14 + $0xbd0] sm:$0xff]
        %v2074 = vld [vmem:[#allocation14 + $0xbd8] sm:$0xff]
        %v2075 = vld [vmem:[#allocation14 + $0xbe0] sm:$0xff]
        %v2076 = vld [vmem:[#allocation14 + $0xbe8] sm:$0xff]
        %v2077 = vld [vmem:[#allocation14 + $0xbf0] sm:$0xff]
        %v2078 = vld [vmem:[#allocation14 + $0xbf8] sm:$0xff]
        %v2079 = vld [vmem:[#allocation14 + $0xc00] sm:$0xff]
        %v2080 = vld [vmem:[#allocation14 + $0xc08] sm:$0xff]
        %v2081 = vld [vmem:[#allocation14 + $0xc10] sm:$0xff]
        %v2082 = vld [vmem:[#allocation14 + $0xc18] sm:$0xff]
        %v2083 = vld [vmem:[#allocation14 + $0xc20] sm:$0xff]
        %v2084 = vld [vmem:[#allocation14 + $0xc28] sm:$0xff]
        %v2085 = vld [vmem:[#allocation14 + $0xc30] sm:$0xff]
        %v2086 = vld [vmem:[#allocation14 + $0xc38] sm:$0xff]
        %v2087 = vld [vmem:[#allocation14 + $0xc40] sm:$0xff]
        %v2088 = vld [vmem:[#allocation14 + $0xc48] sm:$0xff]
        %v2089 = vld [vmem:[#allocation14 + $0xc50] sm:$0xff]
        %v2090 = vld [vmem:[#allocation14 + $0xc58] sm:$0xff]
        %v2091 = vld [vmem:[#allocation14 + $0xc60] sm:$0xff]
        %v2092 = vld [vmem:[#allocation14 + $0xc68] sm:$0xff]
        %v2093 = vld [vmem:[#allocation14 + $0xc70] sm:$0xff]
        %v2094 = vld [vmem:[#allocation14 + $0xc78] sm:$0xff]
        %v2095 = vld [vmem:[#allocation14 + $0xc80] sm:$0xff]
        %v2096 = vld [vmem:[#allocation14 + $0xc88] sm:$0xff]
        %v2097 = vld [vmem:[#allocation14 + $0xc90] sm:$0xff]
        %v2098 = vld [vmem:[#allocation14 + $0xc98] sm:$0xff]
        %v2099 = vld [vmem:[#allocation14 + $0xca0] sm:$0xff]
        %v2100 = vld [vmem:[#allocation14 + $0xca8] sm:$0xff]
        %v2101 = vld [vmem:[#allocation14 + $0xcb0] sm:$0xff]
        %v2102 = vld [vmem:[#allocation14 + $0xcb8] sm:$0xff]
        %v2103 = vld [vmem:[#allocation14 + $0xcc0] sm:$0xff]
        %v2104 = vld [vmem:[#allocation14 + $0xcc8] sm:$0xff]
        %v2105 = vld [vmem:[#allocation14 + $0xcd0] sm:$0xff]
        %v2106 = vld [vmem:[#allocation14 + $0xcd8] sm:$0xff]
        %v2107 = vld [vmem:[#allocation14 + $0xce0] sm:$0xff]
        %v2108 = vld [vmem:[#allocation14 + $0xce8] sm:$0xff]
        %v2109 = vld [vmem:[#allocation14 + $0xcf0] sm:$0xff]
        %v2110 = vld [vmem:[#allocation14 + $0xcf8] sm:$0xff]
        %v2111 = vld [vmem:[#allocation14 + $0xd00] sm:$0xff]
        %v2112 = vld [vmem:[#allocation14 + $0xd08] sm:$0xff]
        %v2113 = vld [vmem:[#allocation14 + $0xd10] sm:$0xff]
        %v2114 = vld [vmem:[#allocation14 + $0xd18] sm:$0xff]
        %v2115 = vld [vmem:[#allocation14 + $0xd20] sm:$0xff]
        %v2116 = vld [vmem:[#allocation14 + $0xd28] sm:$0xff]
        %v2117 = vld [vmem:[#allocation14 + $0xd30] sm:$0xff]
        %v2118 = vld [vmem:[#allocation14 + $0xd38] sm:$0xff]
        %v2119 = vld [vmem:[#allocation14 + $0xd40] sm:$0xff]
        %v2120 = vld [vmem:[#allocation14 + $0xd48] sm:$0xff]
        %v2121 = vld [vmem:[#allocation14 + $0xd50] sm:$0xff]
        %v2122 = vld [vmem:[#allocation14 + $0xd58] sm:$0xff]
        %v2123 = vld [vmem:[#allocation14 + $0xd60] sm:$0xff]
        %v2124 = vld [vmem:[#allocation14 + $0xd68] sm:$0xff]
        %v2125 = vld [vmem:[#allocation14 + $0xd70] sm:$0xff]
        %v2126 = vld [vmem:[#allocation14 + $0xd78] sm:$0xff]
        %v2127 = vld [vmem:[#allocation14 + $0xd80] sm:$0xff]
        %v2128 = vld [vmem:[#allocation14 + $0xd88] sm:$0xff]
        %v2129 = vld [vmem:[#allocation14 + $0xd90] sm:$0xff]
        %v2130 = vld [vmem:[#allocation14 + $0xd98] sm:$0xff]
        %v2131 = vld [vmem:[#allocation14 + $0xda0] sm:$0xff]
        %v2132 = vld [vmem:[#allocation14 + $0xda8] sm:$0xff]
        %v2133 = vld [vmem:[#allocation14 + $0xdb0] sm:$0xff]
        %v2134 = vld [vmem:[#allocation14 + $0xdb8] sm:$0xff]
        %v2135 = vld [vmem:[#allocation14 + $0xdc0] sm:$0xff]
        %v2136 = vld [vmem:[#allocation14 + $0xdc8] sm:$0xff]
        %v2137 = vld [vmem:[#allocation14 + $0xdd0] sm:$0xff]
        %v2138 = vld [vmem:[#allocation14 + $0xdd8] sm:$0xff]
        %v2139 = vld [vmem:[#allocation14 + $0xde0] sm:$0xff]
        %v2140 = vld [vmem:[#allocation14 + $0xde8] sm:$0xff]
        %v2141 = vld [vmem:[#allocation14 + $0xdf0] sm:$0xff]
        %v2142 = vld [vmem:[#allocation14 + $0xdf8] sm:$0xff]
        %v2143 = vld [vmem:[#allocation14 + $0xe00] sm:$0xff]
        %v2144 = vld [vmem:[#allocation14 + $0xe08] sm:$0xff]
        %v2145 = vld [vmem:[#allocation14 + $0xe10] sm:$0xff]
        %v2146 = vld [vmem:[#allocation14 + $0xe18] sm:$0xff]
        %v2147 = vld [vmem:[#allocation14 + $0xe20] sm:$0xff]
        %v2148 = vld [vmem:[#allocation14 + $0xe28] sm:$0xff]
        %v2149 = vld [vmem:[#allocation14 + $0xe30] sm:$0xff]
        %v2150 = vld [vmem:[#allocation14 + $0xe38] sm:$0xff]
        %v2151 = vld [vmem:[#allocation14 + $0xe40] sm:$0xff]
        %v2152 = vld [vmem:[#allocation14 + $0xe48] sm:$0xff]
        %v2153 = vld [vmem:[#allocation14 + $0xe50] sm:$0xff]
        %v2154 = vld [vmem:[#allocation14 + $0xe58] sm:$0xff]
        %v2155 = vld [vmem:[#allocation14 + $0xe60] sm:$0xff]
        %v2156 = vld [vmem:[#allocation14 + $0xe68] sm:$0xff]
        %v2157 = vld [vmem:[#allocation14 + $0xe70] sm:$0xff]
        %v2158 = vld [vmem:[#allocation14 + $0xe78] sm:$0xff]
        %v2159 = vld [vmem:[#allocation14 + $0xe80] sm:$0xff]
        %v2160 = vld [vmem:[#allocation14 + $0xe88] sm:$0xff]
        %v2161 = vld [vmem:[#allocation14 + $0xe90] sm:$0xff]
        %v2162 = vld [vmem:[#allocation14 + $0xe98] sm:$0xff]
        %v2163 = vld [vmem:[#allocation14 + $0xea0] sm:$0xff]
        %v2164 = vld [vmem:[#allocation14 + $0xea8] sm:$0xff]
        %v2165 = vld [vmem:[#allocation14 + $0xeb0] sm:$0xff]
        %v2166 = vld [vmem:[#allocation14 + $0xeb8] sm:$0xff]
        %v2167 = vld [vmem:[#allocation14 + $0xec0] sm:$0xff]
        %v2168 = vld [vmem:[#allocation14 + $0xec8] sm:$0xff]
        %v2169 = vld [vmem:[#allocation14 + $0xed0] sm:$0xff]
        %v2170 = vld [vmem:[#allocation14 + $0xed8] sm:$0xff]
        %v2171 = vld [vmem:[#allocation14 + $0xee0] sm:$0xff]
        %v2172 = vld [vmem:[#allocation14 + $0xee8] sm:$0xff]
        %v2173 = vld [vmem:[#allocation14 + $0xef0] sm:$0xff]
        %v2174 = vld [vmem:[#allocation14 + $0xef8] sm:$0xff]
        %v2175 = vld [vmem:[#allocation14 + $0xf00] sm:$0xff]
        %v2176 = vld [vmem:[#allocation14 + $0xf08] sm:$0xff]
        %v2177 = vld [vmem:[#allocation14 + $0xf10] sm:$0xff]
        %v2178 = vld [vmem:[#allocation14 + $0xf18] sm:$0xff]
        %v2179 = vld [vmem:[#allocation14 + $0xf20] sm:$0xff]
        %v2180 = vld [vmem:[#allocation14 + $0xf28] sm:$0xff]
        %v2181 = vld [vmem:[#allocation14 + $0xf30] sm:$0xff]
        %v2182 = vld [vmem:[#allocation14 + $0xf38] sm:$0xff]
        %v2183 = vld [vmem:[#allocation14 + $0xf40] sm:$0xff]
        %v2184 = vld [vmem:[#allocation14 + $0xf48] sm:$0xff]
        %v2185 = vld [vmem:[#allocation14 + $0xf50] sm:$0xff]
        %v2186 = vld [vmem:[#allocation14 + $0xf58] sm:$0xff]
        %v2187 = vld [vmem:[#allocation14 + $0xf60] sm:$0xff]
        %v2188 = vld [vmem:[#allocation14 + $0xf68] sm:$0xff]
        %v2189 = vld [vmem:[#allocation14 + $0xf70] sm:$0xff]
        %v2190 = vld [vmem:[#allocation14 + $0xf78] sm:$0xff]
        %v2191 = vld [vmem:[#allocation14 + $0xf80] sm:$0xff]
        %v2192 = vld [vmem:[#allocation14 + $0xf88] sm:$0xff]
        %v2193 = vld [vmem:[#allocation14 + $0xf90] sm:$0xff]
        %v2194 = vld [vmem:[#allocation14 + $0xf98] sm:$0xff]
        %v2195 = vld [vmem:[#allocation14 + $0xfa0] sm:$0xff]
        %v2196 = vld [vmem:[#allocation14 + $0xfa8] sm:$0xff]
        %v2197 = vld [vmem:[#allocation14 + $0xfb0] sm:$0xff]
        %v2198 = vld [vmem:[#allocation14 + $0xfb8] sm:$0xff]
        %v2199 = vld [vmem:[#allocation14 + $0xfc0] sm:$0xff]
        %v2200 = vld [vmem:[#allocation14 + $0xfc8] sm:$0xff]
        %v2201 = vld [vmem:[#allocation14 + $0xfd0] sm:$0xff]
        %v2202 = vld [vmem:[#allocation14 + $0xfd8] sm:$0xff]
        %v2203 = vld [vmem:[#allocation14 + $0xfe0] sm:$0xff]
        %v2204 = vld [vmem:[#allocation14 + $0xfe8] sm:$0xff]
        %v2205 = vld [vmem:[#allocation14 + $0xff0] sm:$0xff]
        %v2206 = vld [vmem:[#allocation14 + $0xff8] sm:$0xff]
        %v2207 = vld [vmem:[#allocation14 + $0x1000] sm:$0xff]
        %v2208 = vld [vmem:[#allocation14 + $0x1008] sm:$0xff]
        %v2209 = vld [vmem:[#allocation14 + $0x1010] sm:$0xff]
        %v2210 = vld [vmem:[#allocation14 + $0x1018] sm:$0xff]
        %v2211 = vld [vmem:[#allocation14 + $0x1020] sm:$0xff]
        %v2212 = vld [vmem:[#allocation14 + $0x1028] sm:$0xff]
        %v2213 = vld [vmem:[#allocation14 + $0x1030] sm:$0xff]
        %v2214 = vld [vmem:[#allocation14 + $0x1038] sm:$0xff]
        %v2215 = vld [vmem:[#allocation14 + $0x1040] sm:$0xff]
        %v2216 = vld [vmem:[#allocation14 + $0x1048] sm:$0xff]
        %v2217 = vld [vmem:[#allocation14 + $0x1050] sm:$0xff]
        %v2218 = vld [vmem:[#allocation14 + $0x1058] sm:$0xff]
        %v2219 = vld [vmem:[#allocation14 + $0x1060] sm:$0xff]
        %v2220 = vld [vmem:[#allocation14 + $0x1068] sm:$0xff]
        %v2221 = vld [vmem:[#allocation14 + $0x1070] sm:$0xff]
        %v2222 = vld [vmem:[#allocation14 + $0x1078] sm:$0xff]
        %v2223 = vld [vmem:[#allocation14 + $0x1080] sm:$0xff]
        %v2224 = vld [vmem:[#allocation14 + $0x1088] sm:$0xff]
        %v2225 = vld [vmem:[#allocation14 + $0x1090] sm:$0xff]
        %v2226 = vld [vmem:[#allocation14 + $0x1098] sm:$0xff]
        %v2227 = vld [vmem:[#allocation14 + $0x10a0] sm:$0xff]
        %v2228 = vld [vmem:[#allocation14 + $0x10a8] sm:$0xff]
        %v2229 = vld [vmem:[#allocation14 + $0x10b0] sm:$0xff]
        %v2230 = vld [vmem:[#allocation14 + $0x10b8] sm:$0xff]
        %v2231 = vld [vmem:[#allocation14 + $0x10c0] sm:$0xff]
        %v2232 = vld [vmem:[#allocation14 + $0x10c8] sm:$0xff]
        %v2233 = vld [vmem:[#allocation14 + $0x10d0] sm:$0xff]
        %v2234 = vld [vmem:[#allocation14 + $0x10d8] sm:$0xff]
        %v2235 = vld [vmem:[#allocation14 + $0x10e0] sm:$0xff]
        %v2236 = vld [vmem:[#allocation14 + $0x10e8] sm:$0xff]
        %v2237 = vld [vmem:[#allocation14 + $0x10f0] sm:$0xff]
        %v2238 = vld [vmem:[#allocation14 + $0x10f8] sm:$0xff]
        %v2239 = vld [vmem:[#allocation14 + $0x1100] sm:$0xff]
        %v2240 = vld [vmem:[#allocation14 + $0x1108] sm:$0xff]
        %v2241 = vld [vmem:[#allocation14 + $0x1110] sm:$0xff]
        %v2242 = vld [vmem:[#allocation14 + $0x1118] sm:$0xff]
        %v2243 = vld [vmem:[#allocation14 + $0x1120] sm:$0xff]
        %v2244 = vld [vmem:[#allocation14 + $0x1128] sm:$0xff]
        %v2245 = vld [vmem:[#allocation14 + $0x1130] sm:$0xff]
        %v2246 = vld [vmem:[#allocation14 + $0x1138] sm:$0xff]
        %v2247 = vld [vmem:[#allocation14 + $0x1140] sm:$0xff]
        %v2248 = vld [vmem:[#allocation14 + $0x1148] sm:$0xff]
        %v2249 = vld [vmem:[#allocation14 + $0x1150] sm:$0xff]
        %v2250 = vld [vmem:[#allocation14 + $0x1158] sm:$0xff]
        %v2251 = vld [vmem:[#allocation14 + $0x1160] sm:$0xff]
        %v2252 = vld [vmem:[#allocation14 + $0x1168] sm:$0xff]
        %v2253 = vld [vmem:[#allocation14 + $0x1170] sm:$0xff]
        %v2254 = vld [vmem:[#allocation14 + $0x1178] sm:$0xff]
        %v2255 = vld [vmem:[#allocation14 + $0x1180] sm:$0xff]
        %v2256 = vld [vmem:[#allocation14 + $0x1188] sm:$0xff]
        %v2257 = vld [vmem:[#allocation14 + $0x1190] sm:$0xff]
        %v2258 = vld [vmem:[#allocation14 + $0x1198] sm:$0xff]
        %v2259 = vld [vmem:[#allocation14 + $0x11a0] sm:$0xff]
        %v2260 = vld [vmem:[#allocation14 + $0x11a8] sm:$0xff]
        %v2261 = vld [vmem:[#allocation14 + $0x11b0] sm:$0xff]
        %v2262 = vld [vmem:[#allocation14 + $0x11b8] sm:$0xff]
        %v2263 = vld [vmem:[#allocation14 + $0x11c0] sm:$0xff]
        %v2264 = vld [vmem:[#allocation14 + $0x11c8] sm:$0xff]
        %v2265 = vld [vmem:[#allocation14 + $0x11d0] sm:$0xff]
        %v2266 = vld [vmem:[#allocation14 + $0x11d8] sm:$0xff]
        %v2267 = vld [vmem:[#allocation14 + $0x11e0] sm:$0xff]
        %v2268 = vld [vmem:[#allocation14 + $0x11e8] sm:$0xff]
        %v2269 = vld [vmem:[#allocation14 + $0x11f0] sm:$0xff]
        %v2270 = vld [vmem:[#allocation14 + $0x11f8] sm:$0xff]
        %v2271 = vld [vmem:[#allocation14 + $0x1200] sm:$0xff]
        %v2272 = vld [vmem:[#allocation14 + $0x1208] sm:$0xff]
        %v2273 = vld [vmem:[#allocation14 + $0x1210] sm:$0xff]
        %v2274 = vld [vmem:[#allocation14 + $0x1218] sm:$0xff]
        %v2275 = vld [vmem:[#allocation14 + $0x1220] sm:$0xff]
        %v2276 = vld [vmem:[#allocation14 + $0x1228] sm:$0xff]
        %v2277 = vld [vmem:[#allocation14 + $0x1230] sm:$0xff]
        %v2278 = vld [vmem:[#allocation14 + $0x1238] sm:$0xff]
        %v2279 = vld [vmem:[#allocation14 + $0x1240] sm:$0xff]
        %v2280 = vld [vmem:[#allocation14 + $0x1248] sm:$0xff]
        %v2281 = vld [vmem:[#allocation14 + $0x1250] sm:$0xff]
        %v2282 = vld [vmem:[#allocation14 + $0x1258] sm:$0xff]
        %v2283 = vld [vmem:[#allocation14 + $0x1260] sm:$0xff]
        %v2284 = vld [vmem:[#allocation14 + $0x1268] sm:$0xff]
        %v2285 = vld [vmem:[#allocation14 + $0x1270] sm:$0xff]
        %v2286 = vld [vmem:[#allocation14 + $0x1278] sm:$0xff]
        %v2287 = vld [vmem:[#allocation14 + $0x1280] sm:$0xff]
        %v2288 = vld [vmem:[#allocation14 + $0x1288] sm:$0xff]
        %v2289 = vld [vmem:[#allocation14 + $0x1290] sm:$0xff]
        %v2290 = vld [vmem:[#allocation14 + $0x1298] sm:$0xff]
        %v2291 = vld [vmem:[#allocation14 + $0x12a0] sm:$0xff]
        %v2292 = vld [vmem:[#allocation14 + $0x12a8] sm:$0xff]
        %v2293 = vld [vmem:[#allocation14 + $0x12b0] sm:$0xff]
        %v2294 = vld [vmem:[#allocation14 + $0x12b8] sm:$0xff]
        %v2295 = vld [vmem:[#allocation14 + $0x12c0] sm:$0xff]
        %v2296 = vld [vmem:[#allocation14 + $0x12c8] sm:$0xff]
        %v2297 = vld [vmem:[#allocation14 + $0x12d0] sm:$0xff]
        %v2298 = vld [vmem:[#allocation14 + $0x12d8] sm:$0xff]
        %v2299 = vld [vmem:[#allocation14 + $0x12e0] sm:$0xff]
        %v2300 = vld [vmem:[#allocation14 + $0x12e8] sm:$0xff]
        %v2301 = vld [vmem:[#allocation14 + $0x12f0] sm:$0xff]
        %v2302 = vld [vmem:[#allocation14 + $0x12f8] sm:$0xff]
        %v2303 = vld [vmem:[#allocation14 + $0x1300] sm:$0xff]
        %v2304 = vld [vmem:[#allocation14 + $0x1308] sm:$0xff]
        %v2305 = vld [vmem:[#allocation14 + $0x1310] sm:$0xff]
        %v2306 = vld [vmem:[#allocation14 + $0x1318] sm:$0xff]
        %v2307 = vld [vmem:[#allocation14 + $0x1320] sm:$0xff]
        %v2308 = vld [vmem:[#allocation14 + $0x1328] sm:$0xff]
        %v2309 = vld [vmem:[#allocation14 + $0x1330] sm:$0xff]
        %v2310 = vld [vmem:[#allocation14 + $0x1338] sm:$0xff]
        %v2311 = vld [vmem:[#allocation14 + $0x1340] sm:$0xff]
        %v2312 = vld [vmem:[#allocation14 + $0x1348] sm:$0xff]
        %v2313 = vld [vmem:[#allocation14 + $0x1350] sm:$0xff]
        %v2314 = vld [vmem:[#allocation14 + $0x1358] sm:$0xff]
        %v2315 = vld [vmem:[#allocation14 + $0x1360] sm:$0xff]
        %v2316 = vld [vmem:[#allocation14 + $0x1368] sm:$0xff]
        %v2317 = vld [vmem:[#allocation14 + $0x1370] sm:$0xff]
        %v2318 = vld [vmem:[#allocation14 + $0x1378] sm:$0xff]
        %v2319 = vld [vmem:[#allocation14 + $0x1380] sm:$0xff]
        %v2320 = vld [vmem:[#allocation14 + $0x1388] sm:$0xff]
        %v2321 = vld [vmem:[#allocation14 + $0x1390] sm:$0xff]
        %v2322 = vld [vmem:[#allocation14 + $0x1398] sm:$0xff]
        %v2323 = vld [vmem:[#allocation14 + $0x13a0] sm:$0xff]
        %v2324 = vld [vmem:[#allocation14 + $0x13a8] sm:$0xff]
        %v2325 = vld [vmem:[#allocation14 + $0x13b0] sm:$0xff]
        %v2326 = vld [vmem:[#allocation14 + $0x13b8] sm:$0xff]
        %v2327 = vld [vmem:[#allocation14 + $0x13c0] sm:$0xff]
        %v2328 = vld [vmem:[#allocation14 + $0x13c8] sm:$0xff]
        %v2329 = vld [vmem:[#allocation14 + $0x13d0] sm:$0xff]
        %v2330 = vld [vmem:[#allocation14 + $0x13d8] sm:$0xff]
        %v2331 = vld [vmem:[#allocation14 + $0x13e0] sm:$0xff]
        %v2332 = vld [vmem:[#allocation14 + $0x13e8] sm:$0xff]
        %v2333 = vld [vmem:[#allocation14 + $0x13f0] sm:$0xff]
        %v2334 = vld [vmem:[#allocation14 + $0x13f8] sm:$0xff]
        %2335 = vmatprep.subr.mxu0 %v1696
        %2336 = vmatpush1.msra.mxu0 %v1695
        %2337 = vmatprep.subr.mxu0 %v1716
        %2338 = vmatpush1.msra.mxu0 %v1715
        %2339 = vmatprep.subr.mxu0 %v1736
        %2340 = vmatpush1.msra.mxu0 %v1735
        %2341 = vmatprep.subr.mxu0 %v1756
        %2342 = vmatpush1.msra.mxu0 %v1755
        %2343 = vmatprep.subr.mxu0 %v1776
        %2344 = vmatpush1.msra.mxu0 %v1775
        %2345 = vmatprep.subr.mxu0 %v1796
        %2346 = vmatpush1.msra.mxu0 %v1795
        %2347 = vmatprep.subr.mxu0 %v1816
        %2348 = vmatpush1.msra.mxu0 %v1815
        %2349 = vmatprep.subr.mxu0 %v1836
        %2350 = vmatpush1.msra.mxu0 %v1835
        %2351 = vmatprep.subr.mxu0 %v1856
        %2352 = vmatpush1.msra.mxu0 %v1855
        %2353 = vmatprep.subr.mxu0 %v1876
        %2354 = vmatpush1.msra.mxu0 %v1875
        %2355 = vmatprep.subr.mxu0 %v1896
        %2356 = vmatpush1.msra.mxu0 %v1895
        %2357 = vmatprep.subr.mxu0 %v1916
        %2358 = vmatpush1.msra.mxu0 %v1915
        %2359 = vmatprep.subr.mxu0 %v1936
        %2360 = vmatpush1.msra.mxu0 %v1935
        %2361 = vmatprep.subr.mxu0 %v1956
        %2362 = vmatpush1.msra.mxu0 %v1955
        %2363 = vmatprep.subr.mxu0 %v1976
        %2364 = vmatpush1.msra.mxu0 %v1975
        %2365 = vmatprep.subr.mxu0 %v1996
        %2366 = vmatpush1.msra.mxu0 %v1995
        %2367 = vmatprep.subr.mxu0 %v2016
        %2368 = vmatpush1.msra.mxu0 %v2015
        %2369 = vmatprep.subr.mxu0 %v2036
        %2370 = vmatpush1.msra.mxu0 %v2035
        %2371 = vmatprep.subr.mxu0 %v2056
        %2372 = vmatpush1.msra.mxu0 %v2055
        %2373 = vmatprep.subr.mxu0 %v2076
        %2374 = vmatpush1.msra.mxu0 %v2075
        %2375 = vmatprep.subr.mxu0 %v2096
        %2376 = vmatpush1.msra.mxu0 %v2095
        %2377 = vmatprep.subr.mxu0 %v2116
        %2378 = vmatpush1.msra.mxu0 %v2115
        %2379 = vmatprep.subr.mxu0 %v2136
        %2380 = vmatpush1.msra.mxu0 %v2135
        %2381 = vmatprep.subr.mxu0 %v2156
        %2382 = vmatpush1.msra.mxu0 %v2155
        %2383 = vmatprep.subr.mxu0 %v2176
        %2384 = vmatpush1.msra.mxu0 %v2175
        %2385 = vmatprep.subr.mxu0 %v2196
        %2386 = vmatpush1.msra.mxu0 %v2195
        %2387 = vmatprep.subr.mxu0 %v2216
        %2388 = vmatpush1.msra.mxu0 %v2215
        %2389 = vmatprep.subr.mxu0 %v2236
        %2390 = vmatpush1.msra.mxu0 %v2235
        %2391 = vmatprep.subr.mxu0 %v2256
        %2392 = vmatpush1.msra.mxu0 %v2255
        %2393 = vmatprep.subr.mxu0 %v2276
        %2394 = vmatpush1.msra.mxu0 %v2275
        %2395 = vmatprep.subr.mxu0 %v2296
        %2396 = vmatpush1.msra.mxu0 %v2295
        %2397 = vmatprep.subr.mxu0 %v2316
        %2398 = vmatpush1.msra.mxu0 %v2315
        %2399 = vmatprep.mubr.f32.mxu0 %v1694
        %2400 = vmatmul.mubr.f32.gmra.mrb[0].mxu0 %v1693
        %v2401 = vpop.f32.mrb[0].mxu0
        %v2402 = vadd.f32 0.0, %v2401
        %v2403 = vpop.f32.mrb[0].mxu0
        %v2404 = vadd.f32 0.0, %v2403
        %2405 = vdwg.mxu0
        %2406 = vmatprep.subr.mxu0 %v1698
        %2407 = vmatpush1.msra.mxu0 %v1697
        %2408 = vmatprep.subr.mxu0 %v1718
        %2409 = vmatpush1.msra.mxu0 %v1717
        %2410 = vmatprep.subr.mxu0 %v1738
        %2411 = vmatpush1.msra.mxu0 %v1737
        %2412 = vmatprep.subr.mxu0 %v1758
        %2413 = vmatpush1.msra.mxu0 %v1757
        %2414 = vmatprep.subr.mxu0 %v1778
        %2415 = vmatpush1.msra.mxu0 %v1777
        %2416 = vmatprep.subr.mxu0 %v1798
        %2417 = vmatpush1.msra.mxu0 %v1797
        %2418 = vmatprep.subr.mxu0 %v1818
        %2419 = vmatpush1.msra.mxu0 %v1817
        %2420 = vmatprep.subr.mxu0 %v1838
        %2421 = vmatpush1.msra.mxu0 %v1837
        %2422 = vmatprep.subr.mxu0 %v1858
        %2423 = vmatpush1.msra.mxu0 %v1857
        %2424 = vmatprep.subr.mxu0 %v1878
        %2425 = vmatpush1.msra.mxu0 %v1877
        %2426 = vmatprep.subr.mxu0 %v1898
        %2427 = vmatpush1.msra.mxu0 %v1897
        %2428 = vmatprep.subr.mxu0 %v1918
        %2429 = vmatpush1.msra.mxu0 %v1917
        %2430 = vmatprep.subr.mxu0 %v1938
        %2431 = vmatpush1.msra.mxu0 %v1937
        %2432 = vmatprep.subr.mxu0 %v1958
        %2433 = vmatpush1.msra.mxu0 %v1957
        %2434 = vmatprep.subr.mxu0 %v1978
        %2435 = vmatpush1.msra.mxu0 %v1977
        %2436 = vmatprep.subr.mxu0 %v1998
        %2437 = vmatpush1.msra.mxu0 %v1997
        %2438 = vmatprep.subr.mxu0 %v2018
        %2439 = vmatpush1.msra.mxu0 %v2017
        %2440 = vmatprep.subr.mxu0 %v2038
        %2441 = vmatpush1.msra.mxu0 %v2037
        %2442 = vmatprep.subr.mxu0 %v2058
        %2443 = vmatpush1.msra.mxu0 %v2057
        %2444 = vmatprep.subr.mxu0 %v2078
        %2445 = vmatpush1.msra.mxu0 %v2077
        %2446 = vmatprep.subr.mxu0 %v2098
        %2447 = vmatpush1.msra.mxu0 %v2097
        %2448 = vmatprep.subr.mxu0 %v2118
        %2449 = vmatpush1.msra.mxu0 %v2117
        %2450 = vmatprep.subr.mxu0 %v2138
        %2451 = vmatpush1.msra.mxu0 %v2137
        %2452 = vmatprep.subr.mxu0 %v2158
        %2453 = vmatpush1.msra.mxu0 %v2157
        %2454 = vmatprep.subr.mxu0 %v2178
        %2455 = vmatpush1.msra.mxu0 %v2177
        %2456 = vmatprep.subr.mxu0 %v2198
        %2457 = vmatpush1.msra.mxu0 %v2197
        %2458 = vmatprep.subr.mxu0 %v2218
        %2459 = vmatpush1.msra.mxu0 %v2217
        %2460 = vmatprep.subr.mxu0 %v2238
        %2461 = vmatpush1.msra.mxu0 %v2237
        %2462 = vmatprep.subr.mxu0 %v2258
        %2463 = vmatpush1.msra.mxu0 %v2257
        %2464 = vmatprep.subr.mxu0 %v2278
        %2465 = vmatpush1.msra.mxu0 %v2277
        %2466 = vmatprep.subr.mxu0 %v2298
        %2467 = vmatpush1.msra.mxu0 %v2297
        %2468 = vmatprep.subr.mxu0 %v2318
        %2469 = vmatpush1.msra.mxu0 %v2317
        %2470 = vmatprep.mubr.f32.mxu0 %v1694
        %2471 = vmatmul.mubr.f32.gmra.mrb[0].mxu0 %v1693
        %v2472 = vpop.f32.mrb[0].mxu0
        %v2473 = vadd.f32 0.0, %v2472
        %v2474 = vpop.f32.mrb[0].mxu0
        %v2475 = vadd.f32 0.0, %v2474
        %2476 = vdwg.mxu0
        %2477 = vmatprep.subr.mxu0 %v1700
        %2478 = vmatpush1.msra.mxu0 %v1699
        %2479 = vmatprep.subr.mxu0 %v1720
        %2480 = vmatpush1.msra.mxu0 %v1719
        %2481 = vmatprep.subr.mxu0 %v1740
        %2482 = vmatpush1.msra.mxu0 %v1739
        %2483 = vmatprep.subr.mxu0 %v1760
        %2484 = vmatpush1.msra.mxu0 %v1759
        %2485 = vmatprep.subr.mxu0 %v1780
        %2486 = vmatpush1.msra.mxu0 %v1779
        %2487 = vmatprep.subr.mxu0 %v1800
        %2488 = vmatpush1.msra.mxu0 %v1799
        %2489 = vmatprep.subr.mxu0 %v1820
        %2490 = vmatpush1.msra.mxu0 %v1819
        %2491 = vmatprep.subr.mxu0 %v1840
        %2492 = vmatpush1.msra.mxu0 %v1839
        %2493 = vmatprep.subr.mxu0 %v1860
        %2494 = vmatpush1.msra.mxu0 %v1859
        %2495 = vmatprep.subr.mxu0 %v1880
        %2496 = vmatpush1.msra.mxu0 %v1879
        %2497 = vmatprep.subr.mxu0 %v1900
        %2498 = vmatpush1.msra.mxu0 %v1899
        %2499 = vmatprep.subr.mxu0 %v1920
        %2500 = vmatpush1.msra.mxu0 %v1919
        %2501 = vmatprep.subr.mxu0 %v1940
        %2502 = vmatpush1.msra.mxu0 %v1939
        %2503 = vmatprep.subr.mxu0 %v1960
        %2504 = vmatpush1.msra.mxu0 %v1959
        %2505 = vmatprep.subr.mxu0 %v1980
        %2506 = vmatpush1.msra.mxu0 %v1979
        %2507 = vmatprep.subr.mxu0 %v2000
        %2508 = vmatpush1.msra.mxu0 %v1999
        %2509 = vmatprep.subr.mxu0 %v2020
        %2510 = vmatpush1.msra.mxu0 %v2019
        %2511 = vmatprep.subr.mxu0 %v2040
        %2512 = vmatpush1.msra.mxu0 %v2039
        %2513 = vmatprep.subr.mxu0 %v2060
        %2514 = vmatpush1.msra.mxu0 %v2059
        %2515 = vmatprep.subr.mxu0 %v2080
        %2516 = vmatpush1.msra.mxu0 %v2079
        %2517 = vmatprep.subr.mxu0 %v2100
        %2518 = vmatpush1.msra.mxu0 %v2099
        %2519 = vmatprep.subr.mxu0 %v2120
        %2520 = vmatpush1.msra.mxu0 %v2119
        %2521 = vmatprep.subr.mxu0 %v2140
        %2522 = vmatpush1.msra.mxu0 %v2139
        %2523 = vmatprep.subr.mxu0 %v2160
        %2524 = vmatpush1.msra.mxu0 %v2159
        %2525 = vmatprep.subr.mxu0 %v2180
        %2526 = vmatpush1.msra.mxu0 %v2179
        %2527 = vmatprep.subr.mxu0 %v2200
        %2528 = vmatpush1.msra.mxu0 %v2199
        %2529 = vmatprep.subr.mxu0 %v2220
        %2530 = vmatpush1.msra.mxu0 %v2219
        %2531 = vmatprep.subr.mxu0 %v2240
        %2532 = vmatpush1.msra.mxu0 %v2239
        %2533 = vmatprep.subr.mxu0 %v2260
        %2534 = vmatpush1.msra.mxu0 %v2259
        %2535 = vmatprep.subr.mxu0 %v2280
        %2536 = vmatpush1.msra.mxu0 %v2279
        %2537 = vmatprep.subr.mxu0 %v2300
        %2538 = vmatpush1.msra.mxu0 %v2299
        %2539 = vmatprep.subr.mxu0 %v2320
        %2540 = vmatpush1.msra.mxu0 %v2319
        %2541 = vmatprep.mubr.f32.mxu0 %v1694
        %2542 = vmatmul.mubr.f32.gmra.mrb[0].mxu0 %v1693
        %v2543 = vpop.f32.mrb[0].mxu0
        %v2544 = vadd.f32 0.0, %v2543
        %v2545 = vpop.f32.mrb[0].mxu0
        %v2546 = vadd.f32 0.0, %v2545
        %2547 = vdwg.mxu0
        %2548 = vmatprep.subr.mxu0 %v1702
        %2549 = vmatpush1.msra.mxu0 %v1701
        %2550 = vmatprep.subr.mxu0 %v1722
        %2551 = vmatpush1.msra.mxu0 %v1721
        %2552 = vmatprep.subr.mxu0 %v1742
        %2553 = vmatpush1.msra.mxu0 %v1741
        %2554 = vmatprep.subr.mxu0 %v1762
        %2555 = vmatpush1.msra.mxu0 %v1761
        %2556 = vmatprep.subr.mxu0 %v1782
        %2557 = vmatpush1.msra.mxu0 %v1781
        %2558 = vmatprep.subr.mxu0 %v1802
        %2559 = vmatpush1.msra.mxu0 %v1801
        %2560 = vmatprep.subr.mxu0 %v1822
        %2561 = vmatpush1.msra.mxu0 %v1821
        %2562 = vmatprep.subr.mxu0 %v1842
        %2563 = vmatpush1.msra.mxu0 %v1841
        %2564 = vmatprep.subr.mxu0 %v1862
        %2565 = vmatpush1.msra.mxu0 %v1861
        %2566 = vmatprep.subr.mxu0 %v1882
        %2567 = vmatpush1.msra.mxu0 %v1881
        %2568 = vmatprep.subr.mxu0 %v1902
        %2569 = vmatpush1.msra.mxu0 %v1901
        %2570 = vmatprep.subr.mxu0 %v1922
        %2571 = vmatpush1.msra.mxu0 %v1921
        %2572 = vmatprep.subr.mxu0 %v1942
        %2573 = vmatpush1.msra.mxu0 %v1941
        %2574 = vmatprep.subr.mxu0 %v1962
        %2575 = vmatpush1.msra.mxu0 %v1961
        %2576 = vmatprep.subr.mxu0 %v1982
        %2577 = vmatpush1.msra.mxu0 %v1981
        %2578 = vmatprep.subr.mxu0 %v2002
        %2579 = vmatpush1.msra.mxu0 %v2001
        %2580 = vmatprep.subr.mxu0 %v2022
        %2581 = vmatpush1.msra.mxu0 %v2021
        %2582 = vmatprep.subr.mxu0 %v2042
        %2583 = vmatpush1.msra.mxu0 %v2041
        %2584 = vmatprep.subr.mxu0 %v2062
        %2585 = vmatpush1.msra.mxu0 %v2061
        %2586 = vmatprep.subr.mxu0 %v2082
        %2587 = vmatpush1.msra.mxu0 %v2081
        %2588 = vmatprep.subr.mxu0 %v2102
        %2589 = vmatpush1.msra.mxu0 %v2101
        %2590 = vmatprep.subr.mxu0 %v2122
        %2591 = vmatpush1.msra.mxu0 %v2121
        %2592 = vmatprep.subr.mxu0 %v2142
        %2593 = vmatpush1.msra.mxu0 %v2141
        %2594 = vmatprep.subr.mxu0 %v2162
        %2595 = vmatpush1.msra.mxu0 %v2161
        %2596 = vmatprep.subr.mxu0 %v2182
        %2597 = vmatpush1.msra.mxu0 %v2181
        %2598 = vmatprep.subr.mxu0 %v2202
        %2599 = vmatpush1.msra.mxu0 %v2201
        %2600 = vmatprep.subr.mxu0 %v2222
        %2601 = vmatpush1.msra.mxu0 %v2221
        %2602 = vmatprep.subr.mxu0 %v2242
        %2603 = vmatpush1.msra.mxu0 %v2241
        %2604 = vmatprep.subr.mxu0 %v2262
        %2605 = vmatpush1.msra.mxu0 %v2261
        %2606 = vmatprep.subr.mxu0 %v2282
        %2607 = vmatpush1.msra.mxu0 %v2281
        %2608 = vmatprep.subr.mxu0 %v2302
        %2609 = vmatpush1.msra.mxu0 %v2301
        %2610 = vmatprep.subr.mxu0 %v2322
        %2611 = vmatpush1.msra.mxu0 %v2321
        %2612 = vmatprep.mubr.f32.mxu0 %v1694
        %2613 = vmatmul.mubr.f32.gmra.mrb[0].mxu0 %v1693
        %v2614 = vpop.f32.mrb[0].mxu0
        %v2615 = vadd.f32 0.0, %v2614
        %v2616 = vpop.f32.mrb[0].mxu0
        %v2617 = vadd.f32 0.0, %v2616
        %2618 = vdwg.mxu0
        %2619 = vmatprep.subr.mxu0 %v1704
        %2620 = vmatpush1.msra.mxu0 %v1703
        %2621 = vmatprep.subr.mxu0 %v1724
        %2622 = vmatpush1.msra.mxu0 %v1723
        %2623 = vmatprep.subr.mxu0 %v1744
        %2624 = vmatpush1.msra.mxu0 %v1743
        %2625 = vmatprep.subr.mxu0 %v1764
        %2626 = vmatpush1.msra.mxu0 %v1763
        %2627 = vmatprep.subr.mxu0 %v1784
        %2628 = vmatpush1.msra.mxu0 %v1783
        %2629 = vmatprep.subr.mxu0 %v1804
        %2630 = vmatpush1.msra.mxu0 %v1803
        %2631 = vmatprep.subr.mxu0 %v1824
        %2632 = vmatpush1.msra.mxu0 %v1823
        %2633 = vmatprep.subr.mxu0 %v1844
        %2634 = vmatpush1.msra.mxu0 %v1843
        %2635 = vmatprep.subr.mxu0 %v1864
        %2636 = vmatpush1.msra.mxu0 %v1863
        %2637 = vmatprep.subr.mxu0 %v1884
        %2638 = vmatpush1.msra.mxu0 %v1883
        %2639 = vmatprep.subr.mxu0 %v1904
        %2640 = vmatpush1.msra.mxu0 %v1903
        %2641 = vmatprep.subr.mxu0 %v1924
        %2642 = vmatpush1.msra.mxu0 %v1923
        %2643 = vmatprep.subr.mxu0 %v1944
        %2644 = vmatpush1.msra.mxu0 %v1943
        %2645 = vmatprep.subr.mxu0 %v1964
        %2646 = vmatpush1.msra.mxu0 %v1963
        %2647 = vmatprep.subr.mxu0 %v1984
        %2648 = vmatpush1.msra.mxu0 %v1983
        %2649 = vmatprep.subr.mxu0 %v2004
        %2650 = vmatpush1.msra.mxu0 %v2003
        %2651 = vmatprep.subr.mxu0 %v2024
        %2652 = vmatpush1.msra.mxu0 %v2023
        %2653 = vmatprep.subr.mxu0 %v2044
        %2654 = vmatpush1.msra.mxu0 %v2043
        %2655 = vmatprep.subr.mxu0 %v2064
        %2656 = vmatpush1.msra.mxu0 %v2063
        %2657 = vmatprep.subr.mxu0 %v2084
        %2658 = vmatpush1.msra.mxu0 %v2083
        %2659 = vmatprep.subr.mxu0 %v2104
        %2660 = vmatpush1.msra.mxu0 %v2103
        %2661 = vmatprep.subr.mxu0 %v2124
        %2662 = vmatpush1.msra.mxu0 %v2123
        %2663 = vmatprep.subr.mxu0 %v2144
        %2664 = vmatpush1.msra.mxu0 %v2143
        %2665 = vmatprep.subr.mxu0 %v2164
        %2666 = vmatpush1.msra.mxu0 %v2163
        %2667 = vmatprep.subr.mxu0 %v2184
        %2668 = vmatpush1.msra.mxu0 %v2183
        %2669 = vmatprep.subr.mxu0 %v2204
        %2670 = vmatpush1.msra.mxu0 %v2203
        %2671 = vmatprep.subr.mxu0 %v2224
        %2672 = vmatpush1.msra.mxu0 %v2223
        %2673 = vmatprep.subr.mxu0 %v2244
        %2674 = vmatpush1.msra.mxu0 %v2243
        %2675 = vmatprep.subr.mxu0 %v2264
        %2676 = vmatpush1.msra.mxu0 %v2263
        %2677 = vmatprep.subr.mxu0 %v2284
        %2678 = vmatpush1.msra.mxu0 %v2283
        %2679 = vmatprep.subr.mxu0 %v2304
        %2680 = vmatpush1.msra.mxu0 %v2303
        %2681 = vmatprep.subr.mxu0 %v2324
        %2682 = vmatpush1.msra.mxu0 %v2323
        %2683 = vmatprep.mubr.f32.mxu0 %v1694
        %2684 = vmatmul.mubr.f32.gmra.mrb[0].mxu0 %v1693
        %v2685 = vpop.f32.mrb[0].mxu0
        %v2686 = vadd.f32 0.0, %v2685
        %v2687 = vpop.f32.mrb[0].mxu0
        %v2688 = vadd.f32 0.0, %v2687
        %2689 = vdwg.mxu0
        %2690 = vmatprep.subr.mxu0 %v1706
        %2691 = vmatpush1.msra.mxu0 %v1705
        %2692 = vmatprep.subr.mxu0 %v1726
        %2693 = vmatpush1.msra.mxu0 %v1725
        %2694 = vmatprep.subr.mxu0 %v1746
        %2695 = vmatpush1.msra.mxu0 %v1745
        %2696 = vmatprep.subr.mxu0 %v1766
        %2697 = vmatpush1.msra.mxu0 %v1765
        %2698 = vmatprep.subr.mxu0 %v1786
        %2699 = vmatpush1.msra.mxu0 %v1785
        %2700 = vmatprep.subr.mxu0 %v1806
        %2701 = vmatpush1.msra.mxu0 %v1805
        %2702 = vmatprep.subr.mxu0 %v1826
        %2703 = vmatpush1.msra.mxu0 %v1825
        %2704 = vmatprep.subr.mxu0 %v1846
        %2705 = vmatpush1.msra.mxu0 %v1845
        %2706 = vmatprep.subr.mxu0 %v1866
        %2707 = vmatpush1.msra.mxu0 %v1865
        %2708 = vmatprep.subr.mxu0 %v1886
        %2709 = vmatpush1.msra.mxu0 %v1885
        %2710 = vmatprep.subr.mxu0 %v1906
        %2711 = vmatpush1.msra.mxu0 %v1905
        %2712 = vmatprep.subr.mxu0 %v1926
        %2713 = vmatpush1.msra.mxu0 %v1925
        %2714 = vmatprep.subr.mxu0 %v1946
        %2715 = vmatpush1.msra.mxu0 %v1945
        %2716 = vmatprep.subr.mxu0 %v1966
        %2717 = vmatpush1.msra.mxu0 %v1965
        %2718 = vmatprep.subr.mxu0 %v1986
        %2719 = vmatpush1.msra.mxu0 %v1985
        %2720 = vmatprep.subr.mxu0 %v2006
        %2721 = vmatpush1.msra.mxu0 %v2005
        %2722 = vmatprep.subr.mxu0 %v2026
        %2723 = vmatpush1.msra.mxu0 %v2025
        %2724 = vmatprep.subr.mxu0 %v2046
        %2725 = vmatpush1.msra.mxu0 %v2045
        %2726 = vmatprep.subr.mxu0 %v2066
        %2727 = vmatpush1.msra.mxu0 %v2065
        %2728 = vmatprep.subr.mxu0 %v2086
        %2729 = vmatpush1.msra.mxu0 %v2085
        %2730 = vmatprep.subr.mxu0 %v2106
        %2731 = vmatpush1.msra.mxu0 %v2105
        %2732 = vmatprep.subr.mxu0 %v2126
        %2733 = vmatpush1.msra.mxu0 %v2125
        %2734 = vmatprep.subr.mxu0 %v2146
        %2735 = vmatpush1.msra.mxu0 %v2145
        %2736 = vmatprep.subr.mxu0 %v2166
        %2737 = vmatpush1.msra.mxu0 %v2165
        %2738 = vmatprep.subr.mxu0 %v2186
        %2739 = vmatpush1.msra.mxu0 %v2185
        %2740 = vmatprep.subr.mxu0 %v2206
        %2741 = vmatpush1.msra.mxu0 %v2205
        %2742 = vmatprep.subr.mxu0 %v2226
        %2743 = vmatpush1.msra.mxu0 %v2225
        %2744 = vmatprep.subr.mxu0 %v2246
        %2745 = vmatpush1.msra.mxu0 %v2245
        %2746 = vmatprep.subr.mxu0 %v2266
        %2747 = vmatpush1.msra.mxu0 %v2265
        %2748 = vmatprep.subr.mxu0 %v2286
        %2749 = vmatpush1.msra.mxu0 %v2285
        %2750 = vmatprep.subr.mxu0 %v2306
        %2751 = vmatpush1.msra.mxu0 %v2305
        %2752 = vmatprep.subr.mxu0 %v2326
        %2753 = vmatpush1.msra.mxu0 %v2325
        %2754 = vmatprep.mubr.f32.mxu0 %v1694
        %2755 = vmatmul.mubr.f32.gmra.mrb[0].mxu0 %v1693
        %v2756 = vpop.f32.mrb[0].mxu0
        %v2757 = vadd.f32 0.0, %v2756
        %v2758 = vpop.f32.mrb[0].mxu0
        %v2759 = vadd.f32 0.0, %v2758
        %2760 = vdwg.mxu0
        %2761 = vmatprep.subr.mxu0 %v1708
        %2762 = vmatpush1.msra.mxu0 %v1707
        %2763 = vmatprep.subr.mxu0 %v1728
        %2764 = vmatpush1.msra.mxu0 %v1727
        %2765 = vmatprep.subr.mxu0 %v1748
        %2766 = vmatpush1.msra.mxu0 %v1747
        %2767 = vmatprep.subr.mxu0 %v1768
        %2768 = vmatpush1.msra.mxu0 %v1767
        %2769 = vmatprep.subr.mxu0 %v1788
        %2770 = vmatpush1.msra.mxu0 %v1787
        %2771 = vmatprep.subr.mxu0 %v1808
        %2772 = vmatpush1.msra.mxu0 %v1807
        %2773 = vmatprep.subr.mxu0 %v1828
        %2774 = vmatpush1.msra.mxu0 %v1827
        %2775 = vmatprep.subr.mxu0 %v1848
        %2776 = vmatpush1.msra.mxu0 %v1847
        %2777 = vmatprep.subr.mxu0 %v1868
        %2778 = vmatpush1.msra.mxu0 %v1867
        %2779 = vmatprep.subr.mxu0 %v1888
        %2780 = vmatpush1.msra.mxu0 %v1887
        %2781 = vmatprep.subr.mxu0 %v1908
        %2782 = vmatpush1.msra.mxu0 %v1907
        %2783 = vmatprep.subr.mxu0 %v1928
        %2784 = vmatpush1.msra.mxu0 %v1927
        %2785 = vmatprep.subr.mxu0 %v1948
        %2786 = vmatpush1.msra.mxu0 %v1947
        %2787 = vmatprep.subr.mxu0 %v1968
        %2788 = vmatpush1.msra.mxu0 %v1967
        %2789 = vmatprep.subr.mxu0 %v1988
        %2790 = vmatpush1.msra.mxu0 %v1987
        %2791 = vmatprep.subr.mxu0 %v2008
        %2792 = vmatpush1.msra.mxu0 %v2007
        %2793 = vmatprep.subr.mxu0 %v2028
        %2794 = vmatpush1.msra.mxu0 %v2027
        %2795 = vmatprep.subr.mxu0 %v2048
        %2796 = vmatpush1.msra.mxu0 %v2047
        %2797 = vmatprep.subr.mxu0 %v2068
        %2798 = vmatpush1.msra.mxu0 %v2067
        %2799 = vmatprep.subr.mxu0 %v2088
        %2800 = vmatpush1.msra.mxu0 %v2087
        %2801 = vmatprep.subr.mxu0 %v2108
        %2802 = vmatpush1.msra.mxu0 %v2107
        %2803 = vmatprep.subr.mxu0 %v2128
        %2804 = vmatpush1.msra.mxu0 %v2127
        %2805 = vmatprep.subr.mxu0 %v2148
        %2806 = vmatpush1.msra.mxu0 %v2147
        %2807 = vmatprep.subr.mxu0 %v2168
        %2808 = vmatpush1.msra.mxu0 %v2167
        %2809 = vmatprep.subr.mxu0 %v2188
        %2810 = vmatpush1.msra.mxu0 %v2187
        %2811 = vmatprep.subr.mxu0 %v2208
        %2812 = vmatpush1.msra.mxu0 %v2207
        %2813 = vmatprep.subr.mxu0 %v2228
        %2814 = vmatpush1.msra.mxu0 %v2227
        %2815 = vmatprep.subr.mxu0 %v2248
        %2816 = vmatpush1.msra.mxu0 %v2247
        %2817 = vmatprep.subr.mxu0 %v2268
        %2818 = vmatpush1.msra.mxu0 %v2267
        %2819 = vmatprep.subr.mxu0 %v2288
        %2820 = vmatpush1.msra.mxu0 %v2287
        %2821 = vmatprep.subr.mxu0 %v2308
        %2822 = vmatpush1.msra.mxu0 %v2307
        %2823 = vmatprep.subr.mxu0 %v2328
        %2824 = vmatpush1.msra.mxu0 %v2327
        %2825 = vmatprep.mubr.f32.mxu0 %v1694
        %2826 = vmatmul.mubr.f32.gmra.mrb[0].mxu0 %v1693
        %v2827 = vpop.f32.mrb[0].mxu0
        %v2828 = vadd.f32 0.0, %v2827
        %v2829 = vpop.f32.mrb[0].mxu0
        %v2830 = vadd.f32 0.0, %v2829
        %2831 = vdwg.mxu0
        %2832 = vmatprep.subr.mxu0 %v1710
        %2833 = vmatpush1.msra.mxu0 %v1709
        %2834 = vmatprep.subr.mxu0 %v1730
        %2835 = vmatpush1.msra.mxu0 %v1729
        %2836 = vmatprep.subr.mxu0 %v1750
        %2837 = vmatpush1.msra.mxu0 %v1749
        %2838 = vmatprep.subr.mxu0 %v1770
        %2839 = vmatpush1.msra.mxu0 %v1769
        %2840 = vmatprep.subr.mxu0 %v1790
        %2841 = vmatpush1.msra.mxu0 %v1789
        %2842 = vmatprep.subr.mxu0 %v1810
        %2843 = vmatpush1.msra.mxu0 %v1809
        %2844 = vmatprep.subr.mxu0 %v1830
        %2845 = vmatpush1.msra.mxu0 %v1829
        %2846 = vmatprep.subr.mxu0 %v1850
        %2847 = vmatpush1.msra.mxu0 %v1849
        %2848 = vmatprep.subr.mxu0 %v1870
        %2849 = vmatpush1.msra.mxu0 %v1869
        %2850 = vmatprep.subr.mxu0 %v1890
        %2851 = vmatpush1.msra.mxu0 %v1889
        %2852 = vmatprep.subr.mxu0 %v1910
        %2853 = vmatpush1.msra.mxu0 %v1909
        %2854 = vmatprep.subr.mxu0 %v1930
        %2855 = vmatpush1.msra.mxu0 %v1929
        %2856 = vmatprep.subr.mxu0 %v1950
        %2857 = vmatpush1.msra.mxu0 %v1949
        %2858 = vmatprep.subr.mxu0 %v1970
        %2859 = vmatpush1.msra.mxu0 %v1969
        %2860 = vmatprep.subr.mxu0 %v1990
        %2861 = vmatpush1.msra.mxu0 %v1989
        %2862 = vmatprep.subr.mxu0 %v2010
        %2863 = vmatpush1.msra.mxu0 %v2009
        %2864 = vmatprep.subr.mxu0 %v2030
        %2865 = vmatpush1.msra.mxu0 %v2029
        %2866 = vmatprep.subr.mxu0 %v2050
        %2867 = vmatpush1.msra.mxu0 %v2049
        %2868 = vmatprep.subr.mxu0 %v2070
        %2869 = vmatpush1.msra.mxu0 %v2069
        %2870 = vmatprep.subr.mxu0 %v2090
        %2871 = vmatpush1.msra.mxu0 %v2089
        %2872 = vmatprep.subr.mxu0 %v2110
        %2873 = vmatpush1.msra.mxu0 %v2109
        %2874 = vmatprep.subr.mxu0 %v2130
        %2875 = vmatpush1.msra.mxu0 %v2129
        %2876 = vmatprep.subr.mxu0 %v2150
        %2877 = vmatpush1.msra.mxu0 %v2149
        %2878 = vmatprep.subr.mxu0 %v2170
        %2879 = vmatpush1.msra.mxu0 %v2169
        %2880 = vmatprep.subr.mxu0 %v2190
        %2881 = vmatpush1.msra.mxu0 %v2189
        %2882 = vmatprep.subr.mxu0 %v2210
        %2883 = vmatpush1.msra.mxu0 %v2209
        %2884 = vmatprep.subr.mxu0 %v2230
        %2885 = vmatpush1.msra.mxu0 %v2229
        %2886 = vmatprep.subr.mxu0 %v2250
        %2887 = vmatpush1.msra.mxu0 %v2249
        %2888 = vmatprep.subr.mxu0 %v2270
        %2889 = vmatpush1.msra.mxu0 %v2269
        %2890 = vmatprep.subr.mxu0 %v2290
        %2891 = vmatpush1.msra.mxu0 %v2289
        %2892 = vmatprep.subr.mxu0 %v2310
        %2893 = vmatpush1.msra.mxu0 %v2309
        %2894 = vmatprep.subr.mxu0 %v2330
        %2895 = vmatpush1.msra.mxu0 %v2329
        %2896 = vmatprep.mubr.f32.mxu0 %v1694
        %2897 = vmatmul.mubr.f32.gmra.mrb[0].mxu0 %v1693
        %v2898 = vpop.f32.mrb[0].mxu0
        %v2899 = vadd.f32 0.0, %v2898
        %v2900 = vpop.f32.mrb[0].mxu0
        %v2901 = vadd.f32 0.0, %v2900
        %2902 = vdwg.mxu0
        %2903 = vmatprep.subr.mxu0 %v1712
        %2904 = vmatpush1.msra.mxu0 %v1711
        %2905 = vmatprep.subr.mxu0 %v1732
        %2906 = vmatpush1.msra.mxu0 %v1731
        %2907 = vmatprep.subr.mxu0 %v1752
        %2908 = vmatpush1.msra.mxu0 %v1751
        %2909 = vmatprep.subr.mxu0 %v1772
        %2910 = vmatpush1.msra.mxu0 %v1771
        %2911 = vmatprep.subr.mxu0 %v1792
        %2912 = vmatpush1.msra.mxu0 %v1791
        %2913 = vmatprep.subr.mxu0 %v1812
        %2914 = vmatpush1.msra.mxu0 %v1811
        %2915 = vmatprep.subr.mxu0 %v1832
        %2916 = vmatpush1.msra.mxu0 %v1831
        %2917 = vmatprep.subr.mxu0 %v1852
        %2918 = vmatpush1.msra.mxu0 %v1851
        %2919 = vmatprep.subr.mxu0 %v1872
        %2920 = vmatpush1.msra.mxu0 %v1871
        %2921 = vmatprep.subr.mxu0 %v1892
        %2922 = vmatpush1.msra.mxu0 %v1891
        %2923 = vmatprep.subr.mxu0 %v1912
        %2924 = vmatpush1.msra.mxu0 %v1911
        %2925 = vmatprep.subr.mxu0 %v1932
        %2926 = vmatpush1.msra.mxu0 %v1931
        %2927 = vmatprep.subr.mxu0 %v1952
        %2928 = vmatpush1.msra.mxu0 %v1951
        %2929 = vmatprep.subr.mxu0 %v1972
        %2930 = vmatpush1.msra.mxu0 %v1971
        %2931 = vmatprep.subr.mxu0 %v1992
        %2932 = vmatpush1.msra.mxu0 %v1991
        %2933 = vmatprep.subr.mxu0 %v2012
        %2934 = vmatpush1.msra.mxu0 %v2011
        %2935 = vmatprep.subr.mxu0 %v2032
        %2936 = vmatpush1.msra.mxu0 %v2031
        %2937 = vmatprep.subr.mxu0 %v2052
        %2938 = vmatpush1.msra.mxu0 %v2051
        %2939 = vmatprep.subr.mxu0 %v2072
        %2940 = vmatpush1.msra.mxu0 %v2071
        %2941 = vmatprep.subr.mxu0 %v2092
        %2942 = vmatpush1.msra.mxu0 %v2091
        %2943 = vmatprep.subr.mxu0 %v2112
        %2944 = vmatpush1.msra.mxu0 %v2111
        %2945 = vmatprep.subr.mxu0 %v2132
        %2946 = vmatpush1.msra.mxu0 %v2131
        %2947 = vmatprep.subr.mxu0 %v2152
        %2948 = vmatpush1.msra.mxu0 %v2151
        %2949 = vmatprep.subr.mxu0 %v2172
        %2950 = vmatpush1.msra.mxu0 %v2171
        %2951 = vmatprep.subr.mxu0 %v2192
        %2952 = vmatpush1.msra.mxu0 %v2191
        %2953 = vmatprep.subr.mxu0 %v2212
        %2954 = vmatpush1.msra.mxu0 %v2211
        %2955 = vmatprep.subr.mxu0 %v2232
        %2956 = vmatpush1.msra.mxu0 %v2231
        %2957 = vmatprep.subr.mxu0 %v2252
        %2958 = vmatpush1.msra.mxu0 %v2251
        %2959 = vmatprep.subr.mxu0 %v2272
        %2960 = vmatpush1.msra.mxu0 %v2271
        %2961 = vmatprep.subr.mxu0 %v2292
        %2962 = vmatpush1.msra.mxu0 %v2291
        %2963 = vmatprep.subr.mxu0 %v2312
        %2964 = vmatpush1.msra.mxu0 %v2311
        %2965 = vmatprep.subr.mxu0 %v2332
        %2966 = vmatpush1.msra.mxu0 %v2331
        %2967 = vmatprep.mubr.f32.mxu0 %v1694
        %2968 = vmatmul.mubr.f32.gmra.mrb[0].mxu0 %v1693
        %v2969 = vpop.f32.mrb[0].mxu0
        %v2970 = vadd.f32 0.0, %v2969
        %v2971 = vpop.f32.mrb[0].mxu0
        %v2972 = vadd.f32 0.0, %v2971
        %2973 = vdwg.mxu0
        %2974 = vmatprep.subr.mxu0 %v1714
        %2975 = vmatpush1.msra.mxu0 %v1713
        %2976 = vmatprep.subr.mxu0 %v1734
        %2977 = vmatpush1.msra.mxu0 %v1733
        %2978 = vmatprep.subr.mxu0 %v1754
        %2979 = vmatpush1.msra.mxu0 %v1753
        %2980 = vmatprep.subr.mxu0 %v1774
        %2981 = vmatpush1.msra.mxu0 %v1773
        %2982 = vmatprep.subr.mxu0 %v1794
        %2983 = vmatpush1.msra.mxu0 %v1793
        %2984 = vmatprep.subr.mxu0 %v1814
        %2985 = vmatpush1.msra.mxu0 %v1813
        %2986 = vmatprep.subr.mxu0 %v1834
        %2987 = vmatpush1.msra.mxu0 %v1833
        %2988 = vmatprep.subr.mxu0 %v1854
        %2989 = vmatpush1.msra.mxu0 %v1853
        %2990 = vmatprep.subr.mxu0 %v1874
        %2991 = vmatpush1.msra.mxu0 %v1873
        %2992 = vmatprep.subr.mxu0 %v1894
        %2993 = vmatpush1.msra.mxu0 %v1893
        %2994 = vmatprep.subr.mxu0 %v1914
        %2995 = vmatpush1.msra.mxu0 %v1913
        %2996 = vmatprep.subr.mxu0 %v1934
        %2997 = vmatpush1.msra.mxu0 %v1933
        %2998 = vmatprep.subr.mxu0 %v1954
        %2999 = vmatpush1.msra.mxu0 %v1953
        %3000 = vmatprep.subr.mxu0 %v1974
        %3001 = vmatpush1.msra.mxu0 %v1973
        %3002 = vmatprep.subr.mxu0 %v1994
        %3003 = vmatpush1.msra.mxu0 %v1993
        %3004 = vmatprep.subr.mxu0 %v2014
        %3005 = vmatpush1.msra.mxu0 %v2013
        %3006 = vmatprep.subr.mxu0 %v2034
        %3007 = vmatpush1.msra.mxu0 %v2033
        %3008 = vmatprep.subr.mxu0 %v2054
        %3009 = vmatpush1.msra.mxu0 %v2053
        %3010 = vmatprep.subr.mxu0 %v2074
        %3011 = vmatpush1.msra.mxu0 %v2073
        %3012 = vmatprep.subr.mxu0 %v2094
        %3013 = vmatpush1.msra.mxu0 %v2093
        %3014 = vmatprep.subr.mxu0 %v2114
        %3015 = vmatpush1.msra.mxu0 %v2113
        %3016 = vmatprep.subr.mxu0 %v2134
        %3017 = vmatpush1.msra.mxu0 %v2133
        %3018 = vmatprep.subr.mxu0 %v2154
        %3019 = vmatpush1.msra.mxu0 %v2153
        %3020 = vmatprep.subr.mxu0 %v2174
        %3021 = vmatpush1.msra.mxu0 %v2173
        %3022 = vmatprep.subr.mxu0 %v2194
        %3023 = vmatpush1.msra.mxu0 %v2193
        %3024 = vmatprep.subr.mxu0 %v2214
        %3025 = vmatpush1.msra.mxu0 %v2213
        %3026 = vmatprep.subr.mxu0 %v2234
        %3027 = vmatpush1.msra.mxu0 %v2233
        %3028 = vmatprep.subr.mxu0 %v2254
        %3029 = vmatpush1.msra.mxu0 %v2253
        %3030 = vmatprep.subr.mxu0 %v2274
        %3031 = vmatpush1.msra.mxu0 %v2273
        %3032 = vmatprep.subr.mxu0 %v2294
        %3033 = vmatpush1.msra.mxu0 %v2293
        %3034 = vmatprep.subr.mxu0 %v2314
        %3035 = vmatpush1.msra.mxu0 %v2313
        %3036 = vmatprep.subr.mxu0 %v2334
        %3037 = vmatpush1.msra.mxu0 %v2333
        %3038 = vmatprep.mubr.f32.mxu0 %v1694
        %3039 = vmatmul.mubr.f32.gmra.mrb[0].mxu0 %v1693
        %v3040 = vpop.f32.mrb[0].mxu0
        %v3041 = vadd.f32 0.0, %v3040
        %v3042 = vpop.f32.mrb[0].mxu0
        %v3043 = vadd.f32 0.0, %v3042
        %3044 = vdwg.mxu0
        %3045 = vst [vmem:[#allocation3 + $0x60] sm:$0xc0] 0.0
        %3046 = vst [vmem:[#allocation3 + $0x68] sm:$0xc0] 0.0
        %3047 = vst [vmem:[#allocation3 + $0x70] sm:$0xc0] 0.0
        %3048 = vst [vmem:[#allocation3 + $0x78] sm:$0xc0] 0.0
        %3049 = vst [vmem:[#allocation3] sm:$0x3f] %v2402
        %3050 = vst [vmem:[#allocation3 + $0x8] sm:$0x3f] %v2404
        %3051 = vst [vmem:[#allocation3 + $0x10] sm:$0x3f] %v2473
        %3052 = vst [vmem:[#allocation3 + $0x18] sm:$0x3f] %v2475
        %v3057 = vrot.slane %v2544, 2
        %v3058 = vrot.slane %v2546, 2
        %v3059 = vrot.slane %v2615, 2
        %v3060 = vrot.slane %v2617, 2
        %3065 = vst [vmem:[#allocation3] sm:$0xc0] %v3057
        %3066 = vst [vmem:[#allocation3 + $0x8] sm:$0xc0] %v3058
        %3067 = vst [vmem:[#allocation3 + $0x10] sm:$0xc0] %v3059
        %3068 = vst [vmem:[#allocation3 + $0x18] sm:$0xc0] %v3060
        %3069 = vst [vmem:[#allocation3 + $0x20] sm:$0xf] %v3057
        %3070 = vst [vmem:[#allocation3 + $0x28] sm:$0xf] %v3058
        %3071 = vst [vmem:[#allocation3 + $0x30] sm:$0xf] %v3059
        %3072 = vst [vmem:[#allocation3 + $0x38] sm:$0xf] %v3060
        %v3077 = vrot.slane %v2686, 4
        %v3078 = vrot.slane %v2688, 4
        %v3079 = vrot.slane %v2757, 4
        %v3080 = vrot.slane %v2759, 4
        %3085 = vst [vmem:[#allocation3 + $0x20] sm:$0xf0] %v3077
        %3086 = vst [vmem:[#allocation3 + $0x28] sm:$0xf0] %v3078
        %3087 = vst [vmem:[#allocation3 + $0x30] sm:$0xf0] %v3079
        %3088 = vst [vmem:[#allocation3 + $0x38] sm:$0xf0] %v3080
        %3089 = vst [vmem:[#allocation3 + $0x40] sm:$0x3] %v3077
        %3090 = vst [vmem:[#allocation3 + $0x48] sm:$0x3] %v3078
        %3091 = vst [vmem:[#allocation3 + $0x50] sm:$0x3] %v3079
        %3092 = vst [vmem:[#allocation3 + $0x58] sm:$0x3] %v3080
        %v3097 = vrot.slane %v2828, 6
        %v3098 = vrot.slane %v2830, 6
        %v3099 = vrot.slane %v2899, 6
        %v3100 = vrot.slane %v2901, 6
        %3105 = vst [vmem:[#allocation3 + $0x40] sm:$0xfc] %v3097
        %3106 = vst [vmem:[#allocation3 + $0x48] sm:$0xfc] %v3098
        %3107 = vst [vmem:[#allocation3 + $0x50] sm:$0xfc] %v3099
        %3108 = vst [vmem:[#allocation3 + $0x58] sm:$0xfc] %v3100
        %3109 = vst [vmem:[#allocation3 + $0x60] sm:$0x3f] %v2970
        %3110 = vst [vmem:[#allocation3 + $0x68] sm:$0x3f] %v2972
        %3111 = vst [vmem:[#allocation3 + $0x70] sm:$0x3f] %v3041
        %3112 = vst [vmem:[#allocation3 + $0x78] sm:$0x3f] %v3043
        %v3113 = vld [vmem:[#allocation16] sm:$0xff]
        %v3114 = vld [vmem:[#allocation16 + $0x8] sm:$0xff]
        %v3115 = vld [vmem:[#allocation3] sm:$0xff]
        %v3116 = vld [vmem:[#allocation3 + $0x8] sm:$0xff]
        %v3117 = vld [vmem:[#allocation3 + $0x10] sm:$0xff]
        %v3118 = vld [vmem:[#allocation3 + $0x18] sm:$0xff]
        %v3119 = vld [vmem:[#allocation3 + $0x20] sm:$0xff]
        %v3120 = vld [vmem:[#allocation3 + $0x28] sm:$0xff]
        %v3121 = vld [vmem:[#allocation3 + $0x30] sm:$0xff]
        %v3122 = vld [vmem:[#allocation3 + $0x38] sm:$0xff]
        %v3123 = vld [vmem:[#allocation3 + $0x40] sm:$0xff]
        %v3124 = vld [vmem:[#allocation3 + $0x48] sm:$0xff]
        %v3125 = vld [vmem:[#allocation3 + $0x50] sm:$0xff]
        %v3126 = vld [vmem:[#allocation3 + $0x58] sm:$0xff]
        %v3127 = vld [vmem:[#allocation3 + $0x60] sm:$0xff]
        %v3128 = vld [vmem:[#allocation3 + $0x68] sm:$0xff]
        %v3129 = vld [vmem:[#allocation3 + $0x70] sm:$0xff]
        %v3130 = vld [vmem:[#allocation3 + $0x78] sm:$0xff]
        %v3131 = vld [vmem:[#allocation17] sm:$0xff]
        %v3132 = vld [vmem:[#allocation17 + $0x8] sm:$0xff]
        %v3133 = vld [vmem:[#allocation17 + $0x10] sm:$0xff]
        %v3134 = vld [vmem:[#allocation17 + $0x18] sm:$0xff]
        %v3135 = vld [vmem:[#allocation17 + $0x20] sm:$0xff]
        %v3136 = vld [vmem:[#allocation17 + $0x28] sm:$0xff]
        %v3137 = vld [vmem:[#allocation17 + $0x30] sm:$0xff]
        %v3138 = vld [vmem:[#allocation17 + $0x38] sm:$0xff]
        %v3140 = vsel %vm617, %v3113, 0
        %v3143 = vsel %vm617, %v3114, 0
        %3145 = vmatprep.subr.mxu0 %v3116
        %3146 = vmatpush1.msra.mxu0 %v3115
        %3147 = vmatprep.subr.mxu0 %v3120
        %3148 = vmatpush1.msra.mxu0 %v3119
        %3149 = vmatprep.subr.mxu0 %v3124
        %3150 = vmatpush1.msra.mxu0 %v3123
        %3151 = vmatprep.subr.mxu0 %v3128
        %3152 = vmatpush1.msra.mxu0 %v3127
        %3153 = vmatprep.subr.mxu0 0.0
        %3154 = vmatpush1.msra.mxu0 0.0
        %3155 = vmatprep.subr.mxu0 0.0
        %3156 = vmatpush1.msra.mxu0 0.0
        %3157 = vmatprep.subr.mxu0 0.0
        %3158 = vmatpush1.msra.mxu0 0.0
        %3159 = vmatprep.subr.mxu0 0.0
        %3160 = vmatpush1.msra.mxu0 0.0
        %3161 = vmatprep.subr.mxu0 0.0
        %3162 = vmatpush1.msra.mxu0 0.0
        %3163 = vmatprep.subr.mxu0 0.0
        %3164 = vmatpush1.msra.mxu0 0.0
        %3165 = vmatprep.subr.mxu0 0.0
        %3166 = vmatpush1.msra.mxu0 0.0
        %3167 = vmatprep.subr.mxu0 0.0
        %3168 = vmatpush1.msra.mxu0 0.0
        %3169 = vmatprep.subr.mxu0 0.0
        %3170 = vmatpush1.msra.mxu0 0.0
        %3171 = vmatprep.subr.mxu0 0.0
        %3172 = vmatpush1.msra.mxu0 0.0
        %3173 = vmatprep.subr.mxu0 0.0
        %3174 = vmatpush1.msra.mxu0 0.0
        %3175 = vmatprep.subr.mxu0 0.0
        %3176 = vmatpush1.msra.mxu0 0.0
        %3177 = vmatprep.subr.mxu0 0.0
        %3178 = vmatpush1.msra.mxu0 0.0
        %3179 = vmatprep.subr.mxu0 0.0
        %3180 = vmatpush1.msra.mxu0 0.0
        %3181 = vmatprep.subr.mxu0 0.0
        %3182 = vmatpush1.msra.mxu0 0.0
        %3183 = vmatprep.subr.mxu0 0.0
        %3184 = vmatpush1.msra.mxu0 0.0
        %3185 = vmatprep.subr.mxu0 0.0
        %3186 = vmatpush1.msra.mxu0 0.0
        %3187 = vmatprep.subr.mxu0 0.0
        %3188 = vmatpush1.msra.mxu0 0.0
        %3189 = vmatprep.subr.mxu0 0.0
        %3190 = vmatpush1.msra.mxu0 0.0
        %3191 = vmatprep.subr.mxu0 0.0
        %3192 = vmatpush1.msra.mxu0 0.0
        %3193 = vmatprep.subr.mxu0 0.0
        %3194 = vmatpush1.msra.mxu0 0.0
        %3195 = vmatprep.subr.mxu0 0.0
        %3196 = vmatpush1.msra.mxu0 0.0
        %3197 = vmatprep.subr.mxu0 0.0
        %3198 = vmatpush1.msra.mxu0 0.0
        %3199 = vmatprep.subr.mxu0 0.0
        %3200 = vmatpush1.msra.mxu0 0.0
        %3201 = vmatprep.subr.mxu0 0.0
        %3202 = vmatpush1.msra.mxu0 0.0
        %3203 = vmatprep.subr.mxu0 0.0
        %3204 = vmatpush1.msra.mxu0 0.0
        %3205 = vmatprep.subr.mxu0 0.0
        %3206 = vmatpush1.msra.mxu0 0.0
        %3207 = vmatprep.subr.mxu0 0.0
        %3208 = vmatpush1.msra.mxu0 0.0
        %3209 = vmatprep.mubr.f32.mxu0 0.0
        %3210 = vmatmul.mubr.f32.gmra.mrb[0].mxu0 %v3140
        %v3211 = vpop.f32.mrb[0].mxu0
        %v3212 = vadd.f32 %v3131, %v3211
        %v3213 = vpop.f32.mrb[0].mxu0
        %v3214 = vadd.f32 %v3132, %v3213
        %3215 = vmatprep.mubr.f32.mxu0 0.0
        %3216 = vmatmul.mubr.f32.gmra.mrb[0].mxu0 %v3143
        %v3217 = vpop.f32.mrb[0].mxu0
        %v3218 = vadd.f32 %v3135, %v3217
        %v3219 = vpop.f32.mrb[0].mxu0
        %v3220 = vadd.f32 %v3136, %v3219
        %3221 = vdwg.mxu0
        %3222 = vmatprep.subr.mxu0 %v3118
        %3223 = vmatpush1.msra.mxu0 %v3117
        %3224 = vmatprep.subr.mxu0 %v3122
        %3225 = vmatpush1.msra.mxu0 %v3121
        %3226 = vmatprep.subr.mxu0 %v3126
        %3227 = vmatpush1.msra.mxu0 %v3125
        %3228 = vmatprep.subr.mxu0 %v3130
        %3229 = vmatpush1.msra.mxu0 %v3129
        %3230 = vmatprep.subr.mxu0 0.0
        %3231 = vmatpush1.msra.mxu0 0.0
        %3232 = vmatprep.subr.mxu0 0.0
        %3233 = vmatpush1.msra.mxu0 0.0
        %3234 = vmatprep.subr.mxu0 0.0
        %3235 = vmatpush1.msra.mxu0 0.0
        %3236 = vmatprep.subr.mxu0 0.0
        %3237 = vmatpush1.msra.mxu0 0.0
        %3238 = vmatprep.subr.mxu0 0.0
        %3239 = vmatpush1.msra.mxu0 0.0
        %3240 = vmatprep.subr.mxu0 0.0
        %3241 = vmatpush1.msra.mxu0 0.0
        %3242 = vmatprep.subr.mxu0 0.0
        %3243 = vmatpush1.msra.mxu0 0.0
        %3244 = vmatprep.subr.mxu0 0.0
        %3245 = vmatpush1.msra.mxu0 0.0
        %3246 = vmatprep.subr.mxu0 0.0
        %3247 = vmatpush1.msra.mxu0 0.0
        %3248 = vmatprep.subr.mxu0 0.0
        %3249 = vmatpush1.msra.mxu0 0.0
        %3250 = vmatprep.subr.mxu0 0.0
        %3251 = vmatpush1.msra.mxu0 0.0
        %3252 = vmatprep.subr.mxu0 0.0
        %3253 = vmatpush1.msra.mxu0 0.0
        %3254 = vmatprep.subr.mxu0 0.0
        %3255 = vmatpush1.msra.mxu0 0.0
        %3256 = vmatprep.subr.mxu0 0.0
        %3257 = vmatpush1.msra.mxu0 0.0
        %3258 = vmatprep.subr.mxu0 0.0
        %3259 = vmatpush1.msra.mxu0 0.0
        %3260 = vmatprep.subr.mxu0 0.0
        %3261 = vmatpush1.msra.mxu0 0.0
        %3262 = vmatprep.subr.mxu0 0.0
        %3263 = vmatpush1.msra.mxu0 0.0
        %3264 = vmatprep.subr.mxu0 0.0
        %3265 = vmatpush1.msra.mxu0 0.0
        %3266 = vmatprep.subr.mxu0 0.0
        %3267 = vmatpush1.msra.mxu0 0.0
        %3268 = vmatprep.subr.mxu0 0.0
        %3269 = vmatpush1.msra.mxu0 0.0
        %3270 = vmatprep.subr.mxu0 0.0
        %3271 = vmatpush1.msra.mxu0 0.0
        %3272 = vmatprep.subr.mxu0 0.0
        %3273 = vmatpush1.msra.mxu0 0.0
        %3274 = vmatprep.subr.mxu0 0.0
        %3275 = vmatpush1.msra.mxu0 0.0
        %3276 = vmatprep.subr.mxu0 0.0
        %3277 = vmatpush1.msra.mxu0 0.0
        %3278 = vmatprep.subr.mxu0 0.0
        %3279 = vmatpush1.msra.mxu0 0.0
        %3280 = vmatprep.subr.mxu0 0.0
        %3281 = vmatpush1.msra.mxu0 0.0
        %3282 = vmatprep.subr.mxu0 0.0
        %3283 = vmatpush1.msra.mxu0 0.0
        %3284 = vmatprep.subr.mxu0 0.0
        %3285 = vmatpush1.msra.mxu0 0.0
        %3286 = vmatprep.mubr.f32.mxu0 0.0
        %3287 = vmatmul.mubr.f32.gmra.mrb[0].mxu0 %v3140
        %v3288 = vpop.f32.mrb[0].mxu0
        %v3289 = vadd.f32 %v3133, %v3288
        %v3290 = vpop.f32.mrb[0].mxu0
        %v3291 = vadd.f32 %v3134, %v3290
        %3292 = vmatprep.mubr.f32.mxu0 0.0
        %3293 = vmatmul.mubr.f32.gmra.mrb[0].mxu0 %v3143
        %v3294 = vpop.f32.mrb[0].mxu0
        %v3295 = vadd.f32 %v3137, %v3294
        %v3296 = vpop.f32.mrb[0].mxu0
        %v3297 = vadd.f32 %v3138, %v3296
        %3298 = vdwg.mxu0
        %v3299 = vmax.f32 %v3212, 0.0
        %v3300 = vmax.f32 %v3214, 0.0
        %v3301 = vmax.f32 %v3289, 0.0
        %v3302 = vmax.f32 %v3291, 0.0
        %v3303 = vmax.f32 %v3218, 0.0
        %v3304 = vmax.f32 %v3220, 0.0
        %v3305 = vmax.f32 %v3295, 0.0
        %v3306 = vmax.f32 %v3297, 0.0
        %v3307 = vld [vmem:[#allocation19] sm:$0xff]
        %v3308 = vld [vmem:[#allocation19 + $0x8] sm:$0xff]
        %v3309 = vld [vmem:[#allocation19 + $0x10] sm:$0xff]
        %v3310 = vld [vmem:[#allocation19 + $0x18] sm:$0xff]
        %v3311 = vld [vmem:[#allocation19 + $0x20] sm:$0xff]
        %v3312 = vld [vmem:[#allocation19 + $0x28] sm:$0xff]
        %v3313 = vld [vmem:[#allocation19 + $0x30] sm:$0xff]
        %v3314 = vld [vmem:[#allocation19 + $0x38] sm:$0xff]
        %v3315 = vld [vmem:[#allocation19 + $0x40] sm:$0xff]
        %v3316 = vld [vmem:[#allocation19 + $0x48] sm:$0xff]
        %v3317 = vld [vmem:[#allocation19 + $0x50] sm:$0xff]
        %v3318 = vld [vmem:[#allocation19 + $0x58] sm:$0xff]
        %v3319 = vld [vmem:[#allocation19 + $0x60] sm:$0xff]
        %v3320 = vld [vmem:[#allocation19 + $0x68] sm:$0xff]
        %v3321 = vld [vmem:[#allocation19 + $0x70] sm:$0xff]
        %v3322 = vld [vmem:[#allocation19 + $0x78] sm:$0xff]
        %v3323 = vld [vmem:[#allocation19 + $0x80] sm:$0xff]
        %v3324 = vld [vmem:[#allocation19 + $0x88] sm:$0xff]
        %v3325 = vld [vmem:[#allocation19 + $0x90] sm:$0xff]
        %v3326 = vld [vmem:[#allocation19 + $0x98] sm:$0xff]
        %v3327 = vld [vmem:[#allocation19 + $0xa0] sm:$0xff]
        %v3328 = vld [vmem:[#allocation19 + $0xa8] sm:$0xff]
        %v3329 = vld [vmem:[#allocation19 + $0xb0] sm:$0xff]
        %v3330 = vld [vmem:[#allocation19 + $0xb8] sm:$0xff]
        %v3331 = vld [vmem:[#allocation19 + $0xc0] sm:$0xff]
        %v3332 = vld [vmem:[#allocation19 + $0xc8] sm:$0xff]
        %v3333 = vld [vmem:[#allocation19 + $0xd0] sm:$0xff]
        %v3334 = vld [vmem:[#allocation19 + $0xd8] sm:$0xff]
        %v3335 = vld [vmem:[#allocation19 + $0xe0] sm:$0xff]
        %v3336 = vld [vmem:[#allocation19 + $0xe8] sm:$0xff]
        %v3337 = vld [vmem:[#allocation19 + $0xf0] sm:$0xff]
        %v3338 = vld [vmem:[#allocation19 + $0xf8] sm:$0xff]
        %v3339 = vld [vmem:[#allocation19 + $0x100] sm:$0xff]
        %v3340 = vld [vmem:[#allocation19 + $0x108] sm:$0xff]
        %v3341 = vld [vmem:[#allocation19 + $0x110] sm:$0xff]
        %v3342 = vld [vmem:[#allocation19 + $0x118] sm:$0xff]
        %v3343 = vld [vmem:[#allocation19 + $0x120] sm:$0xff]
        %v3344 = vld [vmem:[#allocation19 + $0x128] sm:$0xff]
        %v3345 = vld [vmem:[#allocation19 + $0x130] sm:$0xff]
        %v3346 = vld [vmem:[#allocation19 + $0x138] sm:$0xff]
        %v3347 = vld [vmem:[#allocation19 + $0x140] sm:$0xff]
        %v3348 = vld [vmem:[#allocation19 + $0x148] sm:$0xff]
        %v3349 = vld [vmem:[#allocation19 + $0x150] sm:$0xff]
        %v3350 = vld [vmem:[#allocation19 + $0x158] sm:$0xff]
        %v3351 = vld [vmem:[#allocation19 + $0x160] sm:$0xff]
        %v3352 = vld [vmem:[#allocation19 + $0x168] sm:$0xff]
        %v3353 = vld [vmem:[#allocation19 + $0x170] sm:$0xff]
        %v3354 = vld [vmem:[#allocation19 + $0x178] sm:$0xff]
        %v3355 = vld [vmem:[#allocation19 + $0x180] sm:$0xff]
        %v3356 = vld [vmem:[#allocation19 + $0x188] sm:$0xff]
        %v3357 = vld [vmem:[#allocation19 + $0x190] sm:$0xff]
        %v3358 = vld [vmem:[#allocation19 + $0x198] sm:$0xff]
        %v3359 = vld [vmem:[#allocation19 + $0x1a0] sm:$0xff]
        %v3360 = vld [vmem:[#allocation19 + $0x1a8] sm:$0xff]
        %v3361 = vld [vmem:[#allocation19 + $0x1b0] sm:$0xff]
        %v3362 = vld [vmem:[#allocation19 + $0x1b8] sm:$0xff]
        %v3363 = vld [vmem:[#allocation19 + $0x1c0] sm:$0xff]
        %v3364 = vld [vmem:[#allocation19 + $0x1c8] sm:$0xff]
        %v3365 = vld [vmem:[#allocation19 + $0x1d0] sm:$0xff]
        %v3366 = vld [vmem:[#allocation19 + $0x1d8] sm:$0xff]
        %v3367 = vld [vmem:[#allocation19 + $0x1e0] sm:$0xff]
        %v3368 = vld [vmem:[#allocation19 + $0x1e8] sm:$0xff]
        %v3369 = vld [vmem:[#allocation19 + $0x1f0] sm:$0xff]
        %v3370 = vld [vmem:[#allocation19 + $0x1f8] sm:$0xff]
        %v3371 = vld [vmem:[#allocation19 + $0x200] sm:$0xff]
        %v3372 = vld [vmem:[#allocation19 + $0x208] sm:$0xff]
        %v3373 = vld [vmem:[#allocation19 + $0x210] sm:$0xff]
        %v3374 = vld [vmem:[#allocation19 + $0x218] sm:$0xff]
        %v3375 = vld [vmem:[#allocation19 + $0x220] sm:$0xff]
        %v3376 = vld [vmem:[#allocation19 + $0x228] sm:$0xff]
        %v3377 = vld [vmem:[#allocation19 + $0x230] sm:$0xff]
        %v3378 = vld [vmem:[#allocation19 + $0x238] sm:$0xff]
        %v3379 = vld [vmem:[#allocation19 + $0x240] sm:$0xff]
        %v3380 = vld [vmem:[#allocation19 + $0x248] sm:$0xff]
        %v3381 = vld [vmem:[#allocation19 + $0x250] sm:$0xff]
        %v3382 = vld [vmem:[#allocation19 + $0x258] sm:$0xff]
        %v3383 = vld [vmem:[#allocation19 + $0x260] sm:$0xff]
        %v3384 = vld [vmem:[#allocation19 + $0x268] sm:$0xff]
        %v3385 = vld [vmem:[#allocation19 + $0x270] sm:$0xff]
        %v3386 = vld [vmem:[#allocation19 + $0x278] sm:$0xff]
        %v3387 = vld [vmem:[#allocation19 + $0x280] sm:$0xff]
        %v3388 = vld [vmem:[#allocation19 + $0x288] sm:$0xff]
        %v3389 = vld [vmem:[#allocation19 + $0x290] sm:$0xff]
        %v3390 = vld [vmem:[#allocation19 + $0x298] sm:$0xff]
        %v3391 = vld [vmem:[#allocation19 + $0x2a0] sm:$0xff]
        %v3392 = vld [vmem:[#allocation19 + $0x2a8] sm:$0xff]
        %v3393 = vld [vmem:[#allocation19 + $0x2b0] sm:$0xff]
        %v3394 = vld [vmem:[#allocation19 + $0x2b8] sm:$0xff]
        %v3395 = vld [vmem:[#allocation19 + $0x2c0] sm:$0xff]
        %v3396 = vld [vmem:[#allocation19 + $0x2c8] sm:$0xff]
        %v3397 = vld [vmem:[#allocation19 + $0x2d0] sm:$0xff]
        %v3398 = vld [vmem:[#allocation19 + $0x2d8] sm:$0xff]
        %v3399 = vld [vmem:[#allocation19 + $0x2e0] sm:$0xff]
        %v3400 = vld [vmem:[#allocation19 + $0x2e8] sm:$0xff]
        %v3401 = vld [vmem:[#allocation19 + $0x2f0] sm:$0xff]
        %v3402 = vld [vmem:[#allocation19 + $0x2f8] sm:$0xff]
        %v3403 = vld [vmem:[#allocation19 + $0x300] sm:$0xff]
        %v3404 = vld [vmem:[#allocation19 + $0x308] sm:$0xff]
        %v3405 = vld [vmem:[#allocation19 + $0x310] sm:$0xff]
        %v3406 = vld [vmem:[#allocation19 + $0x318] sm:$0xff]
        %v3407 = vld [vmem:[#allocation19 + $0x320] sm:$0xff]
        %v3408 = vld [vmem:[#allocation19 + $0x328] sm:$0xff]
        %v3409 = vld [vmem:[#allocation19 + $0x330] sm:$0xff]
        %v3410 = vld [vmem:[#allocation19 + $0x338] sm:$0xff]
        %v3411 = vld [vmem:[#allocation19 + $0x340] sm:$0xff]
        %v3412 = vld [vmem:[#allocation19 + $0x348] sm:$0xff]
        %v3413 = vld [vmem:[#allocation19 + $0x350] sm:$0xff]
        %v3414 = vld [vmem:[#allocation19 + $0x358] sm:$0xff]
        %v3415 = vld [vmem:[#allocation19 + $0x360] sm:$0xff]
        %v3416 = vld [vmem:[#allocation19 + $0x368] sm:$0xff]
        %v3417 = vld [vmem:[#allocation19 + $0x370] sm:$0xff]
        %v3418 = vld [vmem:[#allocation19 + $0x378] sm:$0xff]
        %v3419 = vld [vmem:[#allocation19 + $0x380] sm:$0xff]
        %v3420 = vld [vmem:[#allocation19 + $0x388] sm:$0xff]
        %v3421 = vld [vmem:[#allocation19 + $0x390] sm:$0xff]
        %v3422 = vld [vmem:[#allocation19 + $0x398] sm:$0xff]
        %v3423 = vld [vmem:[#allocation19 + $0x3a0] sm:$0xff]
        %v3424 = vld [vmem:[#allocation19 + $0x3a8] sm:$0xff]
        %v3425 = vld [vmem:[#allocation19 + $0x3b0] sm:$0xff]
        %v3426 = vld [vmem:[#allocation19 + $0x3b8] sm:$0xff]
        %v3427 = vld [vmem:[#allocation19 + $0x3c0] sm:$0xff]
        %v3428 = vld [vmem:[#allocation19 + $0x3c8] sm:$0xff]
        %v3429 = vld [vmem:[#allocation19 + $0x3d0] sm:$0xff]
        %v3430 = vld [vmem:[#allocation19 + $0x3d8] sm:$0xff]
        %v3431 = vld [vmem:[#allocation19 + $0x3e0] sm:$0xff]
        %v3432 = vld [vmem:[#allocation19 + $0x3e8] sm:$0xff]
        %v3433 = vld [vmem:[#allocation19 + $0x3f0] sm:$0xff]
        %v3434 = vld [vmem:[#allocation19 + $0x3f8] sm:$0xff]
        %v3435 = vld [vmem:[#allocation19 + $0x400] sm:$0xff]
        %v3436 = vld [vmem:[#allocation19 + $0x408] sm:$0xff]
        %v3437 = vld [vmem:[#allocation19 + $0x410] sm:$0xff]
        %v3438 = vld [vmem:[#allocation19 + $0x418] sm:$0xff]
        %v3439 = vld [vmem:[#allocation19 + $0x420] sm:$0xff]
        %v3440 = vld [vmem:[#allocation19 + $0x428] sm:$0xff]
        %v3441 = vld [vmem:[#allocation19 + $0x430] sm:$0xff]
        %v3442 = vld [vmem:[#allocation19 + $0x438] sm:$0xff]
        %v3443 = vld [vmem:[#allocation19 + $0x440] sm:$0xff]
        %v3444 = vld [vmem:[#allocation19 + $0x448] sm:$0xff]
        %v3445 = vld [vmem:[#allocation19 + $0x450] sm:$0xff]
        %v3446 = vld [vmem:[#allocation19 + $0x458] sm:$0xff]
        %v3447 = vld [vmem:[#allocation19 + $0x460] sm:$0xff]
        %v3448 = vld [vmem:[#allocation19 + $0x468] sm:$0xff]
        %v3449 = vld [vmem:[#allocation19 + $0x470] sm:$0xff]
        %v3450 = vld [vmem:[#allocation19 + $0x478] sm:$0xff]
        %v3451 = vld [vmem:[#allocation19 + $0x480] sm:$0xff]
        %v3452 = vld [vmem:[#allocation19 + $0x488] sm:$0xff]
        %v3453 = vld [vmem:[#allocation19 + $0x490] sm:$0xff]
        %v3454 = vld [vmem:[#allocation19 + $0x498] sm:$0xff]
        %v3455 = vld [vmem:[#allocation19 + $0x4a0] sm:$0xff]
        %v3456 = vld [vmem:[#allocation19 + $0x4a8] sm:$0xff]
        %v3457 = vld [vmem:[#allocation19 + $0x4b0] sm:$0xff]
        %v3458 = vld [vmem:[#allocation19 + $0x4b8] sm:$0xff]
        %v3459 = vld [vmem:[#allocation19 + $0x4c0] sm:$0xff]
        %v3460 = vld [vmem:[#allocation19 + $0x4c8] sm:$0xff]
        %v3461 = vld [vmem:[#allocation19 + $0x4d0] sm:$0xff]
        %v3462 = vld [vmem:[#allocation19 + $0x4d8] sm:$0xff]
        %v3463 = vld [vmem:[#allocation19 + $0x4e0] sm:$0xff]
        %v3464 = vld [vmem:[#allocation19 + $0x4e8] sm:$0xff]
        %v3465 = vld [vmem:[#allocation19 + $0x4f0] sm:$0xff]
        %v3466 = vld [vmem:[#allocation19 + $0x4f8] sm:$0xff]
        %v3467 = vld [vmem:[#allocation19 + $0x500] sm:$0xff]
        %v3468 = vld [vmem:[#allocation19 + $0x508] sm:$0xff]
        %v3469 = vld [vmem:[#allocation19 + $0x510] sm:$0xff]
        %v3470 = vld [vmem:[#allocation19 + $0x518] sm:$0xff]
        %v3471 = vld [vmem:[#allocation19 + $0x520] sm:$0xff]
        %v3472 = vld [vmem:[#allocation19 + $0x528] sm:$0xff]
        %v3473 = vld [vmem:[#allocation19 + $0x530] sm:$0xff]
        %v3474 = vld [vmem:[#allocation19 + $0x538] sm:$0xff]
        %v3475 = vld [vmem:[#allocation19 + $0x540] sm:$0xff]
        %v3476 = vld [vmem:[#allocation19 + $0x548] sm:$0xff]
        %v3477 = vld [vmem:[#allocation19 + $0x550] sm:$0xff]
        %v3478 = vld [vmem:[#allocation19 + $0x558] sm:$0xff]
        %v3479 = vld [vmem:[#allocation19 + $0x560] sm:$0xff]
        %v3480 = vld [vmem:[#allocation19 + $0x568] sm:$0xff]
        %v3481 = vld [vmem:[#allocation19 + $0x570] sm:$0xff]
        %v3482 = vld [vmem:[#allocation19 + $0x578] sm:$0xff]
        %v3483 = vld [vmem:[#allocation19 + $0x580] sm:$0xff]
        %v3484 = vld [vmem:[#allocation19 + $0x588] sm:$0xff]
        %v3485 = vld [vmem:[#allocation19 + $0x590] sm:$0xff]
        %v3486 = vld [vmem:[#allocation19 + $0x598] sm:$0xff]
        %v3487 = vld [vmem:[#allocation19 + $0x5a0] sm:$0xff]
        %v3488 = vld [vmem:[#allocation19 + $0x5a8] sm:$0xff]
        %v3489 = vld [vmem:[#allocation19 + $0x5b0] sm:$0xff]
        %v3490 = vld [vmem:[#allocation19 + $0x5b8] sm:$0xff]
        %v3491 = vld [vmem:[#allocation19 + $0x5c0] sm:$0xff]
        %v3492 = vld [vmem:[#allocation19 + $0x5c8] sm:$0xff]
        %v3493 = vld [vmem:[#allocation19 + $0x5d0] sm:$0xff]
        %v3494 = vld [vmem:[#allocation19 + $0x5d8] sm:$0xff]
        %v3495 = vld [vmem:[#allocation19 + $0x5e0] sm:$0xff]
        %v3496 = vld [vmem:[#allocation19 + $0x5e8] sm:$0xff]
        %v3497 = vld [vmem:[#allocation19 + $0x5f0] sm:$0xff]
        %v3498 = vld [vmem:[#allocation19 + $0x5f8] sm:$0xff]
        %3499 = vmatprep.subr.mxu0 %v3308
        %3500 = vmatpush1.msra.mxu0 %v3307
        %3501 = vmatprep.subr.mxu0 %v3311
        %3502 = vmatpush1.msra.mxu0 %v3310
        %3503 = vmatprep.subr.mxu0 %v3314
        %3504 = vmatpush1.msra.mxu0 %v3313
        %3505 = vmatprep.subr.mxu0 %v3317
        %3506 = vmatpush1.msra.mxu0 %v3316
        %3507 = vmatprep.subr.mxu0 %v3320
        %3508 = vmatpush1.msra.mxu0 %v3319
        %3509 = vmatprep.subr.mxu0 %v3323
        %3510 = vmatpush1.msra.mxu0 %v3322
        %3511 = vmatprep.subr.mxu0 %v3326
        %3512 = vmatpush1.msra.mxu0 %v3325
        %3513 = vmatprep.subr.mxu0 %v3329
        %3514 = vmatpush1.msra.mxu0 %v3328
        %3515 = vmatprep.subr.mxu0 %v3332
        %3516 = vmatpush1.msra.mxu0 %v3331
        %3517 = vmatprep.subr.mxu0 %v3335
        %3518 = vmatpush1.msra.mxu0 %v3334
        %3519 = vmatprep.subr.mxu0 %v3338
        %3520 = vmatpush1.msra.mxu0 %v3337
        %3521 = vmatprep.subr.mxu0 %v3341
        %3522 = vmatpush1.msra.mxu0 %v3340
        %3523 = vmatprep.subr.mxu0 %v3344
        %3524 = vmatpush1.msra.mxu0 %v3343
        %3525 = vmatprep.subr.mxu0 %v3347
        %3526 = vmatpush1.msra.mxu0 %v3346
        %3527 = vmatprep.subr.mxu0 %v3350
        %3528 = vmatpush1.msra.mxu0 %v3349
        %3529 = vmatprep.subr.mxu0 %v3353
        %3530 = vmatpush1.msra.mxu0 %v3352
        %3531 = vmatprep.subr.mxu0 %v3356
        %3532 = vmatpush1.msra.mxu0 %v3355
        %3533 = vmatprep.subr.mxu0 %v3359
        %3534 = vmatpush1.msra.mxu0 %v3358
        %3535 = vmatprep.subr.mxu0 %v3362
        %3536 = vmatpush1.msra.mxu0 %v3361
        %3537 = vmatprep.subr.mxu0 %v3365
        %3538 = vmatpush1.msra.mxu0 %v3364
        %3539 = vmatprep.subr.mxu0 %v3368
        %3540 = vmatpush1.msra.mxu0 %v3367
        %3541 = vmatprep.subr.mxu0 %v3371
        %3542 = vmatpush1.msra.mxu0 %v3370
        %3543 = vmatprep.subr.mxu0 %v3374
        %3544 = vmatpush1.msra.mxu0 %v3373
        %3545 = vmatprep.subr.mxu0 %v3377
        %3546 = vmatpush1.msra.mxu0 %v3376
        %3547 = vmatprep.subr.mxu0 %v3380
        %3548 = vmatpush1.msra.mxu0 %v3379
        %3549 = vmatprep.subr.mxu0 %v3383
        %3550 = vmatpush1.msra.mxu0 %v3382
        %3551 = vmatprep.subr.mxu0 %v3386
        %3552 = vmatpush1.msra.mxu0 %v3385
        %3553 = vmatprep.subr.mxu0 %v3389
        %3554 = vmatpush1.msra.mxu0 %v3388
        %3555 = vmatprep.subr.mxu0 %v3392
        %3556 = vmatpush1.msra.mxu0 %v3391
        %3557 = vmatprep.subr.mxu0 %v3395
        %3558 = vmatpush1.msra.mxu0 %v3394
        %3559 = vmatprep.subr.mxu0 %v3398
        %3560 = vmatpush1.msra.mxu0 %v3397
        %3561 = vmatprep.subr.mxu0 %v3401
        %3562 = vmatpush1.msra.mxu0 %v3400
        %3563 = vmatprep.mubr.f32.mxu0 %v3300
        %3564 = vmatmul.mubr.f32.gmra.mrb[0].mxu0 %v3299
        %v3565 = vpop.f32.mrb[0].mxu0
        %v3566 = vadd.f32 0.0, %v3565
        %v3567 = vpop.f32.mrb[0].mxu0
        %v3568 = vadd.f32 0.0, %v3567
        %3569 = vmatprep.mubr.f32.mxu0 %v3304
        %3570 = vmatmul.mubr.f32.gmra.mrb[0].mxu0 %v3303
        %v3571 = vpop.f32.mrb[0].mxu0
        %v3572 = vadd.f32 0.0, %v3571
        %v3573 = vpop.f32.mrb[0].mxu0
        %v3574 = vadd.f32 0.0, %v3573
        %3575 = vdwg.mxu0
        %3576 = vmatprep.subr.mxu0 %v3404
        %3577 = vmatpush1.msra.mxu0 %v3403
        %3578 = vmatprep.subr.mxu0 %v3407
        %3579 = vmatpush1.msra.mxu0 %v3406
        %3580 = vmatprep.subr.mxu0 %v3410
        %3581 = vmatpush1.msra.mxu0 %v3409
        %3582 = vmatprep.subr.mxu0 %v3413
        %3583 = vmatpush1.msra.mxu0 %v3412
        %3584 = vmatprep.subr.mxu0 %v3416
        %3585 = vmatpush1.msra.mxu0 %v3415
        %3586 = vmatprep.subr.mxu0 %v3419
        %3587 = vmatpush1.msra.mxu0 %v3418
        %3588 = vmatprep.subr.mxu0 %v3422
        %3589 = vmatpush1.msra.mxu0 %v3421
        %3590 = vmatprep.subr.mxu0 %v3425
        %3591 = vmatpush1.msra.mxu0 %v3424
        %3592 = vmatprep.subr.mxu0 %v3428
        %3593 = vmatpush1.msra.mxu0 %v3427
        %3594 = vmatprep.subr.mxu0 %v3431
        %3595 = vmatpush1.msra.mxu0 %v3430
        %3596 = vmatprep.subr.mxu0 %v3434
        %3597 = vmatpush1.msra.mxu0 %v3433
        %3598 = vmatprep.subr.mxu0 %v3437
        %3599 = vmatpush1.msra.mxu0 %v3436
        %3600 = vmatprep.subr.mxu0 %v3440
        %3601 = vmatpush1.msra.mxu0 %v3439
        %3602 = vmatprep.subr.mxu0 %v3443
        %3603 = vmatpush1.msra.mxu0 %v3442
        %3604 = vmatprep.subr.mxu0 %v3446
        %3605 = vmatpush1.msra.mxu0 %v3445
        %3606 = vmatprep.subr.mxu0 %v3449
        %3607 = vmatpush1.msra.mxu0 %v3448
        %3608 = vmatprep.subr.mxu0 %v3452
        %3609 = vmatpush1.msra.mxu0 %v3451
        %3610 = vmatprep.subr.mxu0 %v3455
        %3611 = vmatpush1.msra.mxu0 %v3454
        %3612 = vmatprep.subr.mxu0 %v3458
        %3613 = vmatpush1.msra.mxu0 %v3457
        %3614 = vmatprep.subr.mxu0 %v3461
        %3615 = vmatpush1.msra.mxu0 %v3460
        %3616 = vmatprep.subr.mxu0 %v3464
        %3617 = vmatpush1.msra.mxu0 %v3463
        %3618 = vmatprep.subr.mxu0 %v3467
        %3619 = vmatpush1.msra.mxu0 %v3466
        %3620 = vmatprep.subr.mxu0 %v3470
        %3621 = vmatpush1.msra.mxu0 %v3469
        %3622 = vmatprep.subr.mxu0 %v3473
        %3623 = vmatpush1.msra.mxu0 %v3472
        %3624 = vmatprep.subr.mxu0 %v3476
        %3625 = vmatpush1.msra.mxu0 %v3475
        %3626 = vmatprep.subr.mxu0 %v3479
        %3627 = vmatpush1.msra.mxu0 %v3478
        %3628 = vmatprep.subr.mxu0 %v3482
        %3629 = vmatpush1.msra.mxu0 %v3481
        %3630 = vmatprep.subr.mxu0 %v3485
        %3631 = vmatpush1.msra.mxu0 %v3484
        %3632 = vmatprep.subr.mxu0 %v3488
        %3633 = vmatpush1.msra.mxu0 %v3487
        %3634 = vmatprep.subr.mxu0 %v3491
        %3635 = vmatpush1.msra.mxu0 %v3490
        %3636 = vmatprep.subr.mxu0 %v3494
        %3637 = vmatpush1.msra.mxu0 %v3493
        %3638 = vmatprep.subr.mxu0 %v3497
        %3639 = vmatpush1.msra.mxu0 %v3496
        %3640 = vmatprep.mubr.f32.mxu0 %v3302
        %3641 = vmatmul.mubr.f32.gmra.mrb[0].mxu0 %v3301
        %v3642 = vpop.f32.mrb[0].mxu0
        %v3643 = vadd.f32 %v3566, %v3642
        %v3644 = vpop.f32.mrb[0].mxu0
        %v3645 = vadd.f32 %v3568, %v3644
        %3646 = vmatprep.mubr.f32.mxu0 %v3306
        %3647 = vmatmul.mubr.f32.gmra.mrb[0].mxu0 %v3305
        %v3648 = vpop.f32.mrb[0].mxu0
        %v3649 = vadd.f32 %v3572, %v3648
        %v3650 = vpop.f32.mrb[0].mxu0
        %v3651 = vadd.f32 %v3574, %v3650
        %3652 = vdwg.mxu0
        %3653 = vmatprep.subr.mxu0 0.0
        %3654 = vmatpush1.msra.mxu0 %v3309
        %3655 = vmatprep.subr.mxu0 0.0
        %3656 = vmatpush1.msra.mxu0 %v3312
        %3657 = vmatprep.subr.mxu0 0.0
        %3658 = vmatpush1.msra.mxu0 %v3315
        %3659 = vmatprep.subr.mxu0 0.0
        %3660 = vmatpush1.msra.mxu0 %v3318
        %3661 = vmatprep.subr.mxu0 0.0
        %3662 = vmatpush1.msra.mxu0 %v3321
        %3663 = vmatprep.subr.mxu0 0.0
        %3664 = vmatpush1.msra.mxu0 %v3324
        %3665 = vmatprep.subr.mxu0 0.0
        %3666 = vmatpush1.msra.mxu0 %v3327
        %3667 = vmatprep.subr.mxu0 0.0
        %3668 = vmatpush1.msra.mxu0 %v3330
        %3669 = vmatprep.subr.mxu0 0.0
        %3670 = vmatpush1.msra.mxu0 %v3333
        %3671 = vmatprep.subr.mxu0 0.0
        %3672 = vmatpush1.msra.mxu0 %v3336
        %3673 = vmatprep.subr.mxu0 0.0
        %3674 = vmatpush1.msra.mxu0 %v3339
        %3675 = vmatprep.subr.mxu0 0.0
        %3676 = vmatpush1.msra.mxu0 %v3342
        %3677 = vmatprep.subr.mxu0 0.0
        %3678 = vmatpush1.msra.mxu0 %v3345
        %3679 = vmatprep.subr.mxu0 0.0
        %3680 = vmatpush1.msra.mxu0 %v3348
        %3681 = vmatprep.subr.mxu0 0.0
        %3682 = vmatpush1.msra.mxu0 %v3351
        %3683 = vmatprep.subr.mxu0 0.0
        %3684 = vmatpush1.msra.mxu0 %v3354
        %3685 = vmatprep.subr.mxu0 0.0
        %3686 = vmatpush1.msra.mxu0 %v3357
        %3687 = vmatprep.subr.mxu0 0.0
        %3688 = vmatpush1.msra.mxu0 %v3360
        %3689 = vmatprep.subr.mxu0 0.0
        %3690 = vmatpush1.msra.mxu0 %v3363
        %3691 = vmatprep.subr.mxu0 0.0
        %3692 = vmatpush1.msra.mxu0 %v3366
        %3693 = vmatprep.subr.mxu0 0.0
        %3694 = vmatpush1.msra.mxu0 %v3369
        %3695 = vmatprep.subr.mxu0 0.0
        %3696 = vmatpush1.msra.mxu0 %v3372
        %3697 = vmatprep.subr.mxu0 0.0
        %3698 = vmatpush1.msra.mxu0 %v3375
        %3699 = vmatprep.subr.mxu0 0.0
        %3700 = vmatpush1.msra.mxu0 %v3378
        %3701 = vmatprep.subr.mxu0 0.0
        %3702 = vmatpush1.msra.mxu0 %v3381
        %3703 = vmatprep.subr.mxu0 0.0
        %3704 = vmatpush1.msra.mxu0 %v3384
        %3705 = vmatprep.subr.mxu0 0.0
        %3706 = vmatpush1.msra.mxu0 %v3387
        %3707 = vmatprep.subr.mxu0 0.0
        %3708 = vmatpush1.msra.mxu0 %v3390
        %3709 = vmatprep.subr.mxu0 0.0
        %3710 = vmatpush1.msra.mxu0 %v3393
        %3711 = vmatprep.subr.mxu0 0.0
        %3712 = vmatpush1.msra.mxu0 %v3396
        %3713 = vmatprep.subr.mxu0 0.0
        %3714 = vmatpush1.msra.mxu0 %v3399
        %3715 = vmatprep.subr.mxu0 0.0
        %3716 = vmatpush1.msra.mxu0 %v3402
        %3717 = vmatprep.mubr.f32.mxu0 %v3300
        %3718 = vmatmul.mubr.f32.gmra.mrb[0].mxu0 %v3299
        %v3719 = vpop.f32.mrb[0].mxu0
        %v3720 = vadd.f32 0.0, %v3719
        %v3721 = vpop.f32.mrb[0].mxu0
        %3722 = vmatprep.mubr.f32.mxu0 %v3304
        %3723 = vmatmul.mubr.f32.gmra.mrb[0].mxu0 %v3303
        %v3724 = vpop.f32.mrb[0].mxu0
        %v3725 = vadd.f32 0.0, %v3724
        %v3726 = vpop.f32.mrb[0].mxu0
        %3727 = vdwg.mxu0
        %3728 = vmatprep.subr.mxu0 0.0
        %3729 = vmatpush1.msra.mxu0 %v3405
        %3730 = vmatprep.subr.mxu0 0.0
        %3731 = vmatpush1.msra.mxu0 %v3408
        %3732 = vmatprep.subr.mxu0 0.0
        %3733 = vmatpush1.msra.mxu0 %v3411
        %3734 = vmatprep.subr.mxu0 0.0
        %3735 = vmatpush1.msra.mxu0 %v3414
        %3736 = vmatprep.subr.mxu0 0.0
        %3737 = vmatpush1.msra.mxu0 %v3417
        %3738 = vmatprep.subr.mxu0 0.0
        %3739 = vmatpush1.msra.mxu0 %v3420
        %3740 = vmatprep.subr.mxu0 0.0
        %3741 = vmatpush1.msra.mxu0 %v3423
        %3742 = vmatprep.subr.mxu0 0.0
        %3743 = vmatpush1.msra.mxu0 %v3426
        %3744 = vmatprep.subr.mxu0 0.0
        %3745 = vmatpush1.msra.mxu0 %v3429
        %3746 = vmatprep.subr.mxu0 0.0
        %3747 = vmatpush1.msra.mxu0 %v3432
        %3748 = vmatprep.subr.mxu0 0.0
        %3749 = vmatpush1.msra.mxu0 %v3435
        %3750 = vmatprep.subr.mxu0 0.0
        %3751 = vmatpush1.msra.mxu0 %v3438
        %3752 = vmatprep.subr.mxu0 0.0
        %3753 = vmatpush1.msra.mxu0 %v3441
        %3754 = vmatprep.subr.mxu0 0.0
        %3755 = vmatpush1.msra.mxu0 %v3444
        %3756 = vmatprep.subr.mxu0 0.0
        %3757 = vmatpush1.msra.mxu0 %v3447
        %3758 = vmatprep.subr.mxu0 0.0
        %3759 = vmatpush1.msra.mxu0 %v3450
        %3760 = vmatprep.subr.mxu0 0.0
        %3761 = vmatpush1.msra.mxu0 %v3453
        %3762 = vmatprep.subr.mxu0 0.0
        %3763 = vmatpush1.msra.mxu0 %v3456
        %3764 = vmatprep.subr.mxu0 0.0
        %3765 = vmatpush1.msra.mxu0 %v3459
        %3766 = vmatprep.subr.mxu0 0.0
        %3767 = vmatpush1.msra.mxu0 %v3462
        %3768 = vmatprep.subr.mxu0 0.0
        %3769 = vmatpush1.msra.mxu0 %v3465
        %3770 = vmatprep.subr.mxu0 0.0
        %3771 = vmatpush1.msra.mxu0 %v3468
        %3772 = vmatprep.subr.mxu0 0.0
        %3773 = vmatpush1.msra.mxu0 %v3471
        %3774 = vmatprep.subr.mxu0 0.0
        %3775 = vmatpush1.msra.mxu0 %v3474
        %3776 = vmatprep.subr.mxu0 0.0
        %3777 = vmatpush1.msra.mxu0 %v3477
        %3778 = vmatprep.subr.mxu0 0.0
        %3779 = vmatpush1.msra.mxu0 %v3480
        %3780 = vmatprep.subr.mxu0 0.0
        %3781 = vmatpush1.msra.mxu0 %v3483
        %3782 = vmatprep.subr.mxu0 0.0
        %3783 = vmatpush1.msra.mxu0 %v3486
        %3784 = vmatprep.subr.mxu0 0.0
        %3785 = vmatpush1.msra.mxu0 %v3489
        %3786 = vmatprep.subr.mxu0 0.0
        %3787 = vmatpush1.msra.mxu0 %v3492
        %3788 = vmatprep.subr.mxu0 0.0
        %3789 = vmatpush1.msra.mxu0 %v3495
        %3790 = vmatprep.subr.mxu0 0.0
        %3791 = vmatpush1.msra.mxu0 %v3498
        %3792 = vmatprep.mubr.f32.mxu0 %v3302
        %3793 = vmatmul.mubr.f32.gmra.mrb[0].mxu0 %v3301
        %v3794 = vpop.f32.mrb[0].mxu0
        %v3795 = vadd.f32 %v3720, %v3794
        %v3796 = vpop.f32.mrb[0].mxu0
        %3797 = vmatprep.mubr.f32.mxu0 %v3306
        %3798 = vmatmul.mubr.f32.gmra.mrb[0].mxu0 %v3305
        %v3799 = vpop.f32.mrb[0].mxu0
        %v3800 = vadd.f32 %v3725, %v3799
        %v3801 = vpop.f32.mrb[0].mxu0
        %3802 = vdwg.mxu0
        %3803 = vst [vmem:[#allocation4] sm:$0xff] %v3643
        %3804 = vst [vmem:[#allocation4 + $0x8] sm:$0xff] %v3649
        %3805 = vst [vmem:[#allocation4 + $0x10] sm:$0xff] %v3645
        %3806 = vst [vmem:[#allocation4 + $0x18] sm:$0xff] %v3651
        %3807 = vst [vmem:[#allocation4 + $0x20] sm:$0xff] %v3795
        %3808 = vst [vmem:[#allocation4 + $0x28] sm:$0xff] %v3800
        %v3809 = vld [vmem:[#allocation20] sm:$0xff]
        %v3810 = vld [vmem:[#allocation20 + $0x8] sm:$0xff]
        %v3811 = vld [vmem:[#allocation20 + $0x10] sm:$0xff]
        %v3812 = vld [vmem:[#allocation20 + $0x18] sm:$0xff]
        %v3813 = vld [vmem:[#allocation4] sm:$0xff]
        %v3814 = vld [vmem:[#allocation4 + $0x8] sm:$0xff]
        %v3815 = vld [vmem:[#allocation4 + $0x10] sm:$0xff]
        %v3816 = vld [vmem:[#allocation4 + $0x18] sm:$0xff]
        %v3817 = vld [vmem:[#allocation4 + $0x20] sm:$0xff]
        %v3818 = vld [vmem:[#allocation4 + $0x28] sm:$0xff]
        %v3819 = vld [vmem:[#allocation22] sm:$0x1]
        %v3821 = vlaneseq
        %v3822 = vshrl.u32 %v3821, 7
        %v3823 = vsub.s32 0, %v3822
        %v3824 = vrot.slane %v3819, %v3823
        %vm3826 = vcmask 392192
        %v3828 = vsel %vm3826, %v3809, 0
        %v3831 = vsel %vm3826, %v3810, 0
        %v3834 = vsel %vm3826, %v3811, 0
        %v3837 = vsel %vm3826, %v3812, 0
        %3839 = vmatprep.subr.mxu0 0.0
        %3840 = vmatpush1.msra.mxu0 %v3813
        %3841 = vmatprep.subr.mxu0 0.0
        %3842 = vmatpush1.msra.mxu0 %v3814
        %3843 = vmatprep.subr.mxu0 0.0
        %3844 = vmatpush1.msra.mxu0 %v3815
        %3845 = vmatprep.subr.mxu0 0.0
        %3846 = vmatpush1.msra.mxu0 %v3816
        %3847 = vmatprep.subr.mxu0 0.0
        %3848 = vmatpush1.msra.mxu0 %v3817
        %3849 = vmatprep.subr.mxu0 0.0
        %3850 = vmatpush1.msra.mxu0 %v3818
        %3851 = vmatprep.subr.mxu0 0.0
        %3852 = vmatpush1.msra.mxu0 0.0
        %3853 = vmatprep.subr.mxu0 0.0
        %3854 = vmatpush1.msra.mxu0 0.0
        %3855 = vmatprep.subr.mxu0 0.0
        %3856 = vmatpush1.msra.mxu0 0.0
        %3857 = vmatprep.subr.mxu0 0.0
        %3858 = vmatpush1.msra.mxu0 0.0
        %3859 = vmatprep.subr.mxu0 0.0
        %3860 = vmatpush1.msra.mxu0 0.0
        %3861 = vmatprep.subr.mxu0 0.0
        %3862 = vmatpush1.msra.mxu0 0.0
        %3863 = vmatprep.subr.mxu0 0.0
        %3864 = vmatpush1.msra.mxu0 0.0
        %3865 = vmatprep.subr.mxu0 0.0
        %3866 = vmatpush1.msra.mxu0 0.0
        %3867 = vmatprep.subr.mxu0 0.0
        %3868 = vmatpush1.msra.mxu0 0.0
        %3869 = vmatprep.subr.mxu0 0.0
        %3870 = vmatpush1.msra.mxu0 0.0
        %3871 = vmatprep.subr.mxu0 0.0
        %3872 = vmatpush1.msra.mxu0 0.0
        %3873 = vmatprep.subr.mxu0 0.0
        %3874 = vmatpush1.msra.mxu0 0.0
        %3875 = vmatprep.subr.mxu0 0.0
        %3876 = vmatpush1.msra.mxu0 0.0
        %3877 = vmatprep.subr.mxu0 0.0
        %3878 = vmatpush1.msra.mxu0 0.0
        %3879 = vmatprep.subr.mxu0 0.0
        %3880 = vmatpush1.msra.mxu0 0.0
        %3881 = vmatprep.subr.mxu0 0.0
        %3882 = vmatpush1.msra.mxu0 0.0
        %3883 = vmatprep.subr.mxu0 0.0
        %3884 = vmatpush1.msra.mxu0 0.0
        %3885 = vmatprep.subr.mxu0 0.0
        %3886 = vmatpush1.msra.mxu0 0.0
        %3887 = vmatprep.subr.mxu0 0.0
        %3888 = vmatpush1.msra.mxu0 0.0
        %3889 = vmatprep.subr.mxu0 0.0
        %3890 = vmatpush1.msra.mxu0 0.0
        %3891 = vmatprep.subr.mxu0 0.0
        %3892 = vmatpush1.msra.mxu0 0.0
        %3893 = vmatprep.subr.mxu0 0.0
        %3894 = vmatpush1.msra.mxu0 0.0
        %3895 = vmatprep.subr.mxu0 0.0
        %3896 = vmatpush1.msra.mxu0 0.0
        %3897 = vmatprep.subr.mxu0 0.0
        %3898 = vmatpush1.msra.mxu0 0.0
        %3899 = vmatprep.subr.mxu0 0.0
        %3900 = vmatpush1.msra.mxu0 0.0
        %3901 = vmatprep.subr.mxu0 0.0
        %3902 = vmatpush1.msra.mxu0 0.0
        %3903 = vmatprep.mubr.f32.mxu0 0.0
        %3904 = vmatmul.mubr.f32.gmra.mrb[0].mxu0 %v3828
        %v3905 = vpop.f32.mrb[0].mxu0
        %v3906 = vadd.f32 %v3824, %v3905
        %v3907 = vpop.f32.mrb[0].mxu0
        %3908 = vmatprep.mubr.f32.mxu0 0.0
        %3909 = vmatmul.mubr.f32.gmra.mrb[0].mxu0 %v3831
        %v3910 = vpop.f32.mrb[0].mxu0
        %v3911 = vadd.f32 %v3824, %v3910
        %v3912 = vpop.f32.mrb[0].mxu0
        %3913 = vmatprep.mubr.f32.mxu0 0.0
        %3914 = vmatmul.mubr.f32.gmra.mrb[0].mxu0 %v3834
        %v3915 = vpop.f32.mrb[0].mxu0
        %v3916 = vadd.f32 %v3824, %v3915
        %v3917 = vpop.f32.mrb[0].mxu0
        %3918 = vmatprep.mubr.f32.mxu0 0.0
        %3919 = vmatmul.mubr.f32.gmra.mrb[0].mxu0 %v3837
        %v3920 = vpop.f32.mrb[0].mxu0
        %v3921 = vadd.f32 %v3824, %v3920
        %v3922 = vpop.f32.mrb[0].mxu0
        %3923 = vdwg.mxu0
        %3924 = vst.msk [vmem:[%s516] sm:$0xff] %vm617, %v3906
        %3925 = vst.msk [vmem:[%s516 + $0x8] sm:$0xff] %vm617, %v3911
        %3926 = vst.msk [vmem:[%s516 + $0x10] sm:$0xff] %vm617, %v3916
        %3927 = vst.msk [vmem:[%s516 + $0x18] sm:$0xff] %vm617, %v3921
        %3932 = vrot.lane.b32.xlu0 %v3906, 96
        %v3933 = vpop.permute.xlu0 %3932
        %3934 = vrot.lane.b32.xlu0 %v3911, 96
        %v3935 = vpop.permute.xlu0 %3934
        %3936 = vrot.lane.b32.xlu0 %v3916, 96
        %v3937 = vpop.permute.xlu0 %3936
        %3938 = vrot.lane.b32.xlu0 %v3921, 96
        %v3939 = vpop.permute.xlu0 %3938
        %s3944 = scalar_lea.vmem %s516, 32 [#allocation23]
        %3945 = vst.msk [vmem:[%s3944] sm:$0xff] %vm617, %v3933
        %3946 = vst.msk [vmem:[%s3944 + $0x8] sm:$0xff] %vm617, %v3935
        %3947 = vst.msk [vmem:[%s3944 + $0x10] sm:$0xff] %vm617, %v3937
        %3948 = vst.msk [vmem:[%s3944 + $0x18] sm:$0xff] %vm617, %v3939
        %3949 = vrot.lane.b32.xlu0 %v3906, 64
        %v3950 = vpop.permute.xlu0 %3949
        %3951 = vrot.lane.b32.xlu0 %v3911, 64
        %v3952 = vpop.permute.xlu0 %3951
        %3953 = vrot.lane.b32.xlu0 %v3916, 64
        %v3954 = vpop.permute.xlu0 %3953
        %3955 = vrot.lane.b32.xlu0 %v3921, 64
        %v3956 = vpop.permute.xlu0 %3955
        %s3961 = scalar_lea.vmem %s516, 64 [#allocation23]
        %3962 = vst.msk [vmem:[%s3961] sm:$0xff] %vm617, %v3950
        %3963 = vst.msk [vmem:[%s3961 + $0x8] sm:$0xff] %vm617, %v3952
        %3964 = vst.msk [vmem:[%s3961 + $0x10] sm:$0xff] %vm617, %v3954
        %3965 = vst.msk [vmem:[%s3961 + $0x18] sm:$0xff] %vm617, %v3956
        %s3966 = sand.u32 %s270, 1
        %s3967 = scalar_lea.sflag [#allocation7], %s3966
        %s3968 = sand.u32 %s270, 1
        %s3969 = smul.addr %s3968, 96
        %s3970 = scalar_lea.vmem [#allocation23], %s3969
        // Predicated region
        $region109: #{tpu_custom_call.1} parent=63 // pred_check
          %p3971 = pneg %p280
        $region110: #{tpu_custom_call.1} parent=63 // pred_check_branch
          %3973 = sbr.rel (%p3971) target = $region112
        $region111: #{tpu_custom_call.1} parent=63 // pred_region
          %s3975 = ssub.s32 1536, 1536
          %3976 = vsyncadd %s3967, %s3975
          %s3977 = smul.addr %s31, 12
          %s3978 = smul.addr %s3977, 128
          %s3979 = scalar_lea.hbm %s11, %s3978
          %s3980 = sshll.u32 %s3970, 4
          %s3981 = int_to_ptr.vmem [resolvable:$true] %s3980
          %3986 = dma.vmem_to_hbm [thread:$0]  %s3981, 1536, %s3979, %s3967, 128, 128, 8
        $region112: #{tpu_custom_call.1} parent=63 // pred_fallthru
          _
      $region64: #{tpu_custom_call.1} parent=5 // pred_fallthru
        _
      %p3987 = scmp.le.s32.totalorder 2, %s26
      // Predicated region
      $region113: #{tpu_custom_call.1} parent=5 // pred_check
        %p3988 = pneg %p3987
      $region114: #{tpu_custom_call.1} parent=5 // pred_check_branch
        %3990 = sbr.rel (%p3988) target = $region116
      $region115: #{tpu_custom_call.1} parent=5 // pred_region
        %s3991 = ssub.s32 %s26, 2
        // Predicated region
        $region117: #{tpu_custom_call.1} parent=115 // pred_check
          %p3992 = pneg %p286
        $region118: #{tpu_custom_call.1} parent=115 // pred_check_branch
          %3994 = sbr.rel (%p3992) target = $region120
        $region119: #{tpu_custom_call.1} parent=115 // pred_region
          %s3995 = sand.u32 %s271, 1
          %s3996 = scalar_lea.sflag [#allocation7], %s3995
          %s3997 = sand.u32 %s271, 1
          %s3998 = smul.addr %s3997, 96
          %s3999 = scalar_lea.vmem [#allocation23], %s3998
          %4000 = dma.done %s3996, 1536
        $region120: #{tpu_custom_call.1} parent=115 // pred_fallthru
          _
      $region116: #{tpu_custom_call.1} parent=5 // pred_fallthru
        _
    $region6: #{tpu_custom_call.1} parent=1 // loop_footer
      %s30 = sadd.s32 1, %s26
    $region7: #{tpu_custom_call.1} parent=1 // loop_footer_branch
      %25 = sbr.rel target = $region3
    $region8: #{tpu_custom_call.1} parent=1 // loop_exit
      _
    %4001 = vsyncpa [#allocation6], 1
    %s4002 = scalar_lea.sflag [#allocation6], 1
    %4003 = vsyncpa %s4002, 1
    %4004 = vsyncpa [#allocation9], 1
    %4005 = vsyncpa [#allocation12], 1
    %4006 = vsyncpa [#allocation15], 1
    %4007 = vsyncpa [#allocation18], 1
    %4008 = vsyncpa [#allocation21], 1
    %4009 = vsyncpa [#allocation7], 1
    %s4010 = scalar_lea.sflag [#allocation7], 1
    %4011 = vsyncpa %s4010, 1

</llo_original>
